<compile_context>
chip_gen: v6e
topology: v6e:2x2x1
jax: 0.10.0
libtpu: 0.0.40
codegen_flags: <defaults>
</compile_context>

<pallas_src>
import math
from functools import partial

import numpy as np
import jax
import jax.numpy as jnp
from jax.experimental import pallas as pl
from jax.experimental.pallas import tpu as pltpu


# ----------------------------- fused Pallas kernel -----------------------------

def _fused_forward_kernel(
    # data
    src_ref, pe_ref, dec_ref, smask_ref,
    # encoder input projection
    win_ref, binp_ref,
    # stacked encoder-layer weights
    qkvw_ref, qkvb_ref, aow_ref, aob_ref, ln1g_ref, ln1b_ref,
    f1w_ref, f1b_ref, f2w_ref, f2b_ref, ln2g_ref, ln2b_ref,
    # domain classifier head
    d1w_ref, d1b_ref, d2w_ref, d2b_ref, d3w_ref, d3b_ref,
    # decoder input linears
    l1w_ref, l1b_ref, l2w_ref, l2b_ref,
    # GRU (gate order [r, z, n] along lanes)
    wih_ref, bih_ref, whh_ref, bhh_ref,
    # output linear (lane-padded)
    outw_ref, outb_ref,
    # outputs
    disc_ref, gout_ref,
    # scratch
    hs_ref,
    *, nlayers, nhead, n_pos, t_steps, batch, scale, eps):

    f32 = jnp.float32
    bf16 = jnp.bfloat16

    def mm(a, b):
        # bf16 MXU operands, f32 accumulate.
        return jnp.dot(a.astype(bf16), b.astype(bf16), preferred_element_type=f32)

    def ln(x, g, b):
        mu = jnp.mean(x, axis=-1, keepdims=True)
        var = jnp.mean((x - mu) * (x - mu), axis=-1, keepdims=True)
        return (x - mu) * jax.lax.rsqrt(var + eps) * g + b

    E = pe_ref.shape[1]
    dh = E // nhead
    H = whh_ref.shape[0]
    SN = src_ref.shape[0]
    n_seq = SN // n_pos                                             # = S (transformer "seq" dim)

    # ---------------- encoder: input projection + positional encoding ----------------
    x = mm(src_ref[...], win_ref[...]) + binp_ref[...]              # (S*N, E) f32
    x = x * math.sqrt(float(E)) + pe_ref[...]

    # ---------------- in-kernel block-diag causal additive mask ----------------
    # Row index = s*N + n. Allowed iff same n-column and col_s <= row_s, which for rows with the
    # same residue mod N is exactly (row - col) == k*N for some k in [0, S). Pure VPU compares,
    # no (S*N)^2 f32 DMA from HBM.
    row = jax.lax.broadcasted_iota(jnp.int32, (SN, SN), 0)
    col = jax.lax.broadcasted_iota(jnp.int32, (SN, SN), 1)
    diff = row - col
    allowed = (diff == 0)
    for kk in range(1, n_seq):
        allowed = jnp.logical_or(allowed, diff == kk * n_pos)
    big_mask = jnp.where(allowed, f32(0.0), f32(-1e30))             # finite "-inf": exp underflows to 0

    # ---------------- encoder layers (static unroll) ----------------
    for l in range(nlayers):
        qkv = mm(x, qkvw_ref[l]) + qkvb_ref[l]                      # (S*N, 3E), one fused matmul
        attn = jnp.zeros((SN, E), f32)
        for h in range(nhead):
            q = qkv[:, h * dh:(h + 1) * dh]                         # (S*N, Dh)
            k = qkv[:, E + h * dh:E + (h + 1) * dh]
            v = qkv[:, 2 * E + h * dh:2 * E + (h + 1) * dh]
            # One (S*N, S*N) score matmul per head; mask makes it equivalent to per-"batch"
            # causal attention with a much larger effective MXU tile.
            s = jax.lax.dot_general(q.astype(bf16), k.astype(bf16),
                                    (((1,), (1,)), ((), ())),
                                    preferred_element_type=f32)
            s = s * scale + big_mask
            s = s - jnp.max(s, axis=-1, keepdims=True)
            e = jnp.exp(s)
            denom = jnp.sum(e, axis=-1, keepdims=True)
            p = e * pl.reciprocal(denom, approx=True)               # exact alternative: e / denom
            # Per-head out-projection accumulation: no concatenate, output stays E lanes wide.
            attn = attn + mm(mm(p, v), aow_ref[l * nhead + h])      # (S*N, E)
        attn = attn + aob_ref[l]
        x = ln(x + attn, ln1g_ref[l], ln1b_ref[l])                  # post-norm, eval dropout = id
        ff = jnp.maximum(mm(x, f1w_ref[l]) + f1b_ref[l], 0.0)
        ff = mm(ff, f2w_ref[l]) + f2b_ref[l]
        x = ln(x + ff, ln2g_ref[l], ln2b_ref[l])

    # hidden = encoder_output[0] : rows with s == 0 of the (S, N, E) layout
    hidden = x[0:n_pos, :]                                          # (N, E)

    # ---------------- domain classifier head (lane-padded final store) ----------------
    d = jnp.maximum(mm(hidden, d1w_ref[...]) + d1b_ref[...], 0.0)
    d = jnp.maximum(mm(d, d2w_ref[...]) + d2b_ref[...], 0.0)
    disc_ref[...] = mm(d, d3w_ref[...]) + d3b_ref[...]              # (N, 128), cols 8.. are zero

    # ---------------- decoder path ----------------
    # dec_ref rows are time-major: row = t*batch + b (sorted batch order).
    dec = jnp.maximum(mm(dec_ref[...], l1w_ref[...]) + l1b_ref[...], 0.0)
    dec = mm(dec, l2w_ref[...]) + l2b_ref[...]                      # (T*B, E)
    # TODO(synk): reference calls undefined `self.dropout`; eval-mode dropout == identity.

    # Hoisted GRU input-gate projections: one (F, 3H) matmul for all timesteps.
    gi = mm(dec, wih_ref[...]) + bih_ref[...]                       # (T*B, 3H) lanes [r|z|n]

    # Module wiring requires N == B and E == H, so `hidden` is the GRU initial state.
    # NOTE: the hidden keeps updating on padded timesteps (only outputs are masked); final hidden
    # is discarded upstream and sequences are length-sorted, so consumed outputs are identical to
    # pack_padded_sequence semantics.
    h = hidden
    for t in range(t_steps):                                        # static, fully unrolled
        lo = t * batch
        gh = mm(h, whh_ref[...]) + bhh_ref[...]                     # ONE fused (H,3H) matmul/step
        gi_t = gi[lo:lo + batch, :]
        r = jax.nn.sigmoid(gi_t[:, 0:H] + gh[:, 0:H])
        z = jax.nn.sigmoid(gi_t[:, H:2 * H] + gh[:, H:2 * H])
        ng = jnp.tanh(gi_t[:, 2 * H:3 * H] + r * gh[:, 2 * H:3 * H])
        h = (1.0 - z) * ng + z * h
        hs_ref[lo:lo + batch, :] = h                                 # direct VMEM store, no concat
    hs = hs_ref[...] * smask_ref[...]                               # zero padded steps (pad value 0)
    gout_ref[...] = mm(hs, outw_ref[...]) + outb_ref[...]           # (T*B, ntok_pad) lane-dense


def fused_forward(kp, src2d, pe2d, dec_tm, smask, *, n_pos, batch, t_steps):
    sn, ntoken = src2d.shape
    ninp = pe2d.shape[1]
    nlayers = kp['qkvw'].shape[0]
    nhead = kp['aow'].shape[0] // nlayers
    dh = kp['aow'].shape[1]
    nhid = kp['whh'].shape[0]
    ntok_pad = kp['outw'].shape[1]
    disc_pad = kp['d3w'].shape[1]

    inputs = (
        src2d, pe2d, dec_tm, smask,
        kp['win'], kp['binp'],
        kp['qkvw'], kp['qkvb'], kp['aow'], kp['aob'], kp['ln1g'], kp['ln1b'],
        kp['f1w'], kp['f1b'], kp['f2w'], kp['f2b'], kp['ln2g'], kp['ln2b'],
        kp['d1w'], kp['d1b'], kp['d2w'], kp['d2b'], kp['d3w'], kp['d3b'],
        kp['l1w'], kp['l1b'], kp['l2w'], kp['l2b'],
        kp['wih'], kp['bih'], kp['whh'], kp['bhh'],
        kp['outw'], kp['outb'],
    )
    vmem = pl.BlockSpec(memory_space=pltpu.MemorySpace.VMEM)

    # Explicit VMEM budget from the real footprint (headroom for the in-kernel mask / temporaries);
    # matters on v5e (16 MiB scoped default) and v7x (32 MiB scoped / 64 MiB physical).
    def nbytes(a):
        return int(np.prod(a.shape)) * jnp.dtype(a.dtype).itemsize
    footprint = sum(nbytes(a) for a in inputs)
    footprint += (n_pos * disc_pad + t_steps * batch * (ntok_pad + nhid)) * 4
    footprint += 4 * sn * sn                                        # in-kernel mask temporary
    vmem_limit = int(min(64 << 20, max(4 * footprint + (4 << 20), 16 << 20)))

    kernel = partial(_fused_forward_kernel,
                     nlayers=nlayers, nhead=nhead, n_pos=n_pos,
                     t_steps=t_steps, batch=batch,
                     scale=1.0 / math.sqrt(dh), eps=1e-5)
    disc, gout = pl.pallas_call(
        kernel,
        out_shape=(jax.ShapeDtypeStruct((n_pos, disc_pad), jnp.float32),
                   jax.ShapeDtypeStruct((t_steps * batch, ntok_pad), jnp.float32)),
        in_specs=[vmem] * len(inputs),
        out_specs=(vmem, vmem),
        scratch_shapes=[pltpu.VMEM((t_steps * batch, nhid), jnp.float32)],
        compiler_params=pltpu.CompilerParams(vmem_limit_bytes=vmem_limit),
    )(*inputs)
    # Slice the lane padding back off (free wrapper-side layout plumbing).
    return disc[:, :8], gout[:, :ntoken]


@jax.jit
def device_forward(kp, src2d, pe2d, dec_tm, smask, reversed_idx):
    batch = reversed_idx.shape[0]
    n_pos = src2d.shape[0] // batch            # S == batch, S*N rows
    t_steps = dec_tm.shape[0] // batch
    disc, gout = fused_forward(kp, src2d, pe2d, dec_tm, smask,
                               n_pos=n_pos, batch=batch, t_steps=t_steps)
    ntok = gout.shape[1]
    out = jnp.swapaxes(gout.reshape(t_steps, batch, ntok), 0, 1)   # (B, T, ntoken), sorted order
    out = jnp.take(out, reversed_idx, axis=0)                       # unsort
    return out, disc


# ----------------------------- parameter init & layout prep -----------------------------

def _uniform(key, shape, scale=0.1):
    return jax.random.uniform(key, shape, jnp.float32, -scale, scale)


def init_params(key, ntoken, ninp, nhead, nhid, nlayers):
    """PyTorch-layout parameters (weights as (out_features, in_features))."""
    keys = iter(jax.random.split(key, 64))
    p = {}
    p['input_linear_w'] = _uniform(next(keys), (ninp, ntoken))
    p['input_linear_b'] = _uniform(next(keys), (ninp,))
    layers = []
    for _ in range(nlayers):
        lp = {
            'in_proj_w': _uniform(next(keys), (3 * ninp, ninp)),
            'in_proj_b': _uniform(next(keys), (3 * ninp,)),
            'out_proj_w': _uniform(next(keys), (ninp, ninp)),
            'out_proj_b': _uniform(next(keys), (ninp,)),
            'ln1_g': jnp.ones((ninp,), jnp.float32),
            'ln1_b': jnp.zeros((ninp,), jnp.float32),
            'ff1_w': _uniform(next(keys), (nhid, ninp)),
            'ff1_b': _uniform(next(keys), (nhid,)),
            'ff2_w': _uniform(next(keys), (ninp, nhid)),
            'ff2_b': _uniform(next(keys), (ninp,)),
            'ln2_g': jnp.ones((ninp,), jnp.float32),
            'ln2_b': jnp.zeros((ninp,), jnp.float32),
        }
        layers.append(lp)
    p['layers'] = layers
    p['dom1_w'] = _uniform(next(keys), (64, ninp)); p['dom1_b'] = _uniform(next(keys), (64,))
    p['dom2_w'] = _uniform(next(keys), (16, 64));   p['dom2_b'] = _uniform(next(keys), (16,))
    p['dom3_w'] = _uniform(next(keys), (8, 16));    p['dom3_b'] = _uniform(next(keys), (8,))
    # TODO(synk): reference has `nn.Linear(ntoken, nip)` with undefined `nip`; treated as ninp.
    p['lin1_w'] = _uniform(next(keys), (ninp, ntoken)); p['lin1_b'] = _uniform(next(keys), (ninp,))
    p['lin2_w'] = _uniform(next(keys), (ninp, ninp));   p['lin2_b'] = _uniform(next(keys), (ninp,))
    p['gru_w_ih'] = _uniform(next(keys), (3 * nhid, ninp)); p['gru_w_hh'] = _uniform(next(keys), (3 * nhid, nhid))
    p['gru_b_ih'] = _uniform(next(keys), (3 * nhid,));      p['gru_b_hh'] = _uniform(next(keys), (3 * nhid,))
    p['out_w'] = _uniform(next(keys), (ntoken, nhid)); p['out_b'] = _uniform(next(keys), (ntoken,))
    return p


def prepare_params(p, nhead):
    """One-time layout conversion: transpose, fuse QKV / GRU gates, pad output lanes, bf16 weights."""
    bf16 = jnp.bfloat16
    LANE = 128
    ninp = p['input_linear_w'].shape[0]
    nhid = p['gru_w_hh'].shape[1]
    ntoken = p['out_w'].shape[0]
    dh = ninp // nhead

    def t(w):   # PyTorch (out,in) -> (in,out), bf16 for MXU
        return jnp.asarray(w, jnp.float32).T.astype(bf16)

    def row(b):  # bias -> (1, X) f32 row
        return jnp.asarray(b, jnp.float32).reshape(1, -1)

    qkvw, qkvb, aow, aob, ln1g, ln1b = [], [], [], [], [], []
    f1w, f1b, f2w, f2b, ln2g, ln2b = [], [], [], [], [], []
    for lp in p['layers']:
        qkvw.append(t(lp['in_proj_w']))                              # (E, 3E) columns [q|k|v]
        qkvb.append(row(lp['in_proj_b']))                            # (1, 3E)
        opw = jnp.asarray(lp['out_proj_w'], jnp.float32)             # (E, E) = (out, in)
        for h in range(nhead):                                       # per-head (Dh, E) out-proj block
            aow.append(opw[:, h * dh:(h + 1) * dh].T.astype(bf16))
        aob.append(row(lp['out_proj_b']))
        ln1g.append(row(lp['ln1_g']));   ln1b.append(row(lp['ln1_b']))
        f1w.append(t(lp['ff1_w']));      f1b.append(row(lp['ff1_b']))
        f2w.append(t(lp['ff2_w']));      f2b.append(row(lp['ff2_b']))
        ln2g.append(row(lp['ln2_g']));   ln2b.append(row(lp['ln2_b']))

    # GRU: fused-gate layout (X, 3H) columns [r|z|n] (PyTorch rows [r; z; n]).
    wih = t(p['gru_w_ih']); bih = row(p['gru_b_ih'])
    whh = t(p['gru_w_hh']); bhh = row(p['gru_b_hh'])

    # Lane-pad the final stores to multiples of 128 (lane-dense vst); sliced back in the wrapper.
    ntok_pad = ((ntoken + LANE - 1) // LANE) * LANE
    outw = jnp.zeros((nhid, ntok_pad), jnp.float32).at[:, :ntoken].set(
        jnp.asarray(p['out_w'], jnp.float32).T).astype(bf16)
    outb = jnp.zeros((1, ntok_pad), jnp.float32).at[:, :ntoken].set(
        jnp.asarray(p['out_b'], jnp.float32).reshape(1, -1))
    d3w = jnp.zeros((16, LANE), jnp.float32).at[:, :8].set(
        jnp.asarray(p['dom3_w'], jnp.float32).T).astype(bf16)
    d3b = jnp.zeros((1, LANE), jnp.float32).at[:, :8].set(
        jnp.asarray(p['dom3_b'], jnp.float32).reshape(1, -1))

    return dict(
        win=t(p['input_linear_w']), binp=row(p['input_linear_b']),
        qkvw=jnp.stack(qkvw, 0), qkvb=jnp.stack(qkvb, 0),
        aow=jnp.stack(aow, 0), aob=jnp.stack(aob, 0),
        ln1g=jnp.stack(ln1g, 0), ln1b=jnp.stack(ln1b, 0),
        f1w=jnp.stack(f1w, 0), f1b=jnp.stack(f1b, 0),
        f2w=jnp.stack(f2w, 0), f2b=jnp.stack(f2b, 0),
        ln2g=jnp.stack(ln2g, 0), ln2b=jnp.stack(ln2b, 0),
        d1w=t(p['dom1_w']), d1b=row(p['dom1_b']),
        d2w=t(p['dom2_w']), d2b=row(p['dom2_b']),
        d3w=d3w, d3b=d3b,
        l1w=t(p['lin1_w']), l1b=row(p['lin1_b']),
        l2w=t(p['lin2_w']), l2b=row(p['lin2_b']),
        wih=wih, bih=bih, whh=whh, bhh=bhh,
        outw=outw, outb=outb,
    )


# ----------------------------- host-side prep (numpy) -----------------------------

def make_pe_np(d_model, max_len=50):
    position = np.arange(max_len, dtype=np.float32)[:, None]
    div_term = np.exp(np.arange(0, d_model, 2, dtype=np.float32) * (-math.log(10000.0) / d_model))
    pe = np.zeros((max_len, d_model), np.float32)
    pe[:, 0::2] = np.sin(position * div_term)
    pe[:, 1::2] = np.cos(position * div_term)
    return pe[:, None, :]                                            # (max_len, 1, d_model)


def transformer_model_forward(kp, src_list, max_len, *, ntoken, ninp, nhid):
    batch = len(src_list)
    # --- concatenate_zero ---
    lengths = np.array([int(s.shape[1]) for s in src_list], dtype=np.int64)
    padded = np.zeros((batch, max_len, ntoken), np.float32)
    for i, s in enumerate(src_list):
        padded[i, :lengths[i]] = np.asarray(s[0])
    sorted_idx = np.argsort(-lengths, kind='stable')
    sorted_lengths = lengths[sorted_idx]
    reversed_idx = np.argsort(sorted_idx, kind='stable')

    zeros_col = np.zeros((batch, 1, ntoken), np.float32)
    original_src = np.concatenate([zeros_col, padded], axis=1)               # (B, N, ntoken)
    dec_in = np.concatenate([zeros_col, padded[sorted_idx]], axis=1)         # (B, N, ntoken), sorted

    S, N = batch, max_len + 1
    assert S == N and ninp == nhid, "module wiring requires batch == max_len+1 and ninp == nhid"

    T = int(sorted_lengths[0])                                               # pad_packed_sequence length
    dec_tm = np.swapaxes(dec_in, 0, 1)[:T].reshape(T * batch, ntoken)        # row = t*B + b
    smask = (np.arange(T)[:, None] < sorted_lengths[None, :]).astype(np.float32).reshape(T * batch, 1)
    src2d = original_src.reshape(S * N, ntoken)
    pe2d = np.broadcast_to(make_pe_np(ninp)[:S], (S, N, ninp)).reshape(S * N, ninp)

    out, disc = device_forward(
        kp,
        jnp.asarray(src2d, jnp.bfloat16), jnp.asarray(pe2d, jnp.float32),
        jnp.asarray(dec_tm, jnp.bfloat16), jnp.asarray(smask, jnp.float32),
        jnp.asarray(reversed_idx, dtype=jnp.int32))
    return out, jnp.asarray(original_src), disc


# ----------------------------- demo -----------------------------

if __name__ == "__main__":
    # small hyperparameters; the module's GRU-hidden wiring requires batch == max_len+1, ninp == nhid.
    ntoken, ninp, nhead, nhid, nlayers = 64, 32, 2, 32, 2
    max_len = 3
    batch = max_len + 1

    key = jax.random.PRNGKey(0)
    pkey, dkey = jax.random.split(key)
    params = init_params(pkey, ntoken, ninp, nhead, nhid, nlayers)
    kparams = prepare_params(params, nhead)          # one-time transpose / fuse / pad / bf16 layout

    dialogue_lengths = [2, 3, 1, 3]
    src_list = []
    for L in dialogue_lengths:
        dkey, sub = jax.random.split(dkey)
        src_list.append(jax.random.normal(sub, (1, L, ntoken), jnp.float32))

    out, orig_src, disc = transformer_model_forward(
        kparams, src_list, max_len, ntoken=ntoken, ninp=ninp, nhid=nhid)
    jax.block_until_ready((out, orig_src, disc))

    assert out.shape == (batch, max(dialogue_lengths), ntoken)
    assert orig_src.shape == (batch, max_len + 1, ntoken)
    assert disc.shape == (max_len + 1, 8)
    assert bool(jnp.all(jnp.isfinite(out))) and bool(jnp.all(jnp.isfinite(disc)))
    print("KERNEL_OK")
</pallas_src>

<mosaic_0001>
module attributes {stable_mosaic.version = 11 : i64} {
  func.func @_fused_forward_kernel(%arg0: memref<16x64xbf16, #tpu.memory_space<vmem>>, %arg1: memref<16x32xf32, #tpu.memory_space<vmem>>, %arg2: memref<12x64xbf16, #tpu.memory_space<vmem>>, %arg3: memref<12x1xf32, #tpu.memory_space<vmem>>, %arg4: memref<64x32xbf16, #tpu.memory_space<vmem>>, %arg5: memref<1x32xf32, #tpu.memory_space<vmem>>, %arg6: memref<2x32x96xbf16, #tpu.memory_space<vmem>>, %arg7: memref<2x1x96xf32, #tpu.memory_space<vmem>>, %arg8: memref<4x16x32xbf16, #tpu.memory_space<vmem>>, %arg9: memref<2x1x32xf32, #tpu.memory_space<vmem>>, %arg10: memref<2x1x32xf32, #tpu.memory_space<vmem>>, %arg11: memref<2x1x32xf32, #tpu.memory_space<vmem>>, %arg12: memref<2x32x32xbf16, #tpu.memory_space<vmem>>, %arg13: memref<2x1x32xf32, #tpu.memory_space<vmem>>, %arg14: memref<2x32x32xbf16, #tpu.memory_space<vmem>>, %arg15: memref<2x1x32xf32, #tpu.memory_space<vmem>>, %arg16: memref<2x1x32xf32, #tpu.memory_space<vmem>>, %arg17: memref<2x1x32xf32, #tpu.memory_space<vmem>>, %arg18: memref<32x64xbf16, #tpu.memory_space<vmem>>, %arg19: memref<1x64xf32, #tpu.memory_space<vmem>>, %arg20: memref<64x16xbf16, #tpu.memory_space<vmem>>, %arg21: memref<1x16xf32, #tpu.memory_space<vmem>>, %arg22: memref<16x128xbf16, #tpu.memory_space<vmem>>, %arg23: memref<1x128xf32, #tpu.memory_space<vmem>>, %arg24: memref<64x32xbf16, #tpu.memory_space<vmem>>, %arg25: memref<1x32xf32, #tpu.memory_space<vmem>>, %arg26: memref<32x32xbf16, #tpu.memory_space<vmem>>, %arg27: memref<1x32xf32, #tpu.memory_space<vmem>>, %arg28: memref<32x96xbf16, #tpu.memory_space<vmem>>, %arg29: memref<1x96xf32, #tpu.memory_space<vmem>>, %arg30: memref<32x96xbf16, #tpu.memory_space<vmem>>, %arg31: memref<1x96xf32, #tpu.memory_space<vmem>>, %arg32: memref<32x128xbf16, #tpu.memory_space<vmem>>, %arg33: memref<1x128xf32, #tpu.memory_space<vmem>>, %arg34: memref<4x128xf32, #tpu.memory_space<vmem>>, %arg35: memref<12x128xf32, #tpu.memory_space<vmem>>, %arg36: memref<12x32xf32, #tpu.memory_space<vmem>>) attributes {dimension_semantics = [], scalar_prefetch = 0 : i64, scratch_operands = 1 : i64, tpu.core_type = #tpu.core_type<tc>} {
    %c0 = arith.constant 0 : index
    %c0_0 = arith.constant 0 : index
    %0 = vector.load %arg0[%c0, %c0_0] : memref<16x64xbf16, #tpu.memory_space<vmem>>, vector<16x64xbf16>
    %c0_1 = arith.constant 0 : index
    %c0_2 = arith.constant 0 : index
    %1 = vector.load %arg4[%c0_1, %c0_2] : memref<64x32xbf16, #tpu.memory_space<vmem>>, vector<64x32xbf16>
    %cst = arith.constant dense<0.000000e+00> : vector<16x32xf32>
    %2 = tpu.matmul %0, %1, %cst {dimension_numbers = #tpu.dot_dimension_numbers<[1], [0], [0], [1], [0, 0, 1, 1], [], []>} : vector<16x64xbf16>, vector<64x32xbf16>, vector<16x32xf32> -> vector<16x32xf32>
    %c0_3 = arith.constant 0 : index
    %c0_4 = arith.constant 0 : index
    %3 = vector.load %arg5[%c0_3, %c0_4] : memref<1x32xf32, #tpu.memory_space<vmem>>, vector<1x32xf32>
    %4 = vector.broadcast %3 : vector<1x32xf32> to vector<16x32xf32>
    %5 = arith.addf %2, %4 : vector<16x32xf32>
    %cst_5 = arith.constant 5.65685415 : f32
    %6 = vector.broadcast %cst_5 : f32 to vector<16x32xf32>
    %7 = arith.mulf %5, %6 : vector<16x32xf32>
    %c0_6 = arith.constant 0 : index
    %c0_7 = arith.constant 0 : index
    %8 = vector.load %arg1[%c0_6, %c0_7] : memref<16x32xf32, #tpu.memory_space<vmem>>, vector<16x32xf32>
    %9 = arith.addf %7, %8 : vector<16x32xf32>
    %10 = tpu.iota {dimensions = array<i32: 0>} : vector<16x16xi32>
    %11 = tpu.iota {dimensions = array<i32: 1>} : vector<16x16xi32>
    %12 = arith.subi %10, %11 : vector<16x16xi32>
    %c0_i32 = arith.constant 0 : i32
    %13 = vector.broadcast %c0_i32 : i32 to vector<16x16xi32>
    %14 = arith.cmpi eq, %12, %13 : vector<16x16xi32>
    %c4_i32 = arith.constant 4 : i32
    %15 = vector.broadcast %c4_i32 : i32 to vector<16x16xi32>
    %16 = arith.cmpi eq, %12, %15 : vector<16x16xi32>
    %17 = arith.ori %14, %16 : vector<16x16xi1>
    %c8_i32 = arith.constant 8 : i32
    %18 = vector.broadcast %c8_i32 : i32 to vector<16x16xi32>
    %19 = arith.cmpi eq, %12, %18 : vector<16x16xi32>
    %20 = arith.ori %17, %19 : vector<16x16xi1>
    %c12_i32 = arith.constant 12 : i32
    %21 = vector.broadcast %c12_i32 : i32 to vector<16x16xi32>
    %22 = arith.cmpi eq, %12, %21 : vector<16x16xi32>
    %23 = arith.ori %20, %22 : vector<16x16xi1>
    %cst_8 = arith.constant 0.000000e+00 : f32
    %cst_9 = arith.constant -1.000000e+30 : f32
    %24 = vector.broadcast %cst_8 : f32 to vector<16x16xf32>
    %25 = vector.broadcast %cst_9 : f32 to vector<16x16xf32>
    %26 = arith.select %23, %24, %25 : vector<16x16xi1>, vector<16x16xf32>
    %c0_10 = arith.constant 0 : index
    %c0_11 = arith.constant 0 : index
    %c0_12 = arith.constant 0 : index
    %27 = vector.load %arg6[%c0_10, %c0_11, %c0_12] : memref<2x32x96xbf16, #tpu.memory_space<vmem>>, vector<1x32x96xbf16>
    %28 = vector.shape_cast %27 : vector<1x32x96xbf16> to vector<32x96xbf16>
    %29 = arith.truncf %9 : vector<16x32xf32> to vector<16x32xbf16>
    %cst_13 = arith.constant dense<0.000000e+00> : vector<16x96xf32>
    %30 = tpu.matmul %29, %28, %cst_13 {dimension_numbers = #tpu.dot_dimension_numbers<[1], [0], [0], [1], [0, 0, 1, 1], [], []>} : vector<16x32xbf16>, vector<32x96xbf16>, vector<16x96xf32> -> vector<16x96xf32>
    %c0_14 = arith.constant 0 : index
    %c0_15 = arith.constant 0 : index
    %c0_16 = arith.constant 0 : index
    %31 = vector.load %arg7[%c0_14, %c0_15, %c0_16] : memref<2x1x96xf32, #tpu.memory_space<vmem>>, vector<1x1x96xf32>
    %32 = vector.shape_cast %31 : vector<1x1x96xf32> to vector<1x96xf32>
    %33 = vector.broadcast %32 : vector<1x96xf32> to vector<16x96xf32>
    %34 = arith.addf %30, %33 : vector<16x96xf32>
    %cst_17 = arith.constant 0.000000e+00 : f32
    %35 = vector.broadcast %cst_17 : f32 to vector<16x32xf32>
    %36 = vector.extract_strided_slice %34 {offsets = [0, 0], sizes = [16, 16], strides = [1, 1]} : vector<16x96xf32> to vector<16x16xf32>
    %37 = vector.extract_strided_slice %34 {offsets = [0, 32], sizes = [16, 16], strides = [1, 1]} : vector<16x96xf32> to vector<16x16xf32>
    %38 = vector.extract_strided_slice %34 {offsets = [0, 64], sizes = [16, 16], strides = [1, 1]} : vector<16x96xf32> to vector<16x16xf32>
    %39 = arith.truncf %36 : vector<16x16xf32> to vector<16x16xbf16>
    %40 = arith.truncf %37 : vector<16x16xf32> to vector<16x16xbf16>
    %cst_18 = arith.constant dense<0.000000e+00> : vector<16x16xf32>
    %41 = tpu.matmul %39, %40, %cst_18 {dimension_numbers = #tpu.dot_dimension_numbers<[1], [1], [0], [0], [0, 0, 1, 0], [], []>} : vector<16x16xbf16>, vector<16x16xbf16>, vector<16x16xf32> -> vector<16x16xf32>
    %cst_19 = arith.constant 2.500000e-01 : f32
    %42 = vector.broadcast %cst_19 : f32 to vector<16x16xf32>
    %43 = arith.mulf %41, %42 : vector<16x16xf32>
    %44 = arith.addf %43, %26 : vector<16x16xf32>
    %cst_20 = arith.constant dense<0xFF800000> : vector<16xf32>
    %45 = vector.multi_reduction <maximumf>, %44, %cst_20 [1] : vector<16x16xf32> to vector<16xf32>
    %46 = vector.shape_cast %45 : vector<16xf32> to vector<16x1xf32>
    %47 = vector.broadcast %46 : vector<16x1xf32> to vector<16x16xf32>
    %48 = arith.subf %44, %47 : vector<16x16xf32>
    %49 = math.exp %48 : vector<16x16xf32>
    %cst_21 = arith.constant dense<0.000000e+00> : vector<16xf32>
    %50 = vector.multi_reduction <add>, %49, %cst_21 [1] : vector<16x16xf32> to vector<16xf32>
    %51 = vector.shape_cast %50 : vector<16xf32> to vector<16x1xf32>
    %52 = tpu.reciprocal %51 {approx = true} : vector<16x1xf32> -> vector<16x1xf32>
    %53 = vector.broadcast %52 : vector<16x1xf32> to vector<16x16xf32>
    %54 = arith.mulf %49, %53 : vector<16x16xf32>
    %55 = arith.truncf %54 : vector<16x16xf32> to vector<16x16xbf16>
    %56 = arith.truncf %38 : vector<16x16xf32> to vector<16x16xbf16>
    %cst_22 = arith.constant dense<0.000000e+00> : vector<16x16xf32>
    %57 = tpu.matmul %55, %56, %cst_22 {dimension_numbers = #tpu.dot_dimension_numbers<[1], [0], [0], [1], [0, 0, 1, 1], [], []>} : vector<16x16xbf16>, vector<16x16xbf16>, vector<16x16xf32> -> vector<16x16xf32>
    %c0_23 = arith.constant 0 : index
    %c0_24 = arith.constant 0 : index
    %c0_25 = arith.constant 0 : index
    %58 = vector.load %arg8[%c0_23, %c0_24, %c0_25] : memref<4x16x32xbf16, #tpu.memory_space<vmem>>, vector<1x16x32xbf16>
    %59 = vector.shape_cast %58 : vector<1x16x32xbf16> to vector<16x32xbf16>
    %60 = arith.truncf %57 : vector<16x16xf32> to vector<16x16xbf16>
    %cst_26 = arith.constant dense<0.000000e+00> : vector<16x32xf32>
    %61 = tpu.matmul %60, %59, %cst_26 {dimension_numbers = #tpu.dot_dimension_numbers<[1], [0], [0], [1], [0, 0, 1, 1], [], []>} : vector<16x16xbf16>, vector<16x32xbf16>, vector<16x32xf32> -> vector<16x32xf32>
    %62 = arith.addf %35, %61 : vector<16x32xf32>
    %63 = vector.extract_strided_slice %34 {offsets = [0, 16], sizes = [16, 16], strides = [1, 1]} : vector<16x96xf32> to vector<16x16xf32>
    %64 = vector.extract_strided_slice %34 {offsets = [0, 48], sizes = [16, 16], strides = [1, 1]} : vector<16x96xf32> to vector<16x16xf32>
    %65 = vector.extract_strided_slice %34 {offsets = [0, 80], sizes = [16, 16], strides = [1, 1]} : vector<16x96xf32> to vector<16x16xf32>
    %66 = arith.truncf %63 : vector<16x16xf32> to vector<16x16xbf16>
    %67 = arith.truncf %64 : vector<16x16xf32> to vector<16x16xbf16>
    %cst_27 = arith.constant dense<0.000000e+00> : vector<16x16xf32>
    %68 = tpu.matmul %66, %67, %cst_27 {dimension_numbers = #tpu.dot_dimension_numbers<[1], [1], [0], [0], [0, 0, 1, 0], [], []>} : vector<16x16xbf16>, vector<16x16xbf16>, vector<16x16xf32> -> vector<16x16xf32>
    %cst_28 = arith.constant 2.500000e-01 : f32
    %69 = vector.broadcast %cst_28 : f32 to vector<16x16xf32>
    %70 = arith.mulf %68, %69 : vector<16x16xf32>
    %71 = arith.addf %70, %26 : vector<16x16xf32>
    %cst_29 = arith.constant dense<0xFF800000> : vector<16xf32>
    %72 = vector.multi_reduction <maximumf>, %71, %cst_29 [1] : vector<16x16xf32> to vector<16xf32>
    %73 = vector.shape_cast %72 : vector<16xf32> to vector<16x1xf32>
    %74 = vector.broadcast %73 : vector<16x1xf32> to vector<16x16xf32>
    %75 = arith.subf %71, %74 : vector<16x16xf32>
    %76 = math.exp %75 : vector<16x16xf32>
    %cst_30 = arith.constant dense<0.000000e+00> : vector<16xf32>
    %77 = vector.multi_reduction <add>, %76, %cst_30 [1] : vector<16x16xf32> to vector<16xf32>
    %78 = vector.shape_cast %77 : vector<16xf32> to vector<16x1xf32>
    %79 = tpu.reciprocal %78 {approx = true} : vector<16x1xf32> -> vector<16x1xf32>
    %80 = vector.broadcast %79 : vector<16x1xf32> to vector<16x16xf32>
    %81 = arith.mulf %76, %80 : vector<16x16xf32>
    %82 = arith.truncf %81 : vector<16x16xf32> to vector<16x16xbf16>
    %83 = arith.truncf %65 : vector<16x16xf32> to vector<16x16xbf16>
    %cst_31 = arith.constant dense<0.000000e+00> : vector<16x16xf32>
    %84 = tpu.matmul %82, %83, %cst_31 {dimension_numbers = #tpu.dot_dimension_numbers<[1], [0], [0], [1], [0, 0, 1, 1], [], []>} : vector<16x16xbf16>, vector<16x16xbf16>, vector<16x16xf32> -> vector<16x16xf32>
    %c1 = arith.constant 1 : index
    %c0_32 = arith.constant 0 : index
    %c0_33 = arith.constant 0 : index
    %85 = vector.load %arg8[%c1, %c0_32, %c0_33] : memref<4x16x32xbf16, #tpu.memory_space<vmem>>, vector<1x16x32xbf16>
    %86 = vector.shape_cast %85 : vector<1x16x32xbf16> to vector<16x32xbf16>
    %87 = arith.truncf %84 : vector<16x16xf32> to vector<16x16xbf16>
    %cst_34 = arith.constant dense<0.000000e+00> : vector<16x32xf32>
    %88 = tpu.matmul %87, %86, %cst_34 {dimension_numbers = #tpu.dot_dimension_numbers<[1], [0], [0], [1], [0, 0, 1, 1], [], []>} : vector<16x16xbf16>, vector<16x32xbf16>, vector<16x32xf32> -> vector<16x32xf32>
    %89 = arith.addf %62, %88 : vector<16x32xf32>
    %c0_35 = arith.constant 0 : index
    %c0_36 = arith.constant 0 : index
    %c0_37 = arith.constant 0 : index
    %90 = vector.load %arg9[%c0_35, %c0_36, %c0_37] : memref<2x1x32xf32, #tpu.memory_space<vmem>>, vector<1x1x32xf32>
    %91 = vector.shape_cast %90 : vector<1x1x32xf32> to vector<1x32xf32>
    %92 = vector.broadcast %91 : vector<1x32xf32> to vector<16x32xf32>
    %93 = arith.addf %89, %92 : vector<16x32xf32>
    %94 = arith.addf %9, %93 : vector<16x32xf32>
    %c0_38 = arith.constant 0 : index
    %c0_39 = arith.constant 0 : index
    %c0_40 = arith.constant 0 : index
    %95 = vector.load %arg10[%c0_38, %c0_39, %c0_40] : memref<2x1x32xf32, #tpu.memory_space<vmem>>, vector<1x1x32xf32>
    %96 = vector.shape_cast %95 : vector<1x1x32xf32> to vector<1x32xf32>
    %c0_41 = arith.constant 0 : index
    %c0_42 = arith.constant 0 : index
    %c0_43 = arith.constant 0 : index
    %97 = vector.load %arg11[%c0_41, %c0_42, %c0_43] : memref<2x1x32xf32, #tpu.memory_space<vmem>>, vector<1x1x32xf32>
    %98 = vector.shape_cast %97 : vector<1x1x32xf32> to vector<1x32xf32>
    %cst_44 = arith.constant dense<0.000000e+00> : vector<16xf32>
    %99 = vector.multi_reduction <add>, %94, %cst_44 [1] : vector<16x32xf32> to vector<16xf32>
    %100 = vector.shape_cast %99 : vector<16xf32> to vector<16x1xf32>
    %cst_45 = arith.constant 3.200000e+01 : f32
    %101 = vector.broadcast %cst_45 : f32 to vector<16x1xf32>
    %102 = arith.divf %100, %101 : vector<16x1xf32>
    %103 = vector.broadcast %102 : vector<16x1xf32> to vector<16x32xf32>
    %104 = arith.subf %94, %103 : vector<16x32xf32>
    %105 = vector.broadcast %102 : vector<16x1xf32> to vector<16x32xf32>
    %106 = arith.subf %94, %105 : vector<16x32xf32>
    %107 = arith.mulf %104, %106 : vector<16x32xf32>
    %cst_46 = arith.constant dense<0.000000e+00> : vector<16xf32>
    %108 = vector.multi_reduction <add>, %107, %cst_46 [1] : vector<16x32xf32> to vector<16xf32>
    %109 = vector.shape_cast %108 : vector<16xf32> to vector<16x1xf32>
    %cst_47 = arith.constant 3.200000e+01 : f32
    %110 = vector.broadcast %cst_47 : f32 to vector<16x1xf32>
    %111 = arith.divf %109, %110 : vector<16x1xf32>
    %112 = vector.broadcast %102 : vector<16x1xf32> to vector<16x32xf32>
    %113 = arith.subf %94, %112 : vector<16x32xf32>
    %cst_48 = arith.constant 9.99999974E-6 : f32
    %114 = vector.broadcast %cst_48 : f32 to vector<16x1xf32>
    %115 = arith.addf %111, %114 : vector<16x1xf32>
    %116 = math.rsqrt %115 : vector<16x1xf32>
    %117 = vector.broadcast %116 : vector<16x1xf32> to vector<16x32xf32>
    %118 = arith.mulf %113, %117 : vector<16x32xf32>
    %119 = vector.broadcast %96 : vector<1x32xf32> to vector<16x32xf32>
    %120 = arith.mulf %118, %119 : vector<16x32xf32>
    %121 = vector.broadcast %98 : vector<1x32xf32> to vector<16x32xf32>
    %122 = arith.addf %120, %121 : vector<16x32xf32>
    %c0_49 = arith.constant 0 : index
    %c0_50 = arith.constant 0 : index
    %c0_51 = arith.constant 0 : index
    %123 = vector.load %arg12[%c0_49, %c0_50, %c0_51] : memref<2x32x32xbf16, #tpu.memory_space<vmem>>, vector<1x32x32xbf16>
    %124 = vector.shape_cast %123 : vector<1x32x32xbf16> to vector<32x32xbf16>
    %125 = arith.truncf %122 : vector<16x32xf32> to vector<16x32xbf16>
    %cst_52 = arith.constant dense<0.000000e+00> : vector<16x32xf32>
    %126 = tpu.matmul %125, %124, %cst_52 {dimension_numbers = #tpu.dot_dimension_numbers<[1], [0], [0], [1], [0, 0, 1, 1], [], []>} : vector<16x32xbf16>, vector<32x32xbf16>, vector<16x32xf32> -> vector<16x32xf32>
    %c0_53 = arith.constant 0 : index
    %c0_54 = arith.constant 0 : index
    %c0_55 = arith.constant 0 : index
    %127 = vector.load %arg13[%c0_53, %c0_54, %c0_55] : memref<2x1x32xf32, #tpu.memory_space<vmem>>, vector<1x1x32xf32>
    %128 = vector.shape_cast %127 : vector<1x1x32xf32> to vector<1x32xf32>
    %129 = vector.broadcast %128 : vector<1x32xf32> to vector<16x32xf32>
    %130 = arith.addf %126, %129 : vector<16x32xf32>
    %cst_56 = arith.constant 0.000000e+00 : f32
    %131 = vector.broadcast %cst_56 : f32 to vector<16x32xf32>
    %132 = arith.maximumf %130, %131 : vector<16x32xf32>
    %c0_57 = arith.constant 0 : index
    %c0_58 = arith.constant 0 : index
    %c0_59 = arith.constant 0 : index
    %133 = vector.load %arg14[%c0_57, %c0_58, %c0_59] : memref<2x32x32xbf16, #tpu.memory_space<vmem>>, vector<1x32x32xbf16>
    %134 = vector.shape_cast %133 : vector<1x32x32xbf16> to vector<32x32xbf16>
    %135 = arith.truncf %132 : vector<16x32xf32> to vector<16x32xbf16>
    %cst_60 = arith.constant dense<0.000000e+00> : vector<16x32xf32>
    %136 = tpu.matmul %135, %134, %cst_60 {dimension_numbers = #tpu.dot_dimension_numbers<[1], [0], [0], [1], [0, 0, 1, 1], [], []>} : vector<16x32xbf16>, vector<32x32xbf16>, vector<16x32xf32> -> vector<16x32xf32>
    %c0_61 = arith.constant 0 : index
    %c0_62 = arith.constant 0 : index
    %c0_63 = arith.constant 0 : index
    %137 = vector.load %arg15[%c0_61, %c0_62, %c0_63] : memref<2x1x32xf32, #tpu.memory_space<vmem>>, vector<1x1x32xf32>
    %138 = vector.shape_cast %137 : vector<1x1x32xf32> to vector<1x32xf32>
    %139 = vector.broadcast %138 : vector<1x32xf32> to vector<16x32xf32>
    %140 = arith.addf %136, %139 : vector<16x32xf32>
    %141 = arith.addf %122, %140 : vector<16x32xf32>
    %c0_64 = arith.constant 0 : index
    %c0_65 = arith.constant 0 : index
    %c0_66 = arith.constant 0 : index
    %142 = vector.load %arg16[%c0_64, %c0_65, %c0_66] : memref<2x1x32xf32, #tpu.memory_space<vmem>>, vector<1x1x32xf32>
    %143 = vector.shape_cast %142 : vector<1x1x32xf32> to vector<1x32xf32>
    %c0_67 = arith.constant 0 : index
    %c0_68 = arith.constant 0 : index
    %c0_69 = arith.constant 0 : index
    %144 = vector.load %arg17[%c0_67, %c0_68, %c0_69] : memref<2x1x32xf32, #tpu.memory_space<vmem>>, vector<1x1x32xf32>
    %145 = vector.shape_cast %144 : vector<1x1x32xf32> to vector<1x32xf32>
    %cst_70 = arith.constant dense<0.000000e+00> : vector<16xf32>
    %146 = vector.multi_reduction <add>, %141, %cst_70 [1] : vector<16x32xf32> to vector<16xf32>
    %147 = vector.shape_cast %146 : vector<16xf32> to vector<16x1xf32>
    %cst_71 = arith.constant 3.200000e+01 : f32
    %148 = vector.broadcast %cst_71 : f32 to vector<16x1xf32>
    %149 = arith.divf %147, %148 : vector<16x1xf32>
    %150 = vector.broadcast %149 : vector<16x1xf32> to vector<16x32xf32>
    %151 = arith.subf %141, %150 : vector<16x32xf32>
    %152 = vector.broadcast %149 : vector<16x1xf32> to vector<16x32xf32>
    %153 = arith.subf %141, %152 : vector<16x32xf32>
    %154 = arith.mulf %151, %153 : vector<16x32xf32>
    %cst_72 = arith.constant dense<0.000000e+00> : vector<16xf32>
    %155 = vector.multi_reduction <add>, %154, %cst_72 [1] : vector<16x32xf32> to vector<16xf32>
    %156 = vector.shape_cast %155 : vector<16xf32> to vector<16x1xf32>
    %cst_73 = arith.constant 3.200000e+01 : f32
    %157 = vector.broadcast %cst_73 : f32 to vector<16x1xf32>
    %158 = arith.divf %156, %157 : vector<16x1xf32>
    %159 = vector.broadcast %149 : vector<16x1xf32> to vector<16x32xf32>
    %160 = arith.subf %141, %159 : vector<16x32xf32>
    %cst_74 = arith.constant 9.99999974E-6 : f32
    %161 = vector.broadcast %cst_74 : f32 to vector<16x1xf32>
    %162 = arith.addf %158, %161 : vector<16x1xf32>
    %163 = math.rsqrt %162 : vector<16x1xf32>
    %164 = vector.broadcast %163 : vector<16x1xf32> to vector<16x32xf32>
    %165 = arith.mulf %160, %164 : vector<16x32xf32>
    %166 = vector.broadcast %143 : vector<1x32xf32> to vector<16x32xf32>
    %167 = arith.mulf %165, %166 : vector<16x32xf32>
    %168 = vector.broadcast %145 : vector<1x32xf32> to vector<16x32xf32>
    %169 = arith.addf %167, %168 : vector<16x32xf32>
    %c1_75 = arith.constant 1 : index
    %c0_76 = arith.constant 0 : index
    %c0_77 = arith.constant 0 : index
    %170 = vector.load %arg6[%c1_75, %c0_76, %c0_77] : memref<2x32x96xbf16, #tpu.memory_space<vmem>>, vector<1x32x96xbf16>
    %171 = vector.shape_cast %170 : vector<1x32x96xbf16> to vector<32x96xbf16>
    %172 = arith.truncf %169 : vector<16x32xf32> to vector<16x32xbf16>
    %cst_78 = arith.constant dense<0.000000e+00> : vector<16x96xf32>
    %173 = tpu.matmul %172, %171, %cst_78 {dimension_numbers = #tpu.dot_dimension_numbers<[1], [0], [0], [1], [0, 0, 1, 1], [], []>} : vector<16x32xbf16>, vector<32x96xbf16>, vector<16x96xf32> -> vector<16x96xf32>
    %c1_79 = arith.constant 1 : index
    %c0_80 = arith.constant 0 : index
    %c0_81 = arith.constant 0 : index
    %174 = vector.load %arg7[%c1_79, %c0_80, %c0_81] : memref<2x1x96xf32, #tpu.memory_space<vmem>>, vector<1x1x96xf32>
    %175 = vector.shape_cast %174 : vector<1x1x96xf32> to vector<1x96xf32>
    %176 = vector.broadcast %175 : vector<1x96xf32> to vector<16x96xf32>
    %177 = arith.addf %173, %176 : vector<16x96xf32>
    %cst_82 = arith.constant 0.000000e+00 : f32
    %178 = vector.broadcast %cst_82 : f32 to vector<16x32xf32>
    %179 = vector.extract_strided_slice %177 {offsets = [0, 0], sizes = [16, 16], strides = [1, 1]} : vector<16x96xf32> to vector<16x16xf32>
    %180 = vector.extract_strided_slice %177 {offsets = [0, 32], sizes = [16, 16], strides = [1, 1]} : vector<16x96xf32> to vector<16x16xf32>
    %181 = vector.extract_strided_slice %177 {offsets = [0, 64], sizes = [16, 16], strides = [1, 1]} : vector<16x96xf32> to vector<16x16xf32>
    %182 = arith.truncf %179 : vector<16x16xf32> to vector<16x16xbf16>
    %183 = arith.truncf %180 : vector<16x16xf32> to vector<16x16xbf16>
    %cst_83 = arith.constant dense<0.000000e+00> : vector<16x16xf32>
    %184 = tpu.matmul %182, %183, %cst_83 {dimension_numbers = #tpu.dot_dimension_numbers<[1], [1], [0], [0], [0, 0, 1, 0], [], []>} : vector<16x16xbf16>, vector<16x16xbf16>, vector<16x16xf32> -> vector<16x16xf32>
    %cst_84 = arith.constant 2.500000e-01 : f32
    %185 = vector.broadcast %cst_84 : f32 to vector<16x16xf32>
    %186 = arith.mulf %184, %185 : vector<16x16xf32>
    %187 = arith.addf %186, %26 : vector<16x16xf32>
    %cst_85 = arith.constant dense<0xFF800000> : vector<16xf32>
    %188 = vector.multi_reduction <maximumf>, %187, %cst_85 [1] : vector<16x16xf32> to vector<16xf32>
    %189 = vector.shape_cast %188 : vector<16xf32> to vector<16x1xf32>
    %190 = vector.broadcast %189 : vector<16x1xf32> to vector<16x16xf32>
    %191 = arith.subf %187, %190 : vector<16x16xf32>
    %192 = math.exp %191 : vector<16x16xf32>
    %cst_86 = arith.constant dense<0.000000e+00> : vector<16xf32>
    %193 = vector.multi_reduction <add>, %192, %cst_86 [1] : vector<16x16xf32> to vector<16xf32>
    %194 = vector.shape_cast %193 : vector<16xf32> to vector<16x1xf32>
    %195 = tpu.reciprocal %194 {approx = true} : vector<16x1xf32> -> vector<16x1xf32>
    %196 = vector.broadcast %195 : vector<16x1xf32> to vector<16x16xf32>
    %197 = arith.mulf %192, %196 : vector<16x16xf32>
    %198 = arith.truncf %197 : vector<16x16xf32> to vector<16x16xbf16>
    %199 = arith.truncf %181 : vector<16x16xf32> to vector<16x16xbf16>
    %cst_87 = arith.constant dense<0.000000e+00> : vector<16x16xf32>
    %200 = tpu.matmul %198, %199, %cst_87 {dimension_numbers = #tpu.dot_dimension_numbers<[1], [0], [0], [1], [0, 0, 1, 1], [], []>} : vector<16x16xbf16>, vector<16x16xbf16>, vector<16x16xf32> -> vector<16x16xf32>
    %c2 = arith.constant 2 : index
    %c0_88 = arith.constant 0 : index
    %c0_89 = arith.constant 0 : index
    %201 = vector.load %arg8[%c2, %c0_88, %c0_89] : memref<4x16x32xbf16, #tpu.memory_space<vmem>>, vector<1x16x32xbf16>
    %202 = vector.shape_cast %201 : vector<1x16x32xbf16> to vector<16x32xbf16>
    %203 = arith.truncf %200 : vector<16x16xf32> to vector<16x16xbf16>
    %cst_90 = arith.constant dense<0.000000e+00> : vector<16x32xf32>
    %204 = tpu.matmul %203, %202, %cst_90 {dimension_numbers = #tpu.dot_dimension_numbers<[1], [0], [0], [1], [0, 0, 1, 1], [], []>} : vector<16x16xbf16>, vector<16x32xbf16>, vector<16x32xf32> -> vector<16x32xf32>
    %205 = arith.addf %178, %204 : vector<16x32xf32>
    %206 = vector.extract_strided_slice %177 {offsets = [0, 16], sizes = [16, 16], strides = [1, 1]} : vector<16x96xf32> to vector<16x16xf32>
    %207 = vector.extract_strided_slice %177 {offsets = [0, 48], sizes = [16, 16], strides = [1, 1]} : vector<16x96xf32> to vector<16x16xf32>
    %208 = vector.extract_strided_slice %177 {offsets = [0, 80], sizes = [16, 16], strides = [1, 1]} : vector<16x96xf32> to vector<16x16xf32>
    %209 = arith.truncf %206 : vector<16x16xf32> to vector<16x16xbf16>
    %210 = arith.truncf %207 : vector<16x16xf32> to vector<16x16xbf16>
    %cst_91 = arith.constant dense<0.000000e+00> : vector<16x16xf32>
    %211 = tpu.matmul %209, %210, %cst_91 {dimension_numbers = #tpu.dot_dimension_numbers<[1], [1], [0], [0], [0, 0, 1, 0], [], []>} : vector<16x16xbf16>, vector<16x16xbf16>, vector<16x16xf32> -> vector<16x16xf32>
    %cst_92 = arith.constant 2.500000e-01 : f32
    %212 = vector.broadcast %cst_92 : f32 to vector<16x16xf32>
    %213 = arith.mulf %211, %212 : vector<16x16xf32>
    %214 = arith.addf %213, %26 : vector<16x16xf32>
    %cst_93 = arith.constant dense<0xFF800000> : vector<16xf32>
    %215 = vector.multi_reduction <maximumf>, %214, %cst_93 [1] : vector<16x16xf32> to vector<16xf32>
    %216 = vector.shape_cast %215 : vector<16xf32> to vector<16x1xf32>
    %217 = vector.broadcast %216 : vector<16x1xf32> to vector<16x16xf32>
    %218 = arith.subf %214, %217 : vector<16x16xf32>
    %219 = math.exp %218 : vector<16x16xf32>
    %cst_94 = arith.constant dense<0.000000e+00> : vector<16xf32>
    %220 = vector.multi_reduction <add>, %219, %cst_94 [1] : vector<16x16xf32> to vector<16xf32>
    %221 = vector.shape_cast %220 : vector<16xf32> to vector<16x1xf32>
    %222 = tpu.reciprocal %221 {approx = true} : vector<16x1xf32> -> vector<16x1xf32>
    %223 = vector.broadcast %222 : vector<16x1xf32> to vector<16x16xf32>
    %224 = arith.mulf %219, %223 : vector<16x16xf32>
    %225 = arith.truncf %224 : vector<16x16xf32> to vector<16x16xbf16>
    %226 = arith.truncf %208 : vector<16x16xf32> to vector<16x16xbf16>
    %cst_95 = arith.constant dense<0.000000e+00> : vector<16x16xf32>
    %227 = tpu.matmul %225, %226, %cst_95 {dimension_numbers = #tpu.dot_dimension_numbers<[1], [0], [0], [1], [0, 0, 1, 1], [], []>} : vector<16x16xbf16>, vector<16x16xbf16>, vector<16x16xf32> -> vector<16x16xf32>
    %c3 = arith.constant 3 : index
    %c0_96 = arith.constant 0 : index
    %c0_97 = arith.constant 0 : index
    %228 = vector.load %arg8[%c3, %c0_96, %c0_97] : memref<4x16x32xbf16, #tpu.memory_space<vmem>>, vector<1x16x32xbf16>
    %229 = vector.shape_cast %228 : vector<1x16x32xbf16> to vector<16x32xbf16>
    %230 = arith.truncf %227 : vector<16x16xf32> to vector<16x16xbf16>
    %cst_98 = arith.constant dense<0.000000e+00> : vector<16x32xf32>
    %231 = tpu.matmul %230, %229, %cst_98 {dimension_numbers = #tpu.dot_dimension_numbers<[1], [0], [0], [1], [0, 0, 1, 1], [], []>} : vector<16x16xbf16>, vector<16x32xbf16>, vector<16x32xf32> -> vector<16x32xf32>
    %232 = arith.addf %205, %231 : vector<16x32xf32>
    %c1_99 = arith.constant 1 : index
    %c0_100 = arith.constant 0 : index
    %c0_101 = arith.constant 0 : index
    %233 = vector.load %arg9[%c1_99, %c0_100, %c0_101] : memref<2x1x32xf32, #tpu.memory_space<vmem>>, vector<1x1x32xf32>
    %234 = vector.shape_cast %233 : vector<1x1x32xf32> to vector<1x32xf32>
    %235 = vector.broadcast %234 : vector<1x32xf32> to vector<16x32xf32>
    %236 = arith.addf %232, %235 : vector<16x32xf32>
    %237 = arith.addf %169, %236 : vector<16x32xf32>
    %c1_102 = arith.constant 1 : index
    %c0_103 = arith.constant 0 : index
    %c0_104 = arith.constant 0 : index
    %238 = vector.load %arg10[%c1_102, %c0_103, %c0_104] : memref<2x1x32xf32, #tpu.memory_space<vmem>>, vector<1x1x32xf32>
    %239 = vector.shape_cast %238 : vector<1x1x32xf32> to vector<1x32xf32>
    %c1_105 = arith.constant 1 : index
    %c0_106 = arith.constant 0 : index
    %c0_107 = arith.constant 0 : index
    %240 = vector.load %arg11[%c1_105, %c0_106, %c0_107] : memref<2x1x32xf32, #tpu.memory_space<vmem>>, vector<1x1x32xf32>
    %241 = vector.shape_cast %240 : vector<1x1x32xf32> to vector<1x32xf32>
    %cst_108 = arith.constant dense<0.000000e+00> : vector<16xf32>
    %242 = vector.multi_reduction <add>, %237, %cst_108 [1] : vector<16x32xf32> to vector<16xf32>
    %243 = vector.shape_cast %242 : vector<16xf32> to vector<16x1xf32>
    %cst_109 = arith.constant 3.200000e+01 : f32
    %244 = vector.broadcast %cst_109 : f32 to vector<16x1xf32>
    %245 = arith.divf %243, %244 : vector<16x1xf32>
    %246 = vector.broadcast %245 : vector<16x1xf32> to vector<16x32xf32>
    %247 = arith.subf %237, %246 : vector<16x32xf32>
    %248 = vector.broadcast %245 : vector<16x1xf32> to vector<16x32xf32>
    %249 = arith.subf %237, %248 : vector<16x32xf32>
    %250 = arith.mulf %247, %249 : vector<16x32xf32>
    %cst_110 = arith.constant dense<0.000000e+00> : vector<16xf32>
    %251 = vector.multi_reduction <add>, %250, %cst_110 [1] : vector<16x32xf32> to vector<16xf32>
    %252 = vector.shape_cast %251 : vector<16xf32> to vector<16x1xf32>
    %cst_111 = arith.constant 3.200000e+01 : f32
    %253 = vector.broadcast %cst_111 : f32 to vector<16x1xf32>
    %254 = arith.divf %252, %253 : vector<16x1xf32>
    %255 = vector.broadcast %245 : vector<16x1xf32> to vector<16x32xf32>
    %256 = arith.subf %237, %255 : vector<16x32xf32>
    %cst_112 = arith.constant 9.99999974E-6 : f32
    %257 = vector.broadcast %cst_112 : f32 to vector<16x1xf32>
    %258 = arith.addf %254, %257 : vector<16x1xf32>
    %259 = math.rsqrt %258 : vector<16x1xf32>
    %260 = vector.broadcast %259 : vector<16x1xf32> to vector<16x32xf32>
    %261 = arith.mulf %256, %260 : vector<16x32xf32>
    %262 = vector.broadcast %239 : vector<1x32xf32> to vector<16x32xf32>
    %263 = arith.mulf %261, %262 : vector<16x32xf32>
    %264 = vector.broadcast %241 : vector<1x32xf32> to vector<16x32xf32>
    %265 = arith.addf %263, %264 : vector<16x32xf32>
    %c1_113 = arith.constant 1 : index
    %c0_114 = arith.constant 0 : index
    %c0_115 = arith.constant 0 : index
    %266 = vector.load %arg12[%c1_113, %c0_114, %c0_115] : memref<2x32x32xbf16, #tpu.memory_space<vmem>>, vector<1x32x32xbf16>
    %267 = vector.shape_cast %266 : vector<1x32x32xbf16> to vector<32x32xbf16>
    %268 = arith.truncf %265 : vector<16x32xf32> to vector<16x32xbf16>
    %cst_116 = arith.constant dense<0.000000e+00> : vector<16x32xf32>
    %269 = tpu.matmul %268, %267, %cst_116 {dimension_numbers = #tpu.dot_dimension_numbers<[1], [0], [0], [1], [0, 0, 1, 1], [], []>} : vector<16x32xbf16>, vector<32x32xbf16>, vector<16x32xf32> -> vector<16x32xf32>
    %c1_117 = arith.constant 1 : index
    %c0_118 = arith.constant 0 : index
    %c0_119 = arith.constant 0 : index
    %270 = vector.load %arg13[%c1_117, %c0_118, %c0_119] : memref<2x1x32xf32, #tpu.memory_space<vmem>>, vector<1x1x32xf32>
    %271 = vector.shape_cast %270 : vector<1x1x32xf32> to vector<1x32xf32>
    %272 = vector.broadcast %271 : vector<1x32xf32> to vector<16x32xf32>
    %273 = arith.addf %269, %272 : vector<16x32xf32>
    %cst_120 = arith.constant 0.000000e+00 : f32
    %274 = vector.broadcast %cst_120 : f32 to vector<16x32xf32>
    %275 = arith.maximumf %273, %274 : vector<16x32xf32>
    %c1_121 = arith.constant 1 : index
    %c0_122 = arith.constant 0 : index
    %c0_123 = arith.constant 0 : index
    %276 = vector.load %arg14[%c1_121, %c0_122, %c0_123] : memref<2x32x32xbf16, #tpu.memory_space<vmem>>, vector<1x32x32xbf16>
    %277 = vector.shape_cast %276 : vector<1x32x32xbf16> to vector<32x32xbf16>
    %278 = arith.truncf %275 : vector<16x32xf32> to vector<16x32xbf16>
    %cst_124 = arith.constant dense<0.000000e+00> : vector<16x32xf32>
    %279 = tpu.matmul %278, %277, %cst_124 {dimension_numbers = #tpu.dot_dimension_numbers<[1], [0], [0], [1], [0, 0, 1, 1], [], []>} : vector<16x32xbf16>, vector<32x32xbf16>, vector<16x32xf32> -> vector<16x32xf32>
    %c1_125 = arith.constant 1 : index
    %c0_126 = arith.constant 0 : index
    %c0_127 = arith.constant 0 : index
    %280 = vector.load %arg15[%c1_125, %c0_126, %c0_127] : memref<2x1x32xf32, #tpu.memory_space<vmem>>, vector<1x1x32xf32>
    %281 = vector.shape_cast %280 : vector<1x1x32xf32> to vector<1x32xf32>
    %282 = vector.broadcast %281 : vector<1x32xf32> to vector<16x32xf32>
    %283 = arith.addf %279, %282 : vector<16x32xf32>
    %284 = arith.addf %265, %283 : vector<16x32xf32>
    %c1_128 = arith.constant 1 : index
    %c0_129 = arith.constant 0 : index
    %c0_130 = arith.constant 0 : index
    %285 = vector.load %arg16[%c1_128, %c0_129, %c0_130] : memref<2x1x32xf32, #tpu.memory_space<vmem>>, vector<1x1x32xf32>
    %286 = vector.shape_cast %285 : vector<1x1x32xf32> to vector<1x32xf32>
    %c1_131 = arith.constant 1 : index
    %c0_132 = arith.constant 0 : index
    %c0_133 = arith.constant 0 : index
    %287 = vector.load %arg17[%c1_131, %c0_132, %c0_133] : memref<2x1x32xf32, #tpu.memory_space<vmem>>, vector<1x1x32xf32>
    %288 = vector.shape_cast %287 : vector<1x1x32xf32> to vector<1x32xf32>
    %cst_134 = arith.constant dense<0.000000e+00> : vector<16xf32>
    %289 = vector.multi_reduction <add>, %284, %cst_134 [1] : vector<16x32xf32> to vector<16xf32>
    %290 = vector.shape_cast %289 : vector<16xf32> to vector<16x1xf32>
    %cst_135 = arith.constant 3.200000e+01 : f32
    %291 = vector.broadcast %cst_135 : f32 to vector<16x1xf32>
    %292 = arith.divf %290, %291 : vector<16x1xf32>
    %293 = vector.broadcast %292 : vector<16x1xf32> to vector<16x32xf32>
    %294 = arith.subf %284, %293 : vector<16x32xf32>
    %295 = vector.broadcast %292 : vector<16x1xf32> to vector<16x32xf32>
    %296 = arith.subf %284, %295 : vector<16x32xf32>
    %297 = arith.mulf %294, %296 : vector<16x32xf32>
    %cst_136 = arith.constant dense<0.000000e+00> : vector<16xf32>
    %298 = vector.multi_reduction <add>, %297, %cst_136 [1] : vector<16x32xf32> to vector<16xf32>
    %299 = vector.shape_cast %298 : vector<16xf32> to vector<16x1xf32>
    %cst_137 = arith.constant 3.200000e+01 : f32
    %300 = vector.broadcast %cst_137 : f32 to vector<16x1xf32>
    %301 = arith.divf %299, %300 : vector<16x1xf32>
    %302 = vector.broadcast %292 : vector<16x1xf32> to vector<16x32xf32>
    %303 = arith.subf %284, %302 : vector<16x32xf32>
    %cst_138 = arith.constant 9.99999974E-6 : f32
    %304 = vector.broadcast %cst_138 : f32 to vector<16x1xf32>
    %305 = arith.addf %301, %304 : vector<16x1xf32>
    %306 = math.rsqrt %305 : vector<16x1xf32>
    %307 = vector.broadcast %306 : vector<16x1xf32> to vector<16x32xf32>
    %308 = arith.mulf %303, %307 : vector<16x32xf32>
    %309 = vector.broadcast %286 : vector<1x32xf32> to vector<16x32xf32>
    %310 = arith.mulf %308, %309 : vector<16x32xf32>
    %311 = vector.broadcast %288 : vector<1x32xf32> to vector<16x32xf32>
    %312 = arith.addf %310, %311 : vector<16x32xf32>
    %313 = vector.extract_strided_slice %312 {offsets = [0, 0], sizes = [4, 32], strides = [1, 1]} : vector<16x32xf32> to vector<4x32xf32>
    %c0_139 = arith.constant 0 : index
    %c0_140 = arith.constant 0 : index
    %314 = vector.load %arg18[%c0_139, %c0_140] : memref<32x64xbf16, #tpu.memory_space<vmem>>, vector<32x64xbf16>
    %315 = arith.truncf %313 : vector<4x32xf32> to vector<4x32xbf16>
    %cst_141 = arith.constant dense<0.000000e+00> : vector<4x64xf32>
    %316 = tpu.matmul %315, %314, %cst_141 {dimension_numbers = #tpu.dot_dimension_numbers<[1], [0], [0], [1], [0, 0, 1, 1], [], []>} : vector<4x32xbf16>, vector<32x64xbf16>, vector<4x64xf32> -> vector<4x64xf32>
    %c0_142 = arith.constant 0 : index
    %c0_143 = arith.constant 0 : index
    %317 = vector.load %arg19[%c0_142, %c0_143] : memref<1x64xf32, #tpu.memory_space<vmem>>, vector<1x64xf32>
    %318 = vector.broadcast %317 : vector<1x64xf32> to vector<4x64xf32>
    %319 = arith.addf %316, %318 : vector<4x64xf32>
    %cst_144 = arith.constant 0.000000e+00 : f32
    %320 = vector.broadcast %cst_144 : f32 to vector<4x64xf32>
    %321 = arith.maximumf %319, %320 : vector<4x64xf32>
    %c0_145 = arith.constant 0 : index
    %c0_146 = arith.constant 0 : index
    %322 = vector.load %arg20[%c0_145, %c0_146] : memref<64x16xbf16, #tpu.memory_space<vmem>>, vector<64x16xbf16>
    %323 = arith.truncf %321 : vector<4x64xf32> to vector<4x64xbf16>
    %cst_147 = arith.constant dense<0.000000e+00> : vector<4x16xf32>
    %324 = tpu.matmul %323, %322, %cst_147 {dimension_numbers = #tpu.dot_dimension_numbers<[1], [0], [0], [1], [0, 0, 1, 1], [], []>} : vector<4x64xbf16>, vector<64x16xbf16>, vector<4x16xf32> -> vector<4x16xf32>
    %c0_148 = arith.constant 0 : index
    %c0_149 = arith.constant 0 : index
    %325 = vector.load %arg21[%c0_148, %c0_149] : memref<1x16xf32, #tpu.memory_space<vmem>>, vector<1x16xf32>
    %326 = vector.broadcast %325 : vector<1x16xf32> to vector<4x16xf32>
    %327 = arith.addf %324, %326 : vector<4x16xf32>
    %cst_150 = arith.constant 0.000000e+00 : f32
    %328 = vector.broadcast %cst_150 : f32 to vector<4x16xf32>
    %329 = arith.maximumf %327, %328 : vector<4x16xf32>
    %c0_151 = arith.constant 0 : index
    %c0_152 = arith.constant 0 : index
    %330 = vector.load %arg22[%c0_151, %c0_152] : memref<16x128xbf16, #tpu.memory_space<vmem>>, vector<16x128xbf16>
    %331 = arith.truncf %329 : vector<4x16xf32> to vector<4x16xbf16>
    %cst_153 = arith.constant dense<0.000000e+00> : vector<4x128xf32>
    %332 = tpu.matmul %331, %330, %cst_153 {dimension_numbers = #tpu.dot_dimension_numbers<[1], [0], [0], [1], [0, 0, 1, 1], [], []>} : vector<4x16xbf16>, vector<16x128xbf16>, vector<4x128xf32> -> vector<4x128xf32>
    %c0_154 = arith.constant 0 : index
    %c0_155 = arith.constant 0 : index
    %333 = vector.load %arg23[%c0_154, %c0_155] : memref<1x128xf32, #tpu.memory_space<vmem>>, vector<1x128xf32>
    %334 = vector.broadcast %333 : vector<1x128xf32> to vector<4x128xf32>
    %335 = arith.addf %332, %334 : vector<4x128xf32>
    %c0_156 = arith.constant 0 : index
    %c0_157 = arith.constant 0 : index
    %336 = vector.load %arg34[%c0_156, %c0_157] : memref<4x128xf32, #tpu.memory_space<vmem>>, vector<4x128xf32>
    tpu.vector_store %arg34[%c0_156, %c0_157], %335 {strides = array<i32>} : memref<4x128xf32, #tpu.memory_space<vmem>>, vector<4x128xf32>,
    %c0_158 = arith.constant 0 : index
    %c0_159 = arith.constant 0 : index
    %337 = vector.load %arg2[%c0_158, %c0_159] : memref<12x64xbf16, #tpu.memory_space<vmem>>, vector<12x64xbf16>
    %c0_160 = arith.constant 0 : index
    %c0_161 = arith.constant 0 : index
    %338 = vector.load %arg24[%c0_160, %c0_161] : memref<64x32xbf16, #tpu.memory_space<vmem>>, vector<64x32xbf16>
    %cst_162 = arith.constant dense<0.000000e+00> : vector<12x32xf32>
    %339 = tpu.matmul %337, %338, %cst_162 {dimension_numbers = #tpu.dot_dimension_numbers<[1], [0], [0], [1], [0, 0, 1, 1], [], []>} : vector<12x64xbf16>, vector<64x32xbf16>, vector<12x32xf32> -> vector<12x32xf32>
    %c0_163 = arith.constant 0 : index
    %c0_164 = arith.constant 0 : index
    %340 = vector.load %arg25[%c0_163, %c0_164] : memref<1x32xf32, #tpu.memory_space<vmem>>, vector<1x32xf32>
    %341 = vector.broadcast %340 : vector<1x32xf32> to vector<12x32xf32>
    %342 = arith.addf %339, %341 : vector<12x32xf32>
    %cst_165 = arith.constant 0.000000e+00 : f32
    %343 = vector.broadcast %cst_165 : f32 to vector<12x32xf32>
    %344 = arith.maximumf %342, %343 : vector<12x32xf32>
    %c0_166 = arith.constant 0 : index
    %c0_167 = arith.constant 0 : index
    %345 = vector.load %arg26[%c0_166, %c0_167] : memref<32x32xbf16, #tpu.memory_space<vmem>>, vector<32x32xbf16>
    %346 = arith.truncf %344 : vector<12x32xf32> to vector<12x32xbf16>
    %cst_168 = arith.constant dense<0.000000e+00> : vector<12x32xf32>
    %347 = tpu.matmul %346, %345, %cst_168 {dimension_numbers = #tpu.dot_dimension_numbers<[1], [0], [0], [1], [0, 0, 1, 1], [], []>} : vector<12x32xbf16>, vector<32x32xbf16>, vector<12x32xf32> -> vector<12x32xf32>
    %c0_169 = arith.constant 0 : index
    %c0_170 = arith.constant 0 : index
    %348 = vector.load %arg27[%c0_169, %c0_170] : memref<1x32xf32, #tpu.memory_space<vmem>>, vector<1x32xf32>
    %349 = vector.broadcast %348 : vector<1x32xf32> to vector<12x32xf32>
    %350 = arith.addf %347, %349 : vector<12x32xf32>
    %c0_171 = arith.constant 0 : index
    %c0_172 = arith.constant 0 : index
    %351 = vector.load %arg28[%c0_171, %c0_172] : memref<32x96xbf16, #tpu.memory_space<vmem>>, vector<32x96xbf16>
    %352 = arith.truncf %350 : vector<12x32xf32> to vector<12x32xbf16>
    %cst_173 = arith.constant dense<0.000000e+00> : vector<12x96xf32>
    %353 = tpu.matmul %352, %351, %cst_173 {dimension_numbers = #tpu.dot_dimension_numbers<[1], [0], [0], [1], [0, 0, 1, 1], [], []>} : vector<12x32xbf16>, vector<32x96xbf16>, vector<12x96xf32> -> vector<12x96xf32>
    %c0_174 = arith.constant 0 : index
    %c0_175 = arith.constant 0 : index
    %354 = vector.load %arg29[%c0_174, %c0_175] : memref<1x96xf32, #tpu.memory_space<vmem>>, vector<1x96xf32>
    %355 = vector.broadcast %354 : vector<1x96xf32> to vector<12x96xf32>
    %356 = arith.addf %353, %355 : vector<12x96xf32>
    %c0_176 = arith.constant 0 : index
    %c0_177 = arith.constant 0 : index
    %357 = vector.load %arg30[%c0_176, %c0_177] : memref<32x96xbf16, #tpu.memory_space<vmem>>, vector<32x96xbf16>
    %358 = arith.truncf %313 : vector<4x32xf32> to vector<4x32xbf16>
    %cst_178 = arith.constant dense<0.000000e+00> : vector<4x96xf32>
    %359 = tpu.matmul %358, %357, %cst_178 {dimension_numbers = #tpu.dot_dimension_numbers<[1], [0], [0], [1], [0, 0, 1, 1], [], []>} : vector<4x32xbf16>, vector<32x96xbf16>, vector<4x96xf32> -> vector<4x96xf32>
    %c0_179 = arith.constant 0 : index
    %c0_180 = arith.constant 0 : index
    %360 = vector.load %arg31[%c0_179, %c0_180] : memref<1x96xf32, #tpu.memory_space<vmem>>, vector<1x96xf32>
    %361 = vector.broadcast %360 : vector<1x96xf32> to vector<4x96xf32>
    %362 = arith.addf %359, %361 : vector<4x96xf32>
    %363 = vector.extract_strided_slice %356 {offsets = [0, 0], sizes = [4, 96], strides = [1, 1]} : vector<12x96xf32> to vector<4x96xf32>
    %364 = vector.extract_strided_slice %363 {offsets = [0, 0], sizes = [4, 32], strides = [1, 1]} : vector<4x96xf32> to vector<4x32xf32>
    %365 = vector.extract_strided_slice %362 {offsets = [0, 0], sizes = [4, 32], strides = [1, 1]} : vector<4x96xf32> to vector<4x32xf32>
    %366 = arith.addf %364, %365 : vector<4x32xf32>
    %367 = arith.negf %366 : vector<4x32xf32>
    %368 = math.exp %367 : vector<4x32xf32>
    %cst_181 = arith.constant 1.000000e+00 : f32
    %369 = vector.broadcast %cst_181 : f32 to vector<4x32xf32>
    %370 = arith.addf %369, %368 : vector<4x32xf32>
    %371 = arith.divf %369, %370 : vector<4x32xf32>
    %372 = vector.extract_strided_slice %363 {offsets = [0, 32], sizes = [4, 32], strides = [1, 1]} : vector<4x96xf32> to vector<4x32xf32>
    %373 = vector.extract_strided_slice %362 {offsets = [0, 32], sizes = [4, 32], strides = [1, 1]} : vector<4x96xf32> to vector<4x32xf32>
    %374 = arith.addf %372, %373 : vector<4x32xf32>
    %375 = arith.negf %374 : vector<4x32xf32>
    %376 = math.exp %375 : vector<4x32xf32>
    %cst_182 = arith.constant 1.000000e+00 : f32
    %377 = vector.broadcast %cst_182 : f32 to vector<4x32xf32>
    %378 = arith.addf %377, %376 : vector<4x32xf32>
    %379 = arith.divf %377, %378 : vector<4x32xf32>
    %380 = vector.extract_strided_slice %363 {offsets = [0, 64], sizes = [4, 32], strides = [1, 1]} : vector<4x96xf32> to vector<4x32xf32>
    %381 = vector.extract_strided_slice %362 {offsets = [0, 64], sizes = [4, 32], strides = [1, 1]} : vector<4x96xf32> to vector<4x32xf32>
    %382 = arith.mulf %371, %381 : vector<4x32xf32>
    %383 = arith.addf %380, %382 : vector<4x32xf32>
    %384 = math.tanh %383 : vector<4x32xf32>
    %cst_183 = arith.constant 1.000000e+00 : f32
    %385 = vector.broadcast %cst_183 : f32 to vector<4x32xf32>
    %386 = arith.subf %385, %379 : vector<4x32xf32>
    %387 = arith.mulf %386, %384 : vector<4x32xf32>
    %388 = arith.mulf %379, %313 : vector<4x32xf32>
    %389 = arith.addf %387, %388 : vector<4x32xf32>
    %c0_184 = arith.constant 0 : index
    %c0_185 = arith.constant 0 : index
    %390 = vector.load %arg36[%c0_184, %c0_185] : memref<12x32xf32, #tpu.memory_space<vmem>>, vector<4x32xf32>
    tpu.vector_store %arg36[%c0_184, %c0_185], %389 {strides = array<i32>} : memref<12x32xf32, #tpu.memory_space<vmem>>, vector<4x32xf32>,
    %c0_186 = arith.constant 0 : index
    %c0_187 = arith.constant 0 : index
    %391 = vector.load %arg30[%c0_186, %c0_187] : memref<32x96xbf16, #tpu.memory_space<vmem>>, vector<32x96xbf16>
    %392 = arith.truncf %389 : vector<4x32xf32> to vector<4x32xbf16>
    %cst_188 = arith.constant dense<0.000000e+00> : vector<4x96xf32>
    %393 = tpu.matmul %392, %391, %cst_188 {dimension_numbers = #tpu.dot_dimension_numbers<[1], [0], [0], [1], [0, 0, 1, 1], [], []>} : vector<4x32xbf16>, vector<32x96xbf16>, vector<4x96xf32> -> vector<4x96xf32>
    %c0_189 = arith.constant 0 : index
    %c0_190 = arith.constant 0 : index
    %394 = vector.load %arg31[%c0_189, %c0_190] : memref<1x96xf32, #tpu.memory_space<vmem>>, vector<1x96xf32>
    %395 = vector.broadcast %394 : vector<1x96xf32> to vector<4x96xf32>
    %396 = arith.addf %393, %395 : vector<4x96xf32>
    %397 = vector.extract_strided_slice %356 {offsets = [4, 0], sizes = [4, 96], strides = [1, 1]} : vector<12x96xf32> to vector<4x96xf32>
    %398 = vector.extract_strided_slice %397 {offsets = [0, 0], sizes = [4, 32], strides = [1, 1]} : vector<4x96xf32> to vector<4x32xf32>
    %399 = vector.extract_strided_slice %396 {offsets = [0, 0], sizes = [4, 32], strides = [1, 1]} : vector<4x96xf32> to vector<4x32xf32>
    %400 = arith.addf %398, %399 : vector<4x32xf32>
    %401 = arith.negf %400 : vector<4x32xf32>
    %402 = math.exp %401 : vector<4x32xf32>
    %cst_191 = arith.constant 1.000000e+00 : f32
    %403 = vector.broadcast %cst_191 : f32 to vector<4x32xf32>
    %404 = arith.addf %403, %402 : vector<4x32xf32>
    %405 = arith.divf %403, %404 : vector<4x32xf32>
    %406 = vector.extract_strided_slice %397 {offsets = [0, 32], sizes = [4, 32], strides = [1, 1]} : vector<4x96xf32> to vector<4x32xf32>
    %407 = vector.extract_strided_slice %396 {offsets = [0, 32], sizes = [4, 32], strides = [1, 1]} : vector<4x96xf32> to vector<4x32xf32>
    %408 = arith.addf %406, %407 : vector<4x32xf32>
    %409 = arith.negf %408 : vector<4x32xf32>
    %410 = math.exp %409 : vector<4x32xf32>
    %cst_192 = arith.constant 1.000000e+00 : f32
    %411 = vector.broadcast %cst_192 : f32 to vector<4x32xf32>
    %412 = arith.addf %411, %410 : vector<4x32xf32>
    %413 = arith.divf %411, %412 : vector<4x32xf32>
    %414 = vector.extract_strided_slice %397 {offsets = [0, 64], sizes = [4, 32], strides = [1, 1]} : vector<4x96xf32> to vector<4x32xf32>
    %415 = vector.extract_strided_slice %396 {offsets = [0, 64], sizes = [4, 32], strides = [1, 1]} : vector<4x96xf32> to vector<4x32xf32>
    %416 = arith.mulf %405, %415 : vector<4x32xf32>
    %417 = arith.addf %414, %416 : vector<4x32xf32>
    %418 = math.tanh %417 : vector<4x32xf32>
    %cst_193 = arith.constant 1.000000e+00 : f32
    %419 = vector.broadcast %cst_193 : f32 to vector<4x32xf32>
    %420 = arith.subf %419, %413 : vector<4x32xf32>
    %421 = arith.mulf %420, %418 : vector<4x32xf32>
    %422 = arith.mulf %413, %389 : vector<4x32xf32>
    %423 = arith.addf %421, %422 : vector<4x32xf32>
    %c4 = arith.constant 4 : index
    %c0_194 = arith.constant 0 : index
    %424 = vector.load %arg36[%c4, %c0_194] : memref<12x32xf32, #tpu.memory_space<vmem>>, vector<4x32xf32>
    tpu.vector_store %arg36[%c4, %c0_194], %423 {strides = array<i32>} : memref<12x32xf32, #tpu.memory_space<vmem>>, vector<4x32xf32>,
    %c0_195 = arith.constant 0 : index
    %c0_196 = arith.constant 0 : index
    %425 = vector.load %arg30[%c0_195, %c0_196] : memref<32x96xbf16, #tpu.memory_space<vmem>>, vector<32x96xbf16>
    %426 = arith.truncf %423 : vector<4x32xf32> to vector<4x32xbf16>
    %cst_197 = arith.constant dense<0.000000e+00> : vector<4x96xf32>
    %427 = tpu.matmul %426, %425, %cst_197 {dimension_numbers = #tpu.dot_dimension_numbers<[1], [0], [0], [1], [0, 0, 1, 1], [], []>} : vector<4x32xbf16>, vector<32x96xbf16>, vector<4x96xf32> -> vector<4x96xf32>
    %c0_198 = arith.constant 0 : index
    %c0_199 = arith.constant 0 : index
    %428 = vector.load %arg31[%c0_198, %c0_199] : memref<1x96xf32, #tpu.memory_space<vmem>>, vector<1x96xf32>
    %429 = vector.broadcast %428 : vector<1x96xf32> to vector<4x96xf32>
    %430 = arith.addf %427, %429 : vector<4x96xf32>
    %431 = vector.extract_strided_slice %356 {offsets = [8, 0], sizes = [4, 96], strides = [1, 1]} : vector<12x96xf32> to vector<4x96xf32>
    %432 = vector.extract_strided_slice %431 {offsets = [0, 0], sizes = [4, 32], strides = [1, 1]} : vector<4x96xf32> to vector<4x32xf32>
    %433 = vector.extract_strided_slice %430 {offsets = [0, 0], sizes = [4, 32], strides = [1, 1]} : vector<4x96xf32> to vector<4x32xf32>
    %434 = arith.addf %432, %433 : vector<4x32xf32>
    %435 = arith.negf %434 : vector<4x32xf32>
    %436 = math.exp %435 : vector<4x32xf32>
    %cst_200 = arith.constant 1.000000e+00 : f32
    %437 = vector.broadcast %cst_200 : f32 to vector<4x32xf32>
    %438 = arith.addf %437, %436 : vector<4x32xf32>
    %439 = arith.divf %437, %438 : vector<4x32xf32>
    %440 = vector.extract_strided_slice %431 {offsets = [0, 32], sizes = [4, 32], strides = [1, 1]} : vector<4x96xf32> to vector<4x32xf32>
    %441 = vector.extract_strided_slice %430 {offsets = [0, 32], sizes = [4, 32], strides = [1, 1]} : vector<4x96xf32> to vector<4x32xf32>
    %442 = arith.addf %440, %441 : vector<4x32xf32>
    %443 = arith.negf %442 : vector<4x32xf32>
    %444 = math.exp %443 : vector<4x32xf32>
    %cst_201 = arith.constant 1.000000e+00 : f32
    %445 = vector.broadcast %cst_201 : f32 to vector<4x32xf32>
    %446 = arith.addf %445, %444 : vector<4x32xf32>
    %447 = arith.divf %445, %446 : vector<4x32xf32>
    %448 = vector.extract_strided_slice %431 {offsets = [0, 64], sizes = [4, 32], strides = [1, 1]} : vector<4x96xf32> to vector<4x32xf32>
    %449 = vector.extract_strided_slice %430 {offsets = [0, 64], sizes = [4, 32], strides = [1, 1]} : vector<4x96xf32> to vector<4x32xf32>
    %450 = arith.mulf %439, %449 : vector<4x32xf32>
    %451 = arith.addf %448, %450 : vector<4x32xf32>
    %452 = math.tanh %451 : vector<4x32xf32>
    %cst_202 = arith.constant 1.000000e+00 : f32
    %453 = vector.broadcast %cst_202 : f32 to vector<4x32xf32>
    %454 = arith.subf %453, %447 : vector<4x32xf32>
    %455 = arith.mulf %454, %452 : vector<4x32xf32>
    %456 = arith.mulf %447, %423 : vector<4x32xf32>
    %457 = arith.addf %455, %456 : vector<4x32xf32>
    %c8 = arith.constant 8 : index
    %c0_203 = arith.constant 0 : index
    %458 = vector.load %arg36[%c8, %c0_203] : memref<12x32xf32, #tpu.memory_space<vmem>>, vector<4x32xf32>
    tpu.vector_store %arg36[%c8, %c0_203], %457 {strides = array<i32>} : memref<12x32xf32, #tpu.memory_space<vmem>>, vector<4x32xf32>,
    %c0_204 = arith.constant 0 : index
    %c0_205 = arith.constant 0 : index
    %459 = vector.load %arg36[%c0_204, %c0_205] : memref<12x32xf32, #tpu.memory_space<vmem>>, vector<12x32xf32>
    %c0_206 = arith.constant 0 : index
    %c0_207 = arith.constant 0 : index
    %460 = vector.load %arg3[%c0_206, %c0_207] : memref<12x1xf32, #tpu.memory_space<vmem>>, vector<12x1xf32>
    %461 = vector.broadcast %460 : vector<12x1xf32> to vector<12x32xf32>
    %462 = arith.mulf %459, %461 : vector<12x32xf32>
    %c0_208 = arith.constant 0 : index
    %c0_209 = arith.constant 0 : index
    %463 = vector.load %arg32[%c0_208, %c0_209] : memref<32x128xbf16, #tpu.memory_space<vmem>>, vector<32x128xbf16>
    %464 = arith.truncf %462 : vector<12x32xf32> to vector<12x32xbf16>
    %cst_210 = arith.constant dense<0.000000e+00> : vector<12x128xf32>
    %465 = tpu.matmul %464, %463, %cst_210 {dimension_numbers = #tpu.dot_dimension_numbers<[1], [0], [0], [1], [0, 0, 1, 1], [], []>} : vector<12x32xbf16>, vector<32x128xbf16>, vector<12x128xf32> -> vector<12x128xf32>
    %c0_211 = arith.constant 0 : index
    %c0_212 = arith.constant 0 : index
    %466 = vector.load %arg33[%c0_211, %c0_212] : memref<1x128xf32, #tpu.memory_space<vmem>>, vector<1x128xf32>
    %467 = vector.broadcast %466 : vector<1x128xf32> to vector<12x128xf32>
    %468 = arith.addf %465, %467 : vector<12x128xf32>
    %c0_213 = arith.constant 0 : index
    %c0_214 = arith.constant 0 : index
    %469 = vector.load %arg35[%c0_213, %c0_214] : memref<12x128xf32, #tpu.memory_space<vmem>>, vector<12x128xf32>
    tpu.vector_store %arg35[%c0_213, %c0_214], %468 {strides = array<i32>} : memref<12x128xf32, #tpu.memory_space<vmem>>, vector<12x128xf32>,
    return
  }
}

</mosaic_0001>

<llo_original>
// kernel: device_forward.1
$region0: #{device_forward.1}
  #allocation0 [shape = 'u32[]', space=smem, size = 0x4, offset = 0x4, fixed_abs, tag = 'smem constant byte address 0x4 - core index']
  #allocation1 [shape = 'u32[144,128]{1,0:T(1,128)}', space=vmem, size = 0x12000, scoped, tag = 'internal scratch']
  #allocation2 [shape = 'f32[12,32]{1,0:T(8,128)}', space=vmem, size = 0x2000, scoped, tag = 'scratch operand']
  %s0 = inlined_call_operand.smem [shape: u32[36], index: -1, kind: input, shape index: {}]
  %s1 = sld [smem:[%s0]]
  %s2 = scalar_lea.smem %s0, 1
  %s3 = sld [smem:[%s2]]
  %s4 = scalar_lea.smem %s0, 2
  %s5 = sld [smem:[%s4]]
  %s6 = scalar_lea.smem %s0, 3
  %s7 = sld [smem:[%s6]]
  %s8 = scalar_lea.smem %s0, 4
  %s9 = sld [smem:[%s8]]
  %s10 = scalar_lea.smem %s0, 5
  %s11 = sld [smem:[%s10]]
  %s12 = scalar_lea.smem %s0, 6
  %s13 = sld [smem:[%s12]]
  %s14 = scalar_lea.smem %s0, 7
  %s15 = sld [smem:[%s14]]
  %s16 = scalar_lea.smem %s0, 8
  %s17 = sld [smem:[%s16]]
  %s18 = scalar_lea.smem %s0, 9
  %s19 = sld [smem:[%s18]]
  %s20 = scalar_lea.smem %s0, 10
  %s21 = sld [smem:[%s20]]
  %s22 = scalar_lea.smem %s0, 11
  %s23 = sld [smem:[%s22]]
  %s24 = scalar_lea.smem %s0, 12
  %s25 = sld [smem:[%s24]]
  %s26 = scalar_lea.smem %s0, 13
  %s27 = sld [smem:[%s26]]
  %s28 = scalar_lea.smem %s0, 14
  %s29 = sld [smem:[%s28]]
  %s30 = scalar_lea.smem %s0, 15
  %s31 = sld [smem:[%s30]]
  %s32 = scalar_lea.smem %s0, 16
  %s33 = sld [smem:[%s32]]
  %s34 = scalar_lea.smem %s0, 17
  %s35 = sld [smem:[%s34]]
  %s36 = scalar_lea.smem %s0, 18
  %s37 = sld [smem:[%s36]]
  %s38 = scalar_lea.smem %s0, 19
  %s39 = sld [smem:[%s38]]
  %s40 = scalar_lea.smem %s0, 20
  %s41 = sld [smem:[%s40]]
  %s42 = scalar_lea.smem %s0, 21
  %s43 = sld [smem:[%s42]]
  %s44 = scalar_lea.smem %s0, 22
  %s45 = sld [smem:[%s44]]
  %s46 = scalar_lea.smem %s0, 23
  %s47 = sld [smem:[%s46]]
  %s48 = scalar_lea.smem %s0, 24
  %s49 = sld [smem:[%s48]]
  %s50 = scalar_lea.smem %s0, 25
  %s51 = sld [smem:[%s50]]
  %s52 = scalar_lea.smem %s0, 26
  %s53 = sld [smem:[%s52]]
  %s54 = scalar_lea.smem %s0, 27
  %s55 = sld [smem:[%s54]]
  %s56 = scalar_lea.smem %s0, 28
  %s57 = sld [smem:[%s56]]
  %s58 = scalar_lea.smem %s0, 29
  %s59 = sld [smem:[%s58]]
  %s60 = scalar_lea.smem %s0, 30
  %s61 = sld [smem:[%s60]]
  %s62 = scalar_lea.smem %s0, 31
  %s63 = sld [smem:[%s62]]
  %s64 = scalar_lea.smem %s0, 32
  %s65 = sld [smem:[%s64]]
  %s66 = scalar_lea.smem %s0, 33
  %s67 = sld [smem:[%s66]]
  %s68 = scalar_lea.smem %s0, 34
  %s69 = sld [smem:[%s68]]
  %s70 = scalar_lea.smem %s0, 35
  %s71 = sld [smem:[%s70]]
  %72 = xla_tuple %s69, %s71
  %s73 = sld [smem:[#allocation0]]
  $region230: #{device_forward.1} parent=0
    _
  %s75 = ssub.s32 1, %s73
  %s76 = scalar_select 0, %s75, %s73
  $region1: #{device_forward.1} parent=0
    #allocation3 [shape = 'u8[4096]{0}', space=vmem, size = 0x1000, scoped, tag = 'input window, operand 0, single buffered']
    #allocation4 [shape = 's32[1]{0}', space=sflag, size = 0x4, scoped, tag = 'scoped memory for device_forward.1']
    #allocation5 [shape = 's32[1]{0}', space=sflag, size = 0x4, scoped, tag = 'scoped memory for device_forward.1']
    #allocation6 [shape = 'u8[8192]{0}', space=vmem, size = 0x2000, scoped, tag = 'input window, operand 1, single buffered']
    #allocation7 [shape = 's32[1]{0}', space=sflag, size = 0x4, scoped, tag = 'scoped memory for device_forward.1']
    #allocation8 [shape = 'u8[1024]{0}', space=vmem, size = 0x400, scoped, tag = 'input window, operand 7, single buffered']
    #allocation9 [shape = 'u8[1024]{0}', space=vmem, size = 0x400, scoped, tag = 'input window, operand 10, single buffered']
    #allocation10 [shape = 's32[1]{0}', space=sflag, size = 0x4, scoped, tag = 'scoped memory for device_forward.1']
    #allocation11 [shape = 'u8[1024]{0}', space=vmem, size = 0x400, scoped, tag = 'input window, operand 11, single buffered']
    #allocation12 [shape = 'u8[1024]{0}', space=vmem, size = 0x400, scoped, tag = 'input window, operand 13, single buffered']
    #allocation13 [shape = 's32[1]{0}', space=sflag, size = 0x4, scoped, tag = 'scoped memory for device_forward.1']
    #allocation14 [shape = 'u8[1024]{0}', space=vmem, size = 0x400, scoped, tag = 'input window, operand 15, single buffered']
    #allocation15 [shape = 'u8[1024]{0}', space=vmem, size = 0x400, scoped, tag = 'input window, operand 16, single buffered']
    #allocation16 [shape = 's32[1]{0}', space=sflag, size = 0x4, scoped, tag = 'scoped memory for device_forward.1']
    #allocation17 [shape = 'u8[1024]{0}', space=vmem, size = 0x400, scoped, tag = 'input window, operand 17, single buffered']
    #allocation18 [shape = 'u8[512]{0}', space=vmem, size = 0x400, scoped, tag = 'input window, operand 21, single buffered']
    #allocation19 [shape = 's32[1]{0}', space=sflag, size = 0x4, scoped, tag = 'scoped memory for device_forward.1']
    #allocation20 [shape = 'u8[4096]{0}', space=vmem, size = 0x1000, scoped, tag = 'input window, operand 22, single buffered']
    #allocation21 [shape = 'u8[512]{0}', space=vmem, size = 0x400, scoped, tag = 'input window, operand 23, single buffered']
    #allocation22 [shape = 's32[1]{0}', space=sflag, size = 0x4, scoped, tag = 'scoped memory for device_forward.1']
    #allocation23 [shape = 'u8[512]{0}', space=vmem, size = 0x400, scoped, tag = 'input window, operand 25, single buffered']
    #allocation24 [shape = 'u8[8192]{0}', space=vmem, size = 0x2000, scoped, tag = 'input window, operand 26, single buffered']
    #allocation25 [shape = 's32[1]{0}', space=sflag, size = 0x4, scoped, tag = 'scoped memory for device_forward.1']
    #allocation26 [shape = 'u8[512]{0}', space=vmem, size = 0x400, scoped, tag = 'input window, operand 27, single buffered']
    #allocation27 [shape = 'u8[8192]{0}', space=vmem, size = 0x2000, scoped, tag = 'input window, operand 28, single buffered']
    #allocation28 [shape = 's32[1]{0}', space=sflag, size = 0x4, scoped, tag = 'scoped memory for device_forward.1']
    #allocation29 [shape = 'u8[8192]{0}', space=vmem, size = 0x2000, scoped, tag = 'input window, operand 30, single buffered']
    #allocation30 [shape = 'u8[8192]{0}', space=vmem, size = 0x2000, scoped, tag = 'input window, operand 32, single buffered']
    #allocation31 [shape = 's32[1]{0}', space=sflag, size = 0x4, scoped, tag = 'scoped memory for device_forward.1']
    #allocation32 [shape = 'u8[512]{0}', space=vmem, size = 0x400, scoped, tag = 'input window, operand 33, single buffered']
    #allocation33 [shape = 'u8[2048]{0}', space=vmem, size = 0x800, scoped, tag = 'output window, operand 0, single buffered']
    %77 = vsyncpa [#allocation4], 0
    %78 = vsyncpa [#allocation7], 0
    %79 = vsyncpa [#allocation10], 0
    %80 = vsyncpa [#allocation13], 0
    %81 = vsyncpa [#allocation16], 0
    %82 = vsyncpa [#allocation19], 0
    %83 = vsyncpa [#allocation22], 0
    %84 = vsyncpa [#allocation25], 0
    %85 = vsyncpa [#allocation28], 0
    %86 = vsyncpa [#allocation31], 0
    %87 = vsyncpa [#allocation5], 0
    // Predicated region
    $region2: #{device_forward.1} parent=1 // pred_check
      _
    $region3: #{device_forward.1} parent=1 // pred_check_branch
      %89 = sbr.rel (0) target = $region5
    $region4: #{device_forward.1} parent=1 // pred_region
      %s91 = ssub.s32 128, 128
      %92 = vsyncadd [#allocation4], %s91
      %s93 = sshll.u32 [#allocation3], 4
      %s94 = int_to_ptr.vmem [resolvable:$true] %s93
      %99 = dma.hbm_to_vmem [thread:$0]  %s1, 128, %s94, [#allocation4], 64, 64, 4
    $region5: #{device_forward.1} parent=1 // pred_fallthru
      _
    // Predicated region
    $region6: #{device_forward.1} parent=1 // pred_check
      _
    $region7: #{device_forward.1} parent=1 // pred_check_branch
      %101 = sbr.rel (0) target = $region9
    $region8: #{device_forward.1} parent=1 // pred_region
      %s103 = ssub.s32 256, 256
      %104 = vsyncadd [#allocation7], %s103
      %s105 = sshll.u32 [#allocation6], 4
      %s106 = int_to_ptr.vmem [resolvable:$true] %s105
      %111 = dma.hbm_to_vmem [thread:$0]  %s3, 256, %s106, [#allocation7], 128, 128, 8
    $region9: #{device_forward.1} parent=1 // pred_fallthru
      _
    // Predicated region
    $region10: #{device_forward.1} parent=1 // pred_check
      _
    $region11: #{device_forward.1} parent=1 // pred_check_branch
      %113 = sbr.rel (0) target = $region13
    $region12: #{device_forward.1} parent=1 // pred_region
      _
    $region13: #{device_forward.1} parent=1 // pred_fallthru
      _
    // Predicated region
    $region14: #{device_forward.1} parent=1 // pred_check
      _
    $region15: #{device_forward.1} parent=1 // pred_check_branch
      %115 = sbr.rel (0) target = $region17
    $region16: #{device_forward.1} parent=1 // pred_region
      _
    $region17: #{device_forward.1} parent=1 // pred_fallthru
      _
    // Predicated region
    $region18: #{device_forward.1} parent=1 // pred_check
      _
    $region19: #{device_forward.1} parent=1 // pred_check_branch
      %117 = sbr.rel (0) target = $region21
    $region20: #{device_forward.1} parent=1 // pred_region
      _
    $region21: #{device_forward.1} parent=1 // pred_fallthru
      _
    // Predicated region
    $region22: #{device_forward.1} parent=1 // pred_check
      _
    $region23: #{device_forward.1} parent=1 // pred_check_branch
      %119 = sbr.rel (0) target = $region25
    $region24: #{device_forward.1} parent=1 // pred_region
      _
    $region25: #{device_forward.1} parent=1 // pred_fallthru
      _
    // Predicated region
    $region26: #{device_forward.1} parent=1 // pred_check
      _
    $region27: #{device_forward.1} parent=1 // pred_check_branch
      %121 = sbr.rel (0) target = $region29
    $region28: #{device_forward.1} parent=1 // pred_region
      _
    $region29: #{device_forward.1} parent=1 // pred_fallthru
      _
    // Predicated region
    $region30: #{device_forward.1} parent=1 // pred_check
      _
    $region31: #{device_forward.1} parent=1 // pred_check_branch
      %123 = sbr.rel (0) target = $region33
    $region32: #{device_forward.1} parent=1 // pred_region
      %s125 = ssub.s32 32, 32
      %126 = vsyncadd [#allocation7], %s125
      %s127 = sshll.u32 [#allocation8], 4
      %s128 = int_to_ptr.vmem [resolvable:$true] %s127
      %133 = dma.hbm_to_vmem [thread:$0]  %s15, 32, %s128, [#allocation7], 16, 16, 1
    $region33: #{device_forward.1} parent=1 // pred_fallthru
      _
    // Predicated region
    $region34: #{device_forward.1} parent=1 // pred_check
      _
    $region35: #{device_forward.1} parent=1 // pred_check_branch
      %135 = sbr.rel (0) target = $region37
    $region36: #{device_forward.1} parent=1 // pred_region
      _
    $region37: #{device_forward.1} parent=1 // pred_fallthru
      _
    // Predicated region
    $region38: #{device_forward.1} parent=1 // pred_check
      _
    $region39: #{device_forward.1} parent=1 // pred_check_branch
      %137 = sbr.rel (0) target = $region41
    $region40: #{device_forward.1} parent=1 // pred_region
      _
    $region41: #{device_forward.1} parent=1 // pred_fallthru
      _
    // Predicated region
    $region42: #{device_forward.1} parent=1 // pred_check
      _
    $region43: #{device_forward.1} parent=1 // pred_check_branch
      %139 = sbr.rel (0) target = $region45
    $region44: #{device_forward.1} parent=1 // pred_region
      %s141 = ssub.s32 32, 32
      %142 = vsyncadd [#allocation10], %s141
      %s143 = sshll.u32 [#allocation9], 4
      %s144 = int_to_ptr.vmem [resolvable:$true] %s143
      %149 = dma.hbm_to_vmem [thread:$0]  %s21, 32, %s144, [#allocation10], 16, 16, 1
    $region45: #{device_forward.1} parent=1 // pred_fallthru
      _
    // Predicated region
    $region46: #{device_forward.1} parent=1 // pred_check
      _
    $region47: #{device_forward.1} parent=1 // pred_check_branch
      %151 = sbr.rel (0) target = $region49
    $region48: #{device_forward.1} parent=1 // pred_region
      %s153 = ssub.s32 32, 32
      %154 = vsyncadd [#allocation10], %s153
      %s155 = sshll.u32 [#allocation11], 4
      %s156 = int_to_ptr.vmem [resolvable:$true] %s155
      %161 = dma.hbm_to_vmem [thread:$0]  %s23, 32, %s156, [#allocation10], 16, 16, 1
    $region49: #{device_forward.1} parent=1 // pred_fallthru
      _
    // Predicated region
    $region50: #{device_forward.1} parent=1 // pred_check
      _
    $region51: #{device_forward.1} parent=1 // pred_check_branch
      %163 = sbr.rel (0) target = $region53
    $region52: #{device_forward.1} parent=1 // pred_region
      _
    $region53: #{device_forward.1} parent=1 // pred_fallthru
      _
    // Predicated region
    $region54: #{device_forward.1} parent=1 // pred_check
      _
    $region55: #{device_forward.1} parent=1 // pred_check_branch
      %165 = sbr.rel (0) target = $region57
    $region56: #{device_forward.1} parent=1 // pred_region
      %s167 = ssub.s32 32, 32
      %168 = vsyncadd [#allocation13], %s167
      %s169 = sshll.u32 [#allocation12], 4
      %s170 = int_to_ptr.vmem [resolvable:$true] %s169
      %175 = dma.hbm_to_vmem [thread:$0]  %s27, 32, %s170, [#allocation13], 16, 16, 1
    $region57: #{device_forward.1} parent=1 // pred_fallthru
      _
    // Predicated region
    $region58: #{device_forward.1} parent=1 // pred_check
      _
    $region59: #{device_forward.1} parent=1 // pred_check_branch
      %177 = sbr.rel (0) target = $region61
    $region60: #{device_forward.1} parent=1 // pred_region
      _
    $region61: #{device_forward.1} parent=1 // pred_fallthru
      _
    // Predicated region
    $region62: #{device_forward.1} parent=1 // pred_check
      _
    $region63: #{device_forward.1} parent=1 // pred_check_branch
      %179 = sbr.rel (0) target = $region65
    $region64: #{device_forward.1} parent=1 // pred_region
      %s181 = ssub.s32 32, 32
      %182 = vsyncadd [#allocation13], %s181
      %s183 = sshll.u32 [#allocation14], 4
      %s184 = int_to_ptr.vmem [resolvable:$true] %s183
      %189 = dma.hbm_to_vmem [thread:$0]  %s31, 32, %s184, [#allocation13], 16, 16, 1
    $region65: #{device_forward.1} parent=1 // pred_fallthru
      _
    // Predicated region
    $region66: #{device_forward.1} parent=1 // pred_check
      _
    $region67: #{device_forward.1} parent=1 // pred_check_branch
      %191 = sbr.rel (0) target = $region69
    $region68: #{device_forward.1} parent=1 // pred_region
      %s193 = ssub.s32 32, 32
      %194 = vsyncadd [#allocation16], %s193
      %s195 = sshll.u32 [#allocation15], 4
      %s196 = int_to_ptr.vmem [resolvable:$true] %s195
      %201 = dma.hbm_to_vmem [thread:$0]  %s33, 32, %s196, [#allocation16], 16, 16, 1
    $region69: #{device_forward.1} parent=1 // pred_fallthru
      _
    // Predicated region
    $region70: #{device_forward.1} parent=1 // pred_check
      _
    $region71: #{device_forward.1} parent=1 // pred_check_branch
      %203 = sbr.rel (0) target = $region73
    $region72: #{device_forward.1} parent=1 // pred_region
      %s205 = ssub.s32 32, 32
      %206 = vsyncadd [#allocation16], %s205
      %s207 = sshll.u32 [#allocation17], 4
      %s208 = int_to_ptr.vmem [resolvable:$true] %s207
      %213 = dma.hbm_to_vmem [thread:$0]  %s35, 32, %s208, [#allocation16], 16, 16, 1
    $region73: #{device_forward.1} parent=1 // pred_fallthru
      _
    // Predicated region
    $region74: #{device_forward.1} parent=1 // pred_check
      _
    $region75: #{device_forward.1} parent=1 // pred_check_branch
      %215 = sbr.rel (0) target = $region77
    $region76: #{device_forward.1} parent=1 // pred_region
      _
    $region77: #{device_forward.1} parent=1 // pred_fallthru
      _
    // Predicated region
    $region78: #{device_forward.1} parent=1 // pred_check
      _
    $region79: #{device_forward.1} parent=1 // pred_check_branch
      %217 = sbr.rel (0) target = $region81
    $region80: #{device_forward.1} parent=1 // pred_region
      _
    $region81: #{device_forward.1} parent=1 // pred_fallthru
      _
    // Predicated region
    $region82: #{device_forward.1} parent=1 // pred_check
      _
    $region83: #{device_forward.1} parent=1 // pred_check_branch
      %219 = sbr.rel (0) target = $region85
    $region84: #{device_forward.1} parent=1 // pred_region
      _
    $region85: #{device_forward.1} parent=1 // pred_fallthru
      _
    // Predicated region
    $region86: #{device_forward.1} parent=1 // pred_check
      _
    $region87: #{device_forward.1} parent=1 // pred_check_branch
      %221 = sbr.rel (0) target = $region89
    $region88: #{device_forward.1} parent=1 // pred_region
      %s223 = ssub.s32 16, 16
      %224 = vsyncadd [#allocation19], %s223
      %s226 = sshll.u32 [#allocation18], 4
      %s227 = int_to_ptr.vmem [resolvable:$true] %s226
      %229 = dma.hbm_to_vmem [thread:$0]  %s43, 16, %s227, [#allocation19]
    $region89: #{device_forward.1} parent=1 // pred_fallthru
      _
    // Predicated region
    $region90: #{device_forward.1} parent=1 // pred_check
      _
    $region91: #{device_forward.1} parent=1 // pred_check_branch
      %231 = sbr.rel (0) target = $region93
    $region92: #{device_forward.1} parent=1 // pred_region
      %s233 = ssub.s32 128, 128
      %234 = vsyncadd [#allocation19], %s233
      %s235 = sshll.u32 [#allocation20], 4
      %s236 = int_to_ptr.vmem [resolvable:$true] %s235
      %241 = dma.hbm_to_vmem [thread:$0]  %s45, 128, %s236, [#allocation19], 64, 64, 4
    $region93: #{device_forward.1} parent=1 // pred_fallthru
      _
    // Predicated region
    $region94: #{device_forward.1} parent=1 // pred_check
      _
    $region95: #{device_forward.1} parent=1 // pred_check_branch
      %243 = sbr.rel (0) target = $region97
    $region96: #{device_forward.1} parent=1 // pred_region
      %s245 = ssub.s32 16, 16
      %246 = vsyncadd [#allocation22], %s245
      %s248 = sshll.u32 [#allocation21], 4
      %s249 = int_to_ptr.vmem [resolvable:$true] %s248
      %251 = dma.hbm_to_vmem [thread:$0]  %s47, 16, %s249, [#allocation22]
    $region97: #{device_forward.1} parent=1 // pred_fallthru
      _
    // Predicated region
    $region98: #{device_forward.1} parent=1 // pred_check
      _
    $region99: #{device_forward.1} parent=1 // pred_check_branch
      %253 = sbr.rel (0) target = $region101
    $region100: #{device_forward.1} parent=1 // pred_region
      _
    $region101: #{device_forward.1} parent=1 // pred_fallthru
      _
    // Predicated region
    $region102: #{device_forward.1} parent=1 // pred_check
      _
    $region103: #{device_forward.1} parent=1 // pred_check_branch
      %255 = sbr.rel (0) target = $region105
    $region104: #{device_forward.1} parent=1 // pred_region
      %s257 = ssub.s32 16, 16
      %258 = vsyncadd [#allocation22], %s257
      %s260 = sshll.u32 [#allocation23], 4
      %s261 = int_to_ptr.vmem [resolvable:$true] %s260
      %263 = dma.hbm_to_vmem [thread:$0]  %s51, 16, %s261, [#allocation22]
    $region105: #{device_forward.1} parent=1 // pred_fallthru
      _
    // Predicated region
    $region106: #{device_forward.1} parent=1 // pred_check
      _
    $region107: #{device_forward.1} parent=1 // pred_check_branch
      %265 = sbr.rel (0) target = $region109
    $region108: #{device_forward.1} parent=1 // pred_region
      %s267 = ssub.s32 256, 256
      %268 = vsyncadd [#allocation25], %s267
      %s269 = sshll.u32 [#allocation24], 4
      %s270 = int_to_ptr.vmem [resolvable:$true] %s269
      %275 = dma.hbm_to_vmem [thread:$0]  %s53, 256, %s270, [#allocation25], 64, 64, 4
    $region109: #{device_forward.1} parent=1 // pred_fallthru
      _
    // Predicated region
    $region110: #{device_forward.1} parent=1 // pred_check
      _
    $region111: #{device_forward.1} parent=1 // pred_check_branch
      %277 = sbr.rel (0) target = $region113
    $region112: #{device_forward.1} parent=1 // pred_region
      %s279 = ssub.s32 16, 16
      %280 = vsyncadd [#allocation25], %s279
      %s282 = sshll.u32 [#allocation26], 4
      %s283 = int_to_ptr.vmem [resolvable:$true] %s282
      %285 = dma.hbm_to_vmem [thread:$0]  %s55, 16, %s283, [#allocation25]
    $region113: #{device_forward.1} parent=1 // pred_fallthru
      _
    // Predicated region
    $region114: #{device_forward.1} parent=1 // pred_check
      _
    $region115: #{device_forward.1} parent=1 // pred_check_branch
      %287 = sbr.rel (0) target = $region117
    $region116: #{device_forward.1} parent=1 // pred_region
      %s289 = ssub.s32 256, 256
      %290 = vsyncadd [#allocation28], %s289
      %s291 = sshll.u32 [#allocation27], 4
      %s292 = int_to_ptr.vmem [resolvable:$true] %s291
      %297 = dma.hbm_to_vmem [thread:$0]  %s57, 256, %s292, [#allocation28], 64, 64, 4
    $region117: #{device_forward.1} parent=1 // pred_fallthru
      _
    // Predicated region
    $region118: #{device_forward.1} parent=1 // pred_check
      _
    $region119: #{device_forward.1} parent=1 // pred_check_branch
      %299 = sbr.rel (0) target = $region121
    $region120: #{device_forward.1} parent=1 // pred_region
      _
    $region121: #{device_forward.1} parent=1 // pred_fallthru
      _
    // Predicated region
    $region122: #{device_forward.1} parent=1 // pred_check
      _
    $region123: #{device_forward.1} parent=1 // pred_check_branch
      %301 = sbr.rel (0) target = $region125
    $region124: #{device_forward.1} parent=1 // pred_region
      %s303 = ssub.s32 256, 256
      %304 = vsyncadd [#allocation28], %s303
      %s305 = sshll.u32 [#allocation29], 4
      %s306 = int_to_ptr.vmem [resolvable:$true] %s305
      %311 = dma.hbm_to_vmem [thread:$0]  %s61, 256, %s306, [#allocation28], 64, 64, 4
    $region125: #{device_forward.1} parent=1 // pred_fallthru
      _
    // Predicated region
    $region126: #{device_forward.1} parent=1 // pred_check
      _
    $region127: #{device_forward.1} parent=1 // pred_check_branch
      %313 = sbr.rel (0) target = $region129
    $region128: #{device_forward.1} parent=1 // pred_region
      _
    $region129: #{device_forward.1} parent=1 // pred_fallthru
      _
    // Predicated region
    $region130: #{device_forward.1} parent=1 // pred_check
      _
    $region131: #{device_forward.1} parent=1 // pred_check_branch
      %315 = sbr.rel (0) target = $region133
    $region132: #{device_forward.1} parent=1 // pred_region
      %s317 = ssub.s32 256, 256
      %318 = vsyncadd [#allocation31], %s317
      %s319 = sshll.u32 [#allocation30], 4
      %s320 = int_to_ptr.vmem [resolvable:$true] %s319
      %325 = dma.hbm_to_vmem [thread:$0]  %s65, 256, %s320, [#allocation31], 64, 64, 4
    $region133: #{device_forward.1} parent=1 // pred_fallthru
      _
    // Predicated region
    $region134: #{device_forward.1} parent=1 // pred_check
      _
    $region135: #{device_forward.1} parent=1 // pred_check_branch
      %327 = sbr.rel (0) target = $region137
    $region136: #{device_forward.1} parent=1 // pred_region
      %s329 = ssub.s32 16, 16
      %330 = vsyncadd [#allocation31], %s329
      %s332 = sshll.u32 [#allocation32], 4
      %s333 = int_to_ptr.vmem [resolvable:$true] %s332
      %335 = dma.hbm_to_vmem [thread:$0]  %s67, 16, %s333, [#allocation31]
    $region137: #{device_forward.1} parent=1 // pred_fallthru
      _
    // Predicated region
    $region138: #{device_forward.1} parent=1 // pred_check
      _
    $region139: #{device_forward.1} parent=1 // pred_check_branch
      %337 = sbr.rel (0) target = $region141
    $region140: #{device_forward.1} parent=1 // pred_region
      %338 = dma.done [#allocation4], 128
    $region141: #{device_forward.1} parent=1 // pred_fallthru
      _
    // Predicated region
    $region142: #{device_forward.1} parent=1 // pred_check
      _
    $region143: #{device_forward.1} parent=1 // pred_check_branch
      %340 = sbr.rel (0) target = $region145
    $region144: #{device_forward.1} parent=1 // pred_region
      %341 = dma.done [#allocation7], 256
    $region145: #{device_forward.1} parent=1 // pred_fallthru
      _
    // Predicated region
    $region146: #{device_forward.1} parent=1 // pred_check
      _
    $region147: #{device_forward.1} parent=1 // pred_check_branch
      %343 = sbr.rel (0) target = $region149
    $region148: #{device_forward.1} parent=1 // pred_region
      %344 = dma.done [#allocation7], 32
    $region149: #{device_forward.1} parent=1 // pred_fallthru
      _
    // Predicated region
    $region150: #{device_forward.1} parent=1 // pred_check
      _
    $region151: #{device_forward.1} parent=1 // pred_check_branch
      %346 = sbr.rel (0) target = $region153
    $region152: #{device_forward.1} parent=1 // pred_region
      %347 = dma.done [#allocation10], 32
    $region153: #{device_forward.1} parent=1 // pred_fallthru
      _
    // Predicated region
    $region154: #{device_forward.1} parent=1 // pred_check
      _
    $region155: #{device_forward.1} parent=1 // pred_check_branch
      %349 = sbr.rel (0) target = $region157
    $region156: #{device_forward.1} parent=1 // pred_region
      %350 = dma.done [#allocation10], 32
    $region157: #{device_forward.1} parent=1 // pred_fallthru
      _
    // Predicated region
    $region158: #{device_forward.1} parent=1 // pred_check
      _
    $region159: #{device_forward.1} parent=1 // pred_check_branch
      %352 = sbr.rel (0) target = $region161
    $region160: #{device_forward.1} parent=1 // pred_region
      %353 = dma.done [#allocation13], 32
    $region161: #{device_forward.1} parent=1 // pred_fallthru
      _
    // Predicated region
    $region162: #{device_forward.1} parent=1 // pred_check
      _
    $region163: #{device_forward.1} parent=1 // pred_check_branch
      %355 = sbr.rel (0) target = $region165
    $region164: #{device_forward.1} parent=1 // pred_region
      %356 = dma.done [#allocation13], 32
    $region165: #{device_forward.1} parent=1 // pred_fallthru
      _
    // Predicated region
    $region166: #{device_forward.1} parent=1 // pred_check
      _
    $region167: #{device_forward.1} parent=1 // pred_check_branch
      %358 = sbr.rel (0) target = $region169
    $region168: #{device_forward.1} parent=1 // pred_region
      %359 = dma.done [#allocation16], 32
    $region169: #{device_forward.1} parent=1 // pred_fallthru
      _
    // Predicated region
    $region170: #{device_forward.1} parent=1 // pred_check
      _
    $region171: #{device_forward.1} parent=1 // pred_check_branch
      %361 = sbr.rel (0) target = $region173
    $region172: #{device_forward.1} parent=1 // pred_region
      %362 = dma.done [#allocation16], 32
    $region173: #{device_forward.1} parent=1 // pred_fallthru
      _
    // Predicated region
    $region174: #{device_forward.1} parent=1 // pred_check
      _
    $region175: #{device_forward.1} parent=1 // pred_check_branch
      %364 = sbr.rel (0) target = $region177
    $region176: #{device_forward.1} parent=1 // pred_region
      %365 = dma.done [#allocation19], 16
    $region177: #{device_forward.1} parent=1 // pred_fallthru
      _
    // Predicated region
    $region178: #{device_forward.1} parent=1 // pred_check
      _
    $region179: #{device_forward.1} parent=1 // pred_check_branch
      %367 = sbr.rel (0) target = $region181
    $region180: #{device_forward.1} parent=1 // pred_region
      %368 = dma.done [#allocation19], 128
    $region181: #{device_forward.1} parent=1 // pred_fallthru
      _
    // Predicated region
    $region182: #{device_forward.1} parent=1 // pred_check
      _
    $region183: #{device_forward.1} parent=1 // pred_check_branch
      %370 = sbr.rel (0) target = $region185
    $region184: #{device_forward.1} parent=1 // pred_region
      %371 = dma.done [#allocation22], 16
    $region185: #{device_forward.1} parent=1 // pred_fallthru
      _
    // Predicated region
    $region186: #{device_forward.1} parent=1 // pred_check
      _
    $region187: #{device_forward.1} parent=1 // pred_check_branch
      %373 = sbr.rel (0) target = $region189
    $region188: #{device_forward.1} parent=1 // pred_region
      %374 = dma.done [#allocation22], 16
    $region189: #{device_forward.1} parent=1 // pred_fallthru
      _
    // Predicated region
    $region190: #{device_forward.1} parent=1 // pred_check
      _
    $region191: #{device_forward.1} parent=1 // pred_check_branch
      %376 = sbr.rel (0) target = $region193
    $region192: #{device_forward.1} parent=1 // pred_region
      %377 = dma.done [#allocation25], 256
    $region193: #{device_forward.1} parent=1 // pred_fallthru
      _
    // Predicated region
    $region194: #{device_forward.1} parent=1 // pred_check
      _
    $region195: #{device_forward.1} parent=1 // pred_check_branch
      %379 = sbr.rel (0) target = $region197
    $region196: #{device_forward.1} parent=1 // pred_region
      %380 = dma.done [#allocation25], 16
    $region197: #{device_forward.1} parent=1 // pred_fallthru
      _
    // Predicated region
    $region198: #{device_forward.1} parent=1 // pred_check
      _
    $region199: #{device_forward.1} parent=1 // pred_check_branch
      %382 = sbr.rel (0) target = $region201
    $region200: #{device_forward.1} parent=1 // pred_region
      %383 = dma.done [#allocation28], 256
    $region201: #{device_forward.1} parent=1 // pred_fallthru
      _
    // Predicated region
    $region202: #{device_forward.1} parent=1 // pred_check
      _
    $region203: #{device_forward.1} parent=1 // pred_check_branch
      %385 = sbr.rel (0) target = $region205
    $region204: #{device_forward.1} parent=1 // pred_region
      %386 = dma.done [#allocation28], 256
    $region205: #{device_forward.1} parent=1 // pred_fallthru
      _
    // Predicated region
    $region206: #{device_forward.1} parent=1 // pred_check
      _
    $region207: #{device_forward.1} parent=1 // pred_check_branch
      %388 = sbr.rel (0) target = $region209
    $region208: #{device_forward.1} parent=1 // pred_region
      %389 = dma.done [#allocation31], 256
    $region209: #{device_forward.1} parent=1 // pred_fallthru
      _
    // Predicated region
    $region210: #{device_forward.1} parent=1 // pred_check
      _
    $region211: #{device_forward.1} parent=1 // pred_check_branch
      %391 = sbr.rel (0) target = $region213
    $region212: #{device_forward.1} parent=1 // pred_region
      %392 = dma.done [#allocation31], 16
    $region213: #{device_forward.1} parent=1 // pred_fallthru
      _
    %v394 = vld [vmem:[#allocation3] sm:$0xf]
    %v395 = vld [vmem:[#allocation3 + $0x4] sm:$0xf]
    %v396 = vld [vmem:[%s9] sm:$0xf]
    %v397 = vld [vmem:[%s9 + $0x4] sm:$0xf]
    %v398 = vld [vmem:[%s9 + $0x8] sm:$0xf]
    %v399 = vld [vmem:[%s9 + $0xc] sm:$0xf]
    %v400 = vld [vmem:[%s9 + $0x10] sm:$0xf]
    %v401 = vld [vmem:[%s9 + $0x14] sm:$0xf]
    %v402 = vld [vmem:[%s9 + $0x18] sm:$0xf]
    %v403 = vld [vmem:[%s9 + $0x1c] sm:$0xf]
    %v404 = vld [vmem:[%s11] sm:$0x1]
    %v406 = vlaneseq
    %v407 = vshrl.u32 %v406, 7
    %v408 = vsub.s32 0, %v407
    %v409 = vrot.slane %v404, %v408
    %v413 = vunpack.c.l.b16 %v394
    %v414 = vunpack.c.l.b16 %v395
    %v415 = vpack.c.b16 %v414, %v413
    %v424 = vunpack.c.l.b16 %v396
    %v425 = vunpack.c.l.b16 %v397
    %v426 = vunpack.c.l.b16 %v398
    %v427 = vunpack.c.l.b16 %v399
    %v428 = vunpack.c.l.b16 %v400
    %v429 = vunpack.c.l.b16 %v401
    %v430 = vunpack.c.l.b16 %v402
    %v431 = vunpack.c.l.b16 %v403
    %v432 = vpack.c.b16 %v425, %v424
    %v433 = vpack.c.b16 %v427, %v426
    %v434 = vpack.c.b16 %v429, %v428
    %v435 = vpack.c.b16 %v431, %v430
    %vm440 = vcmask 523264
    %v442 = vsel %vm440, %v415, 0
    %444 = vmatprep.subr.bf16.mxu0 0
    %445 = vmatpush1.bf16.msra.mxu0 0
    %446 = vmatprep.subr.bf16.mxu0 0
    %447 = vmatpush1.bf16.msra.mxu0 0
    %448 = vmatprep.subr.bf16.mxu0 0
    %449 = vmatpush1.bf16.msra.mxu0 0
    %450 = vmatprep.subr.bf16.mxu0 0
    %451 = vmatpush1.bf16.msra.mxu0 0
    %452 = vmatprep.subr.bf16.mxu0 0
    %453 = vmatpush1.bf16.msra.mxu0 %v435
    %454 = vmatprep.subr.bf16.mxu0 0
    %455 = vmatpush1.bf16.msra.mxu0 %v434
    %456 = vmatprep.subr.bf16.mxu0 0
    %457 = vmatpush1.bf16.msra.mxu0 %v433
    %458 = vmatprep.subr.bf16.mxu0 0
    %459 = vmatpush1.bf16.msra.mxu0 %v432
    %460 = vmatprep.subr.bf16.mxu0 0
    %461 = vmatpush2.bf16.msra.mxu0 0
    %462 = vmatprep.subr.bf16.mxu0 0
    %463 = vmatpush2.bf16.msra.mxu0 0
    %464 = vmatprep.subr.bf16.mxu0 0
    %465 = vmatpush2.bf16.msra.mxu0 0
    %466 = vmatprep.subr.bf16.mxu0 0
    %467 = vmatpush2.bf16.msra.mxu0 0
    %468 = vmatprep.subr.bf16.mxu0 0
    %469 = vmatpush2.bf16.msra.mxu0 0
    %470 = vmatprep.subr.bf16.mxu0 0
    %471 = vmatpush2.bf16.msra.mxu0 0
    %472 = vmatprep.subr.bf16.mxu0 0
    %473 = vmatpush2.bf16.msra.mxu0 0
    %474 = vmatprep.subr.bf16.mxu0 0
    %475 = vmatpush2.bf16.msra.mxu0 0
    %476 = vmatprep.mubr.bf16.mxu0 0
    %477 = vmatmul.mubr.bf16.gmra.mxu0 %v442
    %v478 = vpop.f32.mrf.mxu0
    %v479 = vadd.f32 %v409, %v478
    %v480 = vpop.f32.mrf.mxu0
    %v481 = vpop.f32.mrf.mxu0
    %v482 = vadd.f32 %v409, %v481
    %v483 = vpop.f32.mrf.mxu0
    %484 = vdwg.mxu0
    %v485 = vmul.f32 %v479, 5.656854
    %v486 = vmul.f32 %v482, 5.656854
    %v487 = vld [vmem:[#allocation6] sm:$0xff]
    %v488 = vld [vmem:[#allocation6 + $0x8] sm:$0xff]
    %v489 = vadd.f32 %v485, %v487
    %v490 = vadd.f32 %v486, %v488
    %v491 = vlaneseq
    %v492 = vshrl.u32 %v491, 7
    %v493 = vadd.s32 %v492, 8
    %v494 = vlaneseq
    %v495 = vand.u32 %v494, 127
    %v496 = vsub.s32 %v492, %v495
    %v497 = vsub.s32 %v493, %v495
    %vm498 = vcmp.eq.s32.totalorder %v496, 0
    %vm499 = vcmp.eq.s32.totalorder %v497, 0
    %vm500 = vcmp.eq.s32.totalorder %v496, 4
    %vm501 = vcmp.eq.s32.totalorder %v497, 4
    %vm502 = vmor %vm498, %vm500
    %vm503 = vmor %vm499, %vm501
    %vm504 = vcmp.eq.s32.totalorder %v496, 8
    %vm505 = vcmp.eq.s32.totalorder %v497, 8
    %vm506 = vmor %vm502, %vm504
    %vm507 = vmor %vm503, %vm505
    %vm508 = vcmp.eq.s32.totalorder %v496, 12
    %vm509 = vcmp.eq.s32.totalorder %v497, 12
    %vm510 = vmor %vm506, %vm508
    %vm511 = vmor %vm507, %vm509
    %v512 = vsel %vm510, 0.0, -1e+30
    %v513 = vsel %vm511, 0.0, -1e+30
    %v514 = vld [vmem:[%s13] sm:$0xf]
    %v515 = vld [vmem:[%s13 + $0x4] sm:$0xf]
    %v516 = vld [vmem:[%s13 + $0x8] sm:$0xf]
    %v517 = vld [vmem:[%s13 + $0xc] sm:$0xf]
    %v518 = vpack.c.bf16 %v490, %v489
    %v519 = vld [vmem:[#allocation8] sm:$0x1]
    %v521 = vlaneseq
    %v522 = vshrl.u32 %v521, 7
    %v523 = vsub.s32 0, %v522
    %v524 = vrot.slane %v519, %v523
    %v530 = vunpack.c.l.b16 %v514
    %v531 = vunpack.c.l.b16 %v515
    %v532 = vunpack.c.l.b16 %v516
    %v533 = vunpack.c.l.b16 %v517
    %v534 = vpack.c.b16 %v531, %v530
    %v535 = vpack.c.b16 %v533, %v532
    %vm538 = vcmask 261120
    %v540 = vsel %vm538, %v518, 0
    %542 = vmatprep.subr.bf16.mxu0 0
    %543 = vmatpush1.bf16.msra.mxu0 0
    %544 = vmatprep.subr.bf16.mxu0 0
    %545 = vmatpush1.bf16.msra.mxu0 0
    %546 = vmatprep.subr.bf16.mxu0 0
    %547 = vmatpush1.bf16.msra.mxu0 0
    %548 = vmatprep.subr.bf16.mxu0 0
    %549 = vmatpush1.bf16.msra.mxu0 0
    %550 = vmatprep.subr.bf16.mxu0 0
    %551 = vmatpush1.bf16.msra.mxu0 0
    %552 = vmatprep.subr.bf16.mxu0 0
    %553 = vmatpush1.bf16.msra.mxu0 0
    %554 = vmatprep.subr.bf16.mxu0 0
    %555 = vmatpush1.bf16.msra.mxu0 %v535
    %556 = vmatprep.subr.bf16.mxu0 0
    %557 = vmatpush1.bf16.msra.mxu0 %v534
    %558 = vmatprep.subr.bf16.mxu0 0
    %559 = vmatpush2.bf16.msra.mxu0 0
    %560 = vmatprep.subr.bf16.mxu0 0
    %561 = vmatpush2.bf16.msra.mxu0 0
    %562 = vmatprep.subr.bf16.mxu0 0
    %563 = vmatpush2.bf16.msra.mxu0 0
    %564 = vmatprep.subr.bf16.mxu0 0
    %565 = vmatpush2.bf16.msra.mxu0 0
    %566 = vmatprep.subr.bf16.mxu0 0
    %567 = vmatpush2.bf16.msra.mxu0 0
    %568 = vmatprep.subr.bf16.mxu0 0
    %569 = vmatpush2.bf16.msra.mxu0 0
    %570 = vmatprep.subr.bf16.mxu0 0
    %571 = vmatpush2.bf16.msra.mxu0 0
    %572 = vmatprep.subr.bf16.mxu0 0
    %573 = vmatpush2.bf16.msra.mxu0 0
    %574 = vmatprep.mubr.bf16.mxu0 0
    %575 = vmatmul.mubr.bf16.gmra.mxu0 %v540
    %v576 = vpop.f32.mrf.mxu0
    %v577 = vadd.f32 %v524, %v576
    %v578 = vpop.f32.mrf.mxu0
    %v579 = vpop.f32.mrf.mxu0
    %v580 = vadd.f32 %v524, %v579
    %v581 = vpop.f32.mrf.mxu0
    %582 = vdwg.mxu0
    %v583 = vpack.c.bf16 %v580, %v577
    %585 = vrot.lane.b32.xlu0 %v583, 96
    %v586 = vpop.permute.xlu0 %585
    %vm587 = vcmask 130048
    %v589 = vsel %vm587, %v583, 0
    %v592 = vsel %vm587, %v586, 0
    %594 = vmatprep.subr.bf16.mxu0 0
    %595 = vmatpush1.bf16.xpose.msra.mxu0 0
    %596 = vmatprep.subr.bf16.mxu0 0
    %597 = vmatpush1.bf16.xpose.msra.mxu0 0
    %598 = vmatprep.subr.bf16.mxu0 0
    %599 = vmatpush1.bf16.xpose.msra.mxu0 0
    %600 = vmatprep.subr.bf16.mxu0 0
    %601 = vmatpush1.bf16.xpose.msra.mxu0 0
    %602 = vmatprep.subr.bf16.mxu0 0
    %603 = vmatpush1.bf16.xpose.msra.mxu0 0
    %604 = vmatprep.subr.bf16.mxu0 0
    %605 = vmatpush1.bf16.xpose.msra.mxu0 0
    %606 = vmatprep.subr.bf16.mxu0 0
    %607 = vmatpush1.bf16.xpose.msra.mxu0 0
    %608 = vmatprep.subr.bf16.mxu0 0
    %609 = vmatpush1.bf16.xpose.msra.mxu0 %v592
    %610 = vmatprep.subr.bf16.mxu0 0
    %611 = vmatpush2.bf16.xpose.msra.mxu0 0
    %612 = vmatprep.subr.bf16.mxu0 0
    %613 = vmatpush2.bf16.xpose.msra.mxu0 0
    %614 = vmatprep.subr.bf16.mxu0 0
    %615 = vmatpush2.bf16.xpose.msra.mxu0 0
    %616 = vmatprep.subr.bf16.mxu0 0
    %617 = vmatpush2.bf16.xpose.msra.mxu0 0
    %618 = vmatprep.subr.bf16.mxu0 0
    %619 = vmatpush2.bf16.xpose.msra.mxu0 0
    %620 = vmatprep.subr.bf16.mxu0 0
    %621 = vmatpush2.bf16.xpose.msra.mxu0 0
    %622 = vmatprep.subr.bf16.mxu0 0
    %623 = vmatpush2.bf16.xpose.msra.mxu0 0
    %624 = vmatprep.subr.bf16.mxu0 0
    %625 = vmatpush2.bf16.xpose.msra.mxu0 0
    %626 = vmatprep.mubr.bf16.mxu0 0
    %627 = vmatmul.mubr.bf16.gmra.mxu0 %v589
    %v628 = vpop.f32.mrf.mxu0
    %v629 = vadd.f32 0.0, %v628
    %v630 = vpop.f32.mrf.mxu0
    %v631 = vpop.f32.mrf.mxu0
    %v632 = vadd.f32 0.0, %v631
    %v633 = vpop.f32.mrf.mxu0
    %634 = vdwg.mxu0
    %v635 = vmul.f32 %v629, 0.25
    %v636 = vmul.f32 %v632, 0.25
    %v637 = vadd.f32 %v635, %v512
    %v638 = vadd.f32 %v636, %v513
    %v639 = vsel %vm587, %v637, -inf
    %640 = vmax.xlane.f32.xlu0 %v639
    %v641 = vpop.xlane.xlu0 %640
    %v642 = vsel %vm587, %v638, -inf
    %643 = vmax.xlane.f32.xlu0 %v642
    %v644 = vpop.xlane.xlu0 %643
    %v645 = vsub.f32 %v637, %v641
    %v646 = vsub.f32 %v638, %v644
    %v647 = vmul.f32 %v645, 1.442695
    %v648 = vpow.pop %v647
    %v649 = vmul.f32 %v646, 1.442695
    %v650 = vpow.pop %v649
    %v651 = vsel %vm587, %v648, 0.0
    %652 = vadd.xlane.f32.xlu0 %v651
    %v653 = vpop.xlane.xlu0 %652
    %v654 = vsel %vm587, %v650, 0.0
    %655 = vadd.xlane.f32.xlu0 %v654
    %v656 = vpop.xlane.xlu0 %655
    %v657 = vrcp.pop %v653
    %v658 = vrcp.pop %v656
    %v659 = vmul.f32 %v648, %v657
    %v660 = vmul.f32 %v650, %v658
    %v661 = vpack.c.bf16 %v660, %v659
    %662 = vrot.lane.b32.xlu0 %v583, 64
    %v663 = vpop.permute.xlu0 %662
    %v666 = vsel %vm587, %v661, 0
    %668 = vmatprep.subr.bf16.mxu0 0
    %669 = vmatpush1.bf16.msra.mxu0 0
    %670 = vmatprep.subr.bf16.mxu0 0
    %671 = vmatpush1.bf16.msra.mxu0 0
    %672 = vmatprep.subr.bf16.mxu0 0
    %673 = vmatpush1.bf16.msra.mxu0 0
    %674 = vmatprep.subr.bf16.mxu0 0
    %675 = vmatpush1.bf16.msra.mxu0 0
    %676 = vmatprep.subr.bf16.mxu0 0
    %677 = vmatpush1.bf16.msra.mxu0 0
    %678 = vmatprep.subr.bf16.mxu0 0
    %679 = vmatpush1.bf16.msra.mxu0 0
    %680 = vmatprep.subr.bf16.mxu0 0
    %681 = vmatpush1.bf16.msra.mxu0 0
    %682 = vmatprep.subr.bf16.mxu0 0
    %683 = vmatpush1.bf16.msra.mxu0 %v663
    %684 = vmatprep.subr.bf16.mxu0 0
    %685 = vmatpush2.bf16.msra.mxu0 0
    %686 = vmatprep.subr.bf16.mxu0 0
    %687 = vmatpush2.bf16.msra.mxu0 0
    %688 = vmatprep.subr.bf16.mxu0 0
    %689 = vmatpush2.bf16.msra.mxu0 0
    %690 = vmatprep.subr.bf16.mxu0 0
    %691 = vmatpush2.bf16.msra.mxu0 0
    %692 = vmatprep.subr.bf16.mxu0 0
    %693 = vmatpush2.bf16.msra.mxu0 0
    %694 = vmatprep.subr.bf16.mxu0 0
    %695 = vmatpush2.bf16.msra.mxu0 0
    %696 = vmatprep.subr.bf16.mxu0 0
    %697 = vmatpush2.bf16.msra.mxu0 0
    %698 = vmatprep.subr.bf16.mxu0 0
    %699 = vmatpush2.bf16.msra.mxu0 0
    %700 = vmatprep.mubr.bf16.mxu0 0
    %701 = vmatmul.mubr.bf16.gmra.mxu0 %v666
    %v702 = vpop.f32.mrf.mxu0
    %v703 = vadd.f32 0.0, %v702
    %v704 = vpop.f32.mrf.mxu0
    %v705 = vpop.f32.mrf.mxu0
    %v706 = vadd.f32 0.0, %v705
    %v707 = vpop.f32.mrf.mxu0
    %708 = vdwg.mxu0
    %v709 = vld [vmem:[%s17] sm:$0xf]
    %v710 = vld [vmem:[%s17 + $0x4] sm:$0xf]
    %v711 = vpack.c.bf16 %v706, %v703
    %712 = vrot.lane.b32.xlu0 %v583, 112
    %v713 = vpop.permute.xlu0 %712
    %714 = vrot.lane.b32.xlu0 %v583, 80
    %v715 = vpop.permute.xlu0 %714
    %v717 = vsel %vm587, %v713, 0
    %v720 = vsel %vm587, %v715, 0
    %722 = vmatprep.subr.bf16.mxu0 0
    %723 = vmatpush1.bf16.xpose.msra.mxu0 0
    %724 = vmatprep.subr.bf16.mxu0 0
    %725 = vmatpush1.bf16.xpose.msra.mxu0 0
    %726 = vmatprep.subr.bf16.mxu0 0
    %727 = vmatpush1.bf16.xpose.msra.mxu0 0
    %728 = vmatprep.subr.bf16.mxu0 0
    %729 = vmatpush1.bf16.xpose.msra.mxu0 0
    %730 = vmatprep.subr.bf16.mxu0 0
    %731 = vmatpush1.bf16.xpose.msra.mxu0 0
    %732 = vmatprep.subr.bf16.mxu0 0
    %733 = vmatpush1.bf16.xpose.msra.mxu0 0
    %734 = vmatprep.subr.bf16.mxu0 0
    %735 = vmatpush1.bf16.xpose.msra.mxu0 0
    %736 = vmatprep.subr.bf16.mxu0 0
    %737 = vmatpush1.bf16.xpose.msra.mxu0 %v720
    %738 = vmatprep.subr.bf16.mxu0 0
    %739 = vmatpush2.bf16.xpose.msra.mxu0 0
    %740 = vmatprep.subr.bf16.mxu0 0
    %741 = vmatpush2.bf16.xpose.msra.mxu0 0
    %742 = vmatprep.subr.bf16.mxu0 0
    %743 = vmatpush2.bf16.xpose.msra.mxu0 0
    %744 = vmatprep.subr.bf16.mxu0 0
    %745 = vmatpush2.bf16.xpose.msra.mxu0 0
    %746 = vmatprep.subr.bf16.mxu0 0
    %747 = vmatpush2.bf16.xpose.msra.mxu0 0
    %748 = vmatprep.subr.bf16.mxu0 0
    %749 = vmatpush2.bf16.xpose.msra.mxu0 0
    %750 = vmatprep.subr.bf16.mxu0 0
    %751 = vmatpush2.bf16.xpose.msra.mxu0 0
    %752 = vmatprep.subr.bf16.mxu0 0
    %753 = vmatpush2.bf16.xpose.msra.mxu0 0
    %754 = vmatprep.mubr.bf16.mxu0 0
    %755 = vmatmul.mubr.bf16.gmra.mxu0 %v717
    %v756 = vpop.f32.mrf.mxu0
    %v757 = vadd.f32 0.0, %v756
    %v758 = vpop.f32.mrf.mxu0
    %v759 = vpop.f32.mrf.mxu0
    %v760 = vadd.f32 0.0, %v759
    %v761 = vpop.f32.mrf.mxu0
    %762 = vdwg.mxu0
    %v763 = vmul.f32 %v757, 0.25
    %v764 = vmul.f32 %v760, 0.25
    %v765 = vadd.f32 %v763, %v512
    %v766 = vadd.f32 %v764, %v513
    %v767 = vsel %vm587, %v765, -inf
    %768 = vmax.xlane.f32.xlu0 %v767
    %v769 = vpop.xlane.xlu0 %768
    %v770 = vsel %vm587, %v766, -inf
    %771 = vmax.xlane.f32.xlu0 %v770
    %v772 = vpop.xlane.xlu0 %771
    %v773 = vsub.f32 %v765, %v769
    %v774 = vsub.f32 %v766, %v772
    %v775 = vmul.f32 %v773, 1.442695
    %v776 = vpow.pop %v775
    %v777 = vmul.f32 %v774, 1.442695
    %v778 = vpow.pop %v777
    %v779 = vsel %vm587, %v776, 0.0
    %780 = vadd.xlane.f32.xlu0 %v779
    %v781 = vpop.xlane.xlu0 %780
    %v782 = vsel %vm587, %v778, 0.0
    %783 = vadd.xlane.f32.xlu0 %v782
    %v784 = vpop.xlane.xlu0 %783
    %v785 = vrcp.pop %v781
    %v786 = vrcp.pop %v784
    %v787 = vmul.f32 %v776, %v785
    %v788 = vmul.f32 %v778, %v786
    %v789 = vpack.c.bf16 %v788, %v787
    %790 = vrot.lane.b32.xlu0 %v583, 48
    %v791 = vpop.permute.xlu0 %790
    %v794 = vsel %vm587, %v789, 0
    %796 = vmatprep.subr.bf16.mxu0 0
    %797 = vmatpush1.bf16.msra.mxu0 0
    %798 = vmatprep.subr.bf16.mxu0 0
    %799 = vmatpush1.bf16.msra.mxu0 0
    %800 = vmatprep.subr.bf16.mxu0 0
    %801 = vmatpush1.bf16.msra.mxu0 0
    %802 = vmatprep.subr.bf16.mxu0 0
    %803 = vmatpush1.bf16.msra.mxu0 0
    %804 = vmatprep.subr.bf16.mxu0 0
    %805 = vmatpush1.bf16.msra.mxu0 0
    %806 = vmatprep.subr.bf16.mxu0 0
    %807 = vmatpush1.bf16.msra.mxu0 0
    %808 = vmatprep.subr.bf16.mxu0 0
    %809 = vmatpush1.bf16.msra.mxu0 0
    %810 = vmatprep.subr.bf16.mxu0 0
    %811 = vmatpush1.bf16.msra.mxu0 %v791
    %812 = vmatprep.subr.bf16.mxu0 0
    %813 = vmatpush2.bf16.msra.mxu0 0
    %814 = vmatprep.subr.bf16.mxu0 0
    %815 = vmatpush2.bf16.msra.mxu0 0
    %816 = vmatprep.subr.bf16.mxu0 0
    %817 = vmatpush2.bf16.msra.mxu0 0
    %818 = vmatprep.subr.bf16.mxu0 0
    %819 = vmatpush2.bf16.msra.mxu0 0
    %820 = vmatprep.subr.bf16.mxu0 0
    %821 = vmatpush2.bf16.msra.mxu0 0
    %822 = vmatprep.subr.bf16.mxu0 0
    %823 = vmatpush2.bf16.msra.mxu0 0
    %824 = vmatprep.subr.bf16.mxu0 0
    %825 = vmatpush2.bf16.msra.mxu0 0
    %826 = vmatprep.subr.bf16.mxu0 0
    %827 = vmatpush2.bf16.msra.mxu0 0
    %828 = vmatprep.mubr.bf16.mxu0 0
    %829 = vmatmul.mubr.bf16.gmra.mxu0 %v794
    %v830 = vpop.f32.mrf.mxu0
    %v831 = vadd.f32 0.0, %v830
    %v832 = vpop.f32.mrf.mxu0
    %v833 = vpop.f32.mrf.mxu0
    %v834 = vadd.f32 0.0, %v833
    %v835 = vpop.f32.mrf.mxu0
    %836 = vdwg.mxu0
    %s837 = scalar_lea.vmem %s17, 8
    %v838 = vld [vmem:[%s837] sm:$0xf]
    %v839 = vld [vmem:[%s837 + $0x4] sm:$0xf]
    %v840 = vpack.c.bf16 %v834, %v831
    %v843 = vunpack.c.l.b16 %v838
    %v844 = vunpack.c.l.b16 %v839
    %v845 = vpack.c.b16 %v844, %v843
    %v848 = vsel %vm587, %v840, 0
    %850 = vmatprep.subr.bf16.mxu0 0
    %851 = vmatpush1.bf16.msra.mxu0 0
    %852 = vmatprep.subr.bf16.mxu0 0
    %853 = vmatpush1.bf16.msra.mxu0 0
    %854 = vmatprep.subr.bf16.mxu0 0
    %855 = vmatpush1.bf16.msra.mxu0 0
    %856 = vmatprep.subr.bf16.mxu0 0
    %857 = vmatpush1.bf16.msra.mxu0 0
    %858 = vmatprep.subr.bf16.mxu0 0
    %859 = vmatpush1.bf16.msra.mxu0 0
    %860 = vmatprep.subr.bf16.mxu0 0
    %861 = vmatpush1.bf16.msra.mxu0 0
    %862 = vmatprep.subr.bf16.mxu0 0
    %863 = vmatpush1.bf16.msra.mxu0 0
    %864 = vmatprep.subr.bf16.mxu0 0
    %865 = vmatpush1.bf16.msra.mxu0 %v845
    %866 = vmatprep.subr.bf16.mxu0 0
    %867 = vmatpush2.bf16.msra.mxu0 0
    %868 = vmatprep.subr.bf16.mxu0 0
    %869 = vmatpush2.bf16.msra.mxu0 0
    %870 = vmatprep.subr.bf16.mxu0 0
    %871 = vmatpush2.bf16.msra.mxu0 0
    %872 = vmatprep.subr.bf16.mxu0 0
    %873 = vmatpush2.bf16.msra.mxu0 0
    %874 = vmatprep.subr.bf16.mxu0 0
    %875 = vmatpush2.bf16.msra.mxu0 0
    %876 = vmatprep.subr.bf16.mxu0 0
    %877 = vmatpush2.bf16.msra.mxu0 0
    %878 = vmatprep.subr.bf16.mxu0 0
    %879 = vmatpush2.bf16.msra.mxu0 0
    %880 = vmatprep.subr.bf16.mxu0 0
    %881 = vmatpush2.bf16.msra.mxu0 0
    %882 = vmatprep.mubr.bf16.mxu0 0
    %883 = vmatmul.mubr.bf16.gmra.mxu0 %v848
    %v884 = vpop.f32.mrf.mxu0
    %v885 = vadd.f32 0.0, %v884
    %v886 = vpop.f32.mrf.mxu0
    %v887 = vpop.f32.mrf.mxu0
    %v888 = vadd.f32 0.0, %v887
    %v889 = vpop.f32.mrf.mxu0
    %890 = vdwg.mxu0
    %v893 = vunpack.c.l.b16 %v709
    %v894 = vunpack.c.l.b16 %v710
    %v895 = vpack.c.b16 %v894, %v893
    %v898 = vsel %vm587, %v711, 0
    %900 = vmatprep.subr.bf16.mxu0 0
    %901 = vmatpush1.bf16.msra.mxu0 0
    %902 = vmatprep.subr.bf16.mxu0 0
    %903 = vmatpush1.bf16.msra.mxu0 0
    %904 = vmatprep.subr.bf16.mxu0 0
    %905 = vmatpush1.bf16.msra.mxu0 0
    %906 = vmatprep.subr.bf16.mxu0 0
    %907 = vmatpush1.bf16.msra.mxu0 0
    %908 = vmatprep.subr.bf16.mxu0 0
    %909 = vmatpush1.bf16.msra.mxu0 0
    %910 = vmatprep.subr.bf16.mxu0 0
    %911 = vmatpush1.bf16.msra.mxu0 0
    %912 = vmatprep.subr.bf16.mxu0 0
    %913 = vmatpush1.bf16.msra.mxu0 0
    %914 = vmatprep.subr.bf16.mxu0 0
    %915 = vmatpush1.bf16.msra.mxu0 %v895
    %916 = vmatprep.subr.bf16.mxu0 0
    %917 = vmatpush2.bf16.msra.mxu0 0
    %918 = vmatprep.subr.bf16.mxu0 0
    %919 = vmatpush2.bf16.msra.mxu0 0
    %920 = vmatprep.subr.bf16.mxu0 0
    %921 = vmatpush2.bf16.msra.mxu0 0
    %922 = vmatprep.subr.bf16.mxu0 0
    %923 = vmatpush2.bf16.msra.mxu0 0
    %924 = vmatprep.subr.bf16.mxu0 0
    %925 = vmatpush2.bf16.msra.mxu0 0
    %926 = vmatprep.subr.bf16.mxu0 0
    %927 = vmatpush2.bf16.msra.mxu0 0
    %928 = vmatprep.subr.bf16.mxu0 0
    %929 = vmatpush2.bf16.msra.mxu0 0
    %930 = vmatprep.subr.bf16.mxu0 0
    %931 = vmatpush2.bf16.msra.mxu0 0
    %932 = vmatprep.mubr.bf16.mxu0 0
    %933 = vmatmul.mubr.bf16.gmra.mxu0 %v898
    %v934 = vpop.f32.mrf.mxu0
    %v935 = vadd.f32 %v885, %v934
    %v936 = vpop.f32.mrf.mxu0
    %v937 = vpop.f32.mrf.mxu0
    %v938 = vadd.f32 %v888, %v937
    %v939 = vpop.f32.mrf.mxu0
    %940 = vdwg.mxu0
    %v941 = vld [vmem:[%s19] sm:$0x1]
    %v943 = vlaneseq
    %v944 = vshrl.u32 %v943, 7
    %v945 = vsub.s32 0, %v944
    %v946 = vrot.slane %v941, %v945
    %v948 = vadd.f32 %v935, %v946
    %v949 = vadd.f32 %v938, %v946
    %v950 = vadd.f32 %v489, %v948
    %v951 = vadd.f32 %v490, %v949
    %v952 = vld [vmem:[#allocation9] sm:$0x1]
    %v953 = vld [vmem:[#allocation11] sm:$0x1]
    %v954 = vsel %vm538, %v950, 0.0
    %955 = vadd.xlane.f32.xlu0 %v954
    %v956 = vpop.xlane.xlu0 %955
    %v957 = vsel %vm538, %v951, 0.0
    %958 = vadd.xlane.f32.xlu0 %v957
    %v959 = vpop.xlane.xlu0 %958
    %v960 = vrcp.pop 32.0
    %v961 = vmul.f32 %v956, %v960
    %v962 = vmul.f32 %v959, %v960
    %v963 = vsub.f32 %v950, %v961
    %v964 = vsub.f32 %v951, %v962
    %v965 = vmul.f32 %v963, %v963
    %v966 = vmul.f32 %v964, %v964
    %v967 = vsel %vm538, %v965, 0.0
    %968 = vadd.xlane.f32.xlu0 %v967
    %v969 = vpop.xlane.xlu0 %968
    %v970 = vsel %vm538, %v966, 0.0
    %971 = vadd.xlane.f32.xlu0 %v970
    %v972 = vpop.xlane.xlu0 %971
    %v973 = vmul.f32 %v969, %v960
    %v974 = vmul.f32 %v972, %v960
    %v975 = vadd.f32 %v973, 1e-05
    %v976 = vadd.f32 %v974, 1e-05
    %v977 = vrsqrt.pop %v975
    %v978 = vrsqrt.pop %v976
    %v979 = vmul.f32 %v963, %v977
    %v980 = vmul.f32 %v964, %v978
    %v982 = vlaneseq
    %v983 = vshrl.u32 %v982, 7
    %v984 = vsub.s32 0, %v983
    %v985 = vrot.slane %v952, %v984
    %v987 = vmul.f32 %v979, %v985
    %v988 = vmul.f32 %v980, %v985
    %v990 = vlaneseq
    %v991 = vshrl.u32 %v990, 7
    %v992 = vsub.s32 0, %v991
    %v993 = vrot.slane %v953, %v992
    %v995 = vadd.f32 %v987, %v993
    %v996 = vadd.f32 %v988, %v993
    %v997 = vld [vmem:[%s25] sm:$0xf]
    %v998 = vld [vmem:[%s25 + $0x4] sm:$0xf]
    %v999 = vld [vmem:[%s25 + $0x8] sm:$0xf]
    %v1000 = vld [vmem:[%s25 + $0xc] sm:$0xf]
    %v1001 = vpack.c.bf16 %v996, %v995
    %v1002 = vld [vmem:[#allocation12] sm:$0x1]
    %v1004 = vlaneseq
    %v1005 = vshrl.u32 %v1004, 7
    %v1006 = vsub.s32 0, %v1005
    %v1007 = vrot.slane %v1002, %v1006
    %v1013 = vunpack.c.l.b16 %v997
    %v1014 = vunpack.c.l.b16 %v998
    %v1015 = vunpack.c.l.b16 %v999
    %v1016 = vunpack.c.l.b16 %v1000
    %v1017 = vpack.c.b16 %v1014, %v1013
    %v1018 = vpack.c.b16 %v1016, %v1015
    %v1022 = vsel %vm538, %v1001, 0
    %1024 = vmatprep.subr.bf16.mxu0 0
    %1025 = vmatpush1.bf16.msra.mxu0 0
    %1026 = vmatprep.subr.bf16.mxu0 0
    %1027 = vmatpush1.bf16.msra.mxu0 0
    %1028 = vmatprep.subr.bf16.mxu0 0
    %1029 = vmatpush1.bf16.msra.mxu0 0
    %1030 = vmatprep.subr.bf16.mxu0 0
    %1031 = vmatpush1.bf16.msra.mxu0 0
    %1032 = vmatprep.subr.bf16.mxu0 0
    %1033 = vmatpush1.bf16.msra.mxu0 0
    %1034 = vmatprep.subr.bf16.mxu0 0
    %1035 = vmatpush1.bf16.msra.mxu0 0
    %1036 = vmatprep.subr.bf16.mxu0 0
    %1037 = vmatpush1.bf16.msra.mxu0 %v1018
    %1038 = vmatprep.subr.bf16.mxu0 0
    %1039 = vmatpush1.bf16.msra.mxu0 %v1017
    %1040 = vmatprep.subr.bf16.mxu0 0
    %1041 = vmatpush2.bf16.msra.mxu0 0
    %1042 = vmatprep.subr.bf16.mxu0 0
    %1043 = vmatpush2.bf16.msra.mxu0 0
    %1044 = vmatprep.subr.bf16.mxu0 0
    %1045 = vmatpush2.bf16.msra.mxu0 0
    %1046 = vmatprep.subr.bf16.mxu0 0
    %1047 = vmatpush2.bf16.msra.mxu0 0
    %1048 = vmatprep.subr.bf16.mxu0 0
    %1049 = vmatpush2.bf16.msra.mxu0 0
    %1050 = vmatprep.subr.bf16.mxu0 0
    %1051 = vmatpush2.bf16.msra.mxu0 0
    %1052 = vmatprep.subr.bf16.mxu0 0
    %1053 = vmatpush2.bf16.msra.mxu0 0
    %1054 = vmatprep.subr.bf16.mxu0 0
    %1055 = vmatpush2.bf16.msra.mxu0 0
    %1056 = vmatprep.mubr.bf16.mxu0 0
    %1057 = vmatmul.mubr.bf16.gmra.mxu0 %v1022
    %v1058 = vpop.f32.mrf.mxu0
    %v1059 = vadd.f32 %v1007, %v1058
    %v1060 = vpop.f32.mrf.mxu0
    %v1061 = vpop.f32.mrf.mxu0
    %v1062 = vadd.f32 %v1007, %v1061
    %v1063 = vpop.f32.mrf.mxu0
    %1064 = vdwg.mxu0
    %v1065 = vmax.f32 %v1059, 0.0
    %v1066 = vmax.f32 %v1062, 0.0
    %v1067 = vld [vmem:[%s29] sm:$0xf]
    %v1068 = vld [vmem:[%s29 + $0x4] sm:$0xf]
    %v1069 = vld [vmem:[%s29 + $0x8] sm:$0xf]
    %v1070 = vld [vmem:[%s29 + $0xc] sm:$0xf]
    %v1071 = vpack.c.bf16 %v1066, %v1065
    %v1072 = vld [vmem:[#allocation14] sm:$0x1]
    %v1074 = vlaneseq
    %v1075 = vshrl.u32 %v1074, 7
    %v1076 = vsub.s32 0, %v1075
    %v1077 = vrot.slane %v1072, %v1076
    %v1083 = vunpack.c.l.b16 %v1067
    %v1084 = vunpack.c.l.b16 %v1068
    %v1085 = vunpack.c.l.b16 %v1069
    %v1086 = vunpack.c.l.b16 %v1070
    %v1087 = vpack.c.b16 %v1084, %v1083
    %v1088 = vpack.c.b16 %v1086, %v1085
    %v1092 = vsel %vm538, %v1071, 0
    %1094 = vmatprep.subr.bf16.mxu0 0
    %1095 = vmatpush1.bf16.msra.mxu0 0
    %1096 = vmatprep.subr.bf16.mxu0 0
    %1097 = vmatpush1.bf16.msra.mxu0 0
    %1098 = vmatprep.subr.bf16.mxu0 0
    %1099 = vmatpush1.bf16.msra.mxu0 0
    %1100 = vmatprep.subr.bf16.mxu0 0
    %1101 = vmatpush1.bf16.msra.mxu0 0
    %1102 = vmatprep.subr.bf16.mxu0 0
    %1103 = vmatpush1.bf16.msra.mxu0 0
    %1104 = vmatprep.subr.bf16.mxu0 0
    %1105 = vmatpush1.bf16.msra.mxu0 0
    %1106 = vmatprep.subr.bf16.mxu0 0
    %1107 = vmatpush1.bf16.msra.mxu0 %v1088
    %1108 = vmatprep.subr.bf16.mxu0 0
    %1109 = vmatpush1.bf16.msra.mxu0 %v1087
    %1110 = vmatprep.subr.bf16.mxu0 0
    %1111 = vmatpush2.bf16.msra.mxu0 0
    %1112 = vmatprep.subr.bf16.mxu0 0
    %1113 = vmatpush2.bf16.msra.mxu0 0
    %1114 = vmatprep.subr.bf16.mxu0 0
    %1115 = vmatpush2.bf16.msra.mxu0 0
    %1116 = vmatprep.subr.bf16.mxu0 0
    %1117 = vmatpush2.bf16.msra.mxu0 0
    %1118 = vmatprep.subr.bf16.mxu0 0
    %1119 = vmatpush2.bf16.msra.mxu0 0
    %1120 = vmatprep.subr.bf16.mxu0 0
    %1121 = vmatpush2.bf16.msra.mxu0 0
    %1122 = vmatprep.subr.bf16.mxu0 0
    %1123 = vmatpush2.bf16.msra.mxu0 0
    %1124 = vmatprep.subr.bf16.mxu0 0
    %1125 = vmatpush2.bf16.msra.mxu0 0
    %1126 = vmatprep.mubr.bf16.mxu0 0
    %1127 = vmatmul.mubr.bf16.gmra.mxu0 %v1092
    %v1128 = vpop.f32.mrf.mxu0
    %v1129 = vadd.f32 %v1077, %v1128
    %v1130 = vpop.f32.mrf.mxu0
    %v1131 = vpop.f32.mrf.mxu0
    %v1132 = vadd.f32 %v1077, %v1131
    %v1133 = vpop.f32.mrf.mxu0
    %1134 = vdwg.mxu0
    %v1135 = vadd.f32 %v995, %v1129
    %v1136 = vadd.f32 %v996, %v1132
    %v1137 = vld [vmem:[#allocation15] sm:$0x1]
    %v1138 = vld [vmem:[#allocation17] sm:$0x1]
    %v1139 = vsel %vm538, %v1135, 0.0
    %1140 = vadd.xlane.f32.xlu0 %v1139
    %v1141 = vpop.xlane.xlu0 %1140
    %v1142 = vsel %vm538, %v1136, 0.0
    %1143 = vadd.xlane.f32.xlu0 %v1142
    %v1144 = vpop.xlane.xlu0 %1143
    %v1145 = vmul.f32 %v1141, %v960
    %v1146 = vmul.f32 %v1144, %v960
    %v1147 = vsub.f32 %v1135, %v1145
    %v1148 = vsub.f32 %v1136, %v1146
    %v1149 = vmul.f32 %v1147, %v1147
    %v1150 = vmul.f32 %v1148, %v1148
    %v1151 = vsel %vm538, %v1149, 0.0
    %1152 = vadd.xlane.f32.xlu0 %v1151
    %v1153 = vpop.xlane.xlu0 %1152
    %v1154 = vsel %vm538, %v1150, 0.0
    %1155 = vadd.xlane.f32.xlu0 %v1154
    %v1156 = vpop.xlane.xlu0 %1155
    %v1157 = vmul.f32 %v1153, %v960
    %v1158 = vmul.f32 %v1156, %v960
    %v1159 = vadd.f32 %v1157, 1e-05
    %v1160 = vadd.f32 %v1158, 1e-05
    %v1161 = vrsqrt.pop %v1159
    %v1162 = vrsqrt.pop %v1160
    %v1163 = vmul.f32 %v1147, %v1161
    %v1164 = vmul.f32 %v1148, %v1162
    %v1166 = vlaneseq
    %v1167 = vshrl.u32 %v1166, 7
    %v1168 = vsub.s32 0, %v1167
    %v1169 = vrot.slane %v1137, %v1168
    %v1171 = vmul.f32 %v1163, %v1169
    %v1172 = vmul.f32 %v1164, %v1169
    %v1174 = vlaneseq
    %v1175 = vshrl.u32 %v1174, 7
    %v1176 = vsub.s32 0, %v1175
    %v1177 = vrot.slane %v1138, %v1176
    %v1179 = vadd.f32 %v1171, %v1177
    %v1180 = vadd.f32 %v1172, %v1177
    %s1181 = scalar_lea.vmem %s13, 16
    %v1182 = vld [vmem:[%s1181] sm:$0xf]
    %v1183 = vld [vmem:[%s1181 + $0x4] sm:$0xf]
    %v1184 = vld [vmem:[%s1181 + $0x8] sm:$0xf]
    %v1185 = vld [vmem:[%s1181 + $0xc] sm:$0xf]
    %v1186 = vpack.c.bf16 %v1180, %v1179
    %s1187 = scalar_lea.vmem [#allocation8], 1
    %v1188 = vld [vmem:[%s1187] sm:$0x1]
    %v1190 = vlaneseq
    %v1191 = vshrl.u32 %v1190, 7
    %v1192 = vsub.s32 0, %v1191
    %v1193 = vrot.slane %v1188, %v1192
    %v1199 = vunpack.c.l.b16 %v1182
    %v1200 = vunpack.c.l.b16 %v1183
    %v1201 = vunpack.c.l.b16 %v1184
    %v1202 = vunpack.c.l.b16 %v1185
    %v1203 = vpack.c.b16 %v1200, %v1199
    %v1204 = vpack.c.b16 %v1202, %v1201
    %v1208 = vsel %vm538, %v1186, 0
    %1210 = vmatprep.subr.bf16.mxu0 0
    %1211 = vmatpush1.bf16.msra.mxu0 0
    %1212 = vmatprep.subr.bf16.mxu0 0
    %1213 = vmatpush1.bf16.msra.mxu0 0
    %1214 = vmatprep.subr.bf16.mxu0 0
    %1215 = vmatpush1.bf16.msra.mxu0 0
    %1216 = vmatprep.subr.bf16.mxu0 0
    %1217 = vmatpush1.bf16.msra.mxu0 0
    %1218 = vmatprep.subr.bf16.mxu0 0
    %1219 = vmatpush1.bf16.msra.mxu0 0
    %1220 = vmatprep.subr.bf16.mxu0 0
    %1221 = vmatpush1.bf16.msra.mxu0 0
    %1222 = vmatprep.subr.bf16.mxu0 0
    %1223 = vmatpush1.bf16.msra.mxu0 %v1204
    %1224 = vmatprep.subr.bf16.mxu0 0
    %1225 = vmatpush1.bf16.msra.mxu0 %v1203
    %1226 = vmatprep.subr.bf16.mxu0 0
    %1227 = vmatpush2.bf16.msra.mxu0 0
    %1228 = vmatprep.subr.bf16.mxu0 0
    %1229 = vmatpush2.bf16.msra.mxu0 0
    %1230 = vmatprep.subr.bf16.mxu0 0
    %1231 = vmatpush2.bf16.msra.mxu0 0
    %1232 = vmatprep.subr.bf16.mxu0 0
    %1233 = vmatpush2.bf16.msra.mxu0 0
    %1234 = vmatprep.subr.bf16.mxu0 0
    %1235 = vmatpush2.bf16.msra.mxu0 0
    %1236 = vmatprep.subr.bf16.mxu0 0
    %1237 = vmatpush2.bf16.msra.mxu0 0
    %1238 = vmatprep.subr.bf16.mxu0 0
    %1239 = vmatpush2.bf16.msra.mxu0 0
    %1240 = vmatprep.subr.bf16.mxu0 0
    %1241 = vmatpush2.bf16.msra.mxu0 0
    %1242 = vmatprep.mubr.bf16.mxu0 0
    %1243 = vmatmul.mubr.bf16.gmra.mxu0 %v1208
    %v1244 = vpop.f32.mrf.mxu0
    %v1245 = vadd.f32 %v1193, %v1244
    %v1246 = vpop.f32.mrf.mxu0
    %v1247 = vpop.f32.mrf.mxu0
    %v1248 = vadd.f32 %v1193, %v1247
    %v1249 = vpop.f32.mrf.mxu0
    %1250 = vdwg.mxu0
    %v1251 = vpack.c.bf16 %v1248, %v1245
    %1253 = vrot.lane.b32.xlu0 %v1251, 96
    %v1254 = vpop.permute.xlu0 %1253
    %v1256 = vsel %vm587, %v1251, 0
    %v1259 = vsel %vm587, %v1254, 0
    %1261 = vmatprep.subr.bf16.mxu0 0
    %1262 = vmatpush1.bf16.xpose.msra.mxu0 0
    %1263 = vmatprep.subr.bf16.mxu0 0
    %1264 = vmatpush1.bf16.xpose.msra.mxu0 0
    %1265 = vmatprep.subr.bf16.mxu0 0
    %1266 = vmatpush1.bf16.xpose.msra.mxu0 0
    %1267 = vmatprep.subr.bf16.mxu0 0
    %1268 = vmatpush1.bf16.xpose.msra.mxu0 0
    %1269 = vmatprep.subr.bf16.mxu0 0
    %1270 = vmatpush1.bf16.xpose.msra.mxu0 0
    %1271 = vmatprep.subr.bf16.mxu0 0
    %1272 = vmatpush1.bf16.xpose.msra.mxu0 0
    %1273 = vmatprep.subr.bf16.mxu0 0
    %1274 = vmatpush1.bf16.xpose.msra.mxu0 0
    %1275 = vmatprep.subr.bf16.mxu0 0
    %1276 = vmatpush1.bf16.xpose.msra.mxu0 %v1259
    %1277 = vmatprep.subr.bf16.mxu0 0
    %1278 = vmatpush2.bf16.xpose.msra.mxu0 0
    %1279 = vmatprep.subr.bf16.mxu0 0
    %1280 = vmatpush2.bf16.xpose.msra.mxu0 0
    %1281 = vmatprep.subr.bf16.mxu0 0
    %1282 = vmatpush2.bf16.xpose.msra.mxu0 0
    %1283 = vmatprep.subr.bf16.mxu0 0
    %1284 = vmatpush2.bf16.xpose.msra.mxu0 0
    %1285 = vmatprep.subr.bf16.mxu0 0
    %1286 = vmatpush2.bf16.xpose.msra.mxu0 0
    %1287 = vmatprep.subr.bf16.mxu0 0
    %1288 = vmatpush2.bf16.xpose.msra.mxu0 0
    %1289 = vmatprep.subr.bf16.mxu0 0
    %1290 = vmatpush2.bf16.xpose.msra.mxu0 0
    %1291 = vmatprep.subr.bf16.mxu0 0
    %1292 = vmatpush2.bf16.xpose.msra.mxu0 0
    %1293 = vmatprep.mubr.bf16.mxu0 0
    %1294 = vmatmul.mubr.bf16.gmra.mxu0 %v1256
    %v1295 = vpop.f32.mrf.mxu0
    %v1296 = vadd.f32 0.0, %v1295
    %v1297 = vpop.f32.mrf.mxu0
    %v1298 = vpop.f32.mrf.mxu0
    %v1299 = vadd.f32 0.0, %v1298
    %v1300 = vpop.f32.mrf.mxu0
    %1301 = vdwg.mxu0
    %v1302 = vmul.f32 %v1296, 0.25
    %v1303 = vmul.f32 %v1299, 0.25
    %v1304 = vadd.f32 %v1302, %v512
    %v1305 = vadd.f32 %v1303, %v513
    %v1306 = vsel %vm587, %v1304, -inf
    %1307 = vmax.xlane.f32.xlu0 %v1306
    %v1308 = vpop.xlane.xlu0 %1307
    %v1309 = vsel %vm587, %v1305, -inf
    %1310 = vmax.xlane.f32.xlu0 %v1309
    %v1311 = vpop.xlane.xlu0 %1310
    %v1312 = vsub.f32 %v1304, %v1308
    %v1313 = vsub.f32 %v1305, %v1311
    %v1314 = vmul.f32 %v1312, 1.442695
    %v1315 = vpow.pop %v1314
    %v1316 = vmul.f32 %v1313, 1.442695
    %v1317 = vpow.pop %v1316
    %v1318 = vsel %vm587, %v1315, 0.0
    %1319 = vadd.xlane.f32.xlu0 %v1318
    %v1320 = vpop.xlane.xlu0 %1319
    %v1321 = vsel %vm587, %v1317, 0.0
    %1322 = vadd.xlane.f32.xlu0 %v1321
    %v1323 = vpop.xlane.xlu0 %1322
    %v1324 = vrcp.pop %v1320
    %v1325 = vrcp.pop %v1323
    %v1326 = vmul.f32 %v1315, %v1324
    %v1327 = vmul.f32 %v1317, %v1325
    %v1328 = vpack.c.bf16 %v1327, %v1326
    %1329 = vrot.lane.b32.xlu0 %v1251, 64
    %v1330 = vpop.permute.xlu0 %1329
    %v1333 = vsel %vm587, %v1328, 0
    %1335 = vmatprep.subr.bf16.mxu0 0
    %1336 = vmatpush1.bf16.msra.mxu0 0
    %1337 = vmatprep.subr.bf16.mxu0 0
    %1338 = vmatpush1.bf16.msra.mxu0 0
    %1339 = vmatprep.subr.bf16.mxu0 0
    %1340 = vmatpush1.bf16.msra.mxu0 0
    %1341 = vmatprep.subr.bf16.mxu0 0
    %1342 = vmatpush1.bf16.msra.mxu0 0
    %1343 = vmatprep.subr.bf16.mxu0 0
    %1344 = vmatpush1.bf16.msra.mxu0 0
    %1345 = vmatprep.subr.bf16.mxu0 0
    %1346 = vmatpush1.bf16.msra.mxu0 0
    %1347 = vmatprep.subr.bf16.mxu0 0
    %1348 = vmatpush1.bf16.msra.mxu0 0
    %1349 = vmatprep.subr.bf16.mxu0 0
    %1350 = vmatpush1.bf16.msra.mxu0 %v1330
    %1351 = vmatprep.subr.bf16.mxu0 0
    %1352 = vmatpush2.bf16.msra.mxu0 0
    %1353 = vmatprep.subr.bf16.mxu0 0
    %1354 = vmatpush2.bf16.msra.mxu0 0
    %1355 = vmatprep.subr.bf16.mxu0 0
    %1356 = vmatpush2.bf16.msra.mxu0 0
    %1357 = vmatprep.subr.bf16.mxu0 0
    %1358 = vmatpush2.bf16.msra.mxu0 0
    %1359 = vmatprep.subr.bf16.mxu0 0
    %1360 = vmatpush2.bf16.msra.mxu0 0
    %1361 = vmatprep.subr.bf16.mxu0 0
    %1362 = vmatpush2.bf16.msra.mxu0 0
    %1363 = vmatprep.subr.bf16.mxu0 0
    %1364 = vmatpush2.bf16.msra.mxu0 0
    %1365 = vmatprep.subr.bf16.mxu0 0
    %1366 = vmatpush2.bf16.msra.mxu0 0
    %1367 = vmatprep.mubr.bf16.mxu0 0
    %1368 = vmatmul.mubr.bf16.gmra.mxu0 %v1333
    %v1369 = vpop.f32.mrf.mxu0
    %v1370 = vadd.f32 0.0, %v1369
    %v1371 = vpop.f32.mrf.mxu0
    %v1372 = vpop.f32.mrf.mxu0
    %v1373 = vadd.f32 0.0, %v1372
    %v1374 = vpop.f32.mrf.mxu0
    %1375 = vdwg.mxu0
    %s1376 = scalar_lea.vmem %s17, 16
    %v1377 = vld [vmem:[%s1376] sm:$0xf]
    %v1378 = vld [vmem:[%s1376 + $0x4] sm:$0xf]
    %v1379 = vpack.c.bf16 %v1373, %v1370
    %1380 = vrot.lane.b32.xlu0 %v1251, 112
    %v1381 = vpop.permute.xlu0 %1380
    %1382 = vrot.lane.b32.xlu0 %v1251, 80
    %v1383 = vpop.permute.xlu0 %1382
    %v1385 = vsel %vm587, %v1381, 0
    %v1388 = vsel %vm587, %v1383, 0
    %1390 = vmatprep.subr.bf16.mxu0 0
    %1391 = vmatpush1.bf16.xpose.msra.mxu0 0
    %1392 = vmatprep.subr.bf16.mxu0 0
    %1393 = vmatpush1.bf16.xpose.msra.mxu0 0
    %1394 = vmatprep.subr.bf16.mxu0 0
    %1395 = vmatpush1.bf16.xpose.msra.mxu0 0
    %1396 = vmatprep.subr.bf16.mxu0 0
    %1397 = vmatpush1.bf16.xpose.msra.mxu0 0
    %1398 = vmatprep.subr.bf16.mxu0 0
    %1399 = vmatpush1.bf16.xpose.msra.mxu0 0
    %1400 = vmatprep.subr.bf16.mxu0 0
    %1401 = vmatpush1.bf16.xpose.msra.mxu0 0
    %1402 = vmatprep.subr.bf16.mxu0 0
    %1403 = vmatpush1.bf16.xpose.msra.mxu0 0
    %1404 = vmatprep.subr.bf16.mxu0 0
    %1405 = vmatpush1.bf16.xpose.msra.mxu0 %v1388
    %1406 = vmatprep.subr.bf16.mxu0 0
    %1407 = vmatpush2.bf16.xpose.msra.mxu0 0
    %1408 = vmatprep.subr.bf16.mxu0 0
    %1409 = vmatpush2.bf16.xpose.msra.mxu0 0
    %1410 = vmatprep.subr.bf16.mxu0 0
    %1411 = vmatpush2.bf16.xpose.msra.mxu0 0
    %1412 = vmatprep.subr.bf16.mxu0 0
    %1413 = vmatpush2.bf16.xpose.msra.mxu0 0
    %1414 = vmatprep.subr.bf16.mxu0 0
    %1415 = vmatpush2.bf16.xpose.msra.mxu0 0
    %1416 = vmatprep.subr.bf16.mxu0 0
    %1417 = vmatpush2.bf16.xpose.msra.mxu0 0
    %1418 = vmatprep.subr.bf16.mxu0 0
    %1419 = vmatpush2.bf16.xpose.msra.mxu0 0
    %1420 = vmatprep.subr.bf16.mxu0 0
    %1421 = vmatpush2.bf16.xpose.msra.mxu0 0
    %1422 = vmatprep.mubr.bf16.mxu0 0
    %1423 = vmatmul.mubr.bf16.gmra.mxu0 %v1385
    %v1424 = vpop.f32.mrf.mxu0
    %v1425 = vadd.f32 0.0, %v1424
    %v1426 = vpop.f32.mrf.mxu0
    %v1427 = vpop.f32.mrf.mxu0
    %v1428 = vadd.f32 0.0, %v1427
    %v1429 = vpop.f32.mrf.mxu0
    %1430 = vdwg.mxu0
    %v1431 = vmul.f32 %v1425, 0.25
    %v1432 = vmul.f32 %v1428, 0.25
    %v1433 = vadd.f32 %v1431, %v512
    %v1434 = vadd.f32 %v1432, %v513
    %v1435 = vsel %vm587, %v1433, -inf
    %1436 = vmax.xlane.f32.xlu0 %v1435
    %v1437 = vpop.xlane.xlu0 %1436
    %v1438 = vsel %vm587, %v1434, -inf
    %1439 = vmax.xlane.f32.xlu0 %v1438
    %v1440 = vpop.xlane.xlu0 %1439
    %v1441 = vsub.f32 %v1433, %v1437
    %v1442 = vsub.f32 %v1434, %v1440
    %v1443 = vmul.f32 %v1441, 1.442695
    %v1444 = vpow.pop %v1443
    %v1445 = vmul.f32 %v1442, 1.442695
    %v1446 = vpow.pop %v1445
    %v1447 = vsel %vm587, %v1444, 0.0
    %1448 = vadd.xlane.f32.xlu0 %v1447
    %v1449 = vpop.xlane.xlu0 %1448
    %v1450 = vsel %vm587, %v1446, 0.0
    %1451 = vadd.xlane.f32.xlu0 %v1450
    %v1452 = vpop.xlane.xlu0 %1451
    %v1453 = vrcp.pop %v1449
    %v1454 = vrcp.pop %v1452
    %v1455 = vmul.f32 %v1444, %v1453
    %v1456 = vmul.f32 %v1446, %v1454
    %v1457 = vpack.c.bf16 %v1456, %v1455
    %1458 = vrot.lane.b32.xlu0 %v1251, 48
    %v1459 = vpop.permute.xlu0 %1458
    %v1462 = vsel %vm587, %v1457, 0
    %1464 = vmatprep.subr.bf16.mxu0 0
    %1465 = vmatpush1.bf16.msra.mxu0 0
    %1466 = vmatprep.subr.bf16.mxu0 0
    %1467 = vmatpush1.bf16.msra.mxu0 0
    %1468 = vmatprep.subr.bf16.mxu0 0
    %1469 = vmatpush1.bf16.msra.mxu0 0
    %1470 = vmatprep.subr.bf16.mxu0 0
    %1471 = vmatpush1.bf16.msra.mxu0 0
    %1472 = vmatprep.subr.bf16.mxu0 0
    %1473 = vmatpush1.bf16.msra.mxu0 0
    %1474 = vmatprep.subr.bf16.mxu0 0
    %1475 = vmatpush1.bf16.msra.mxu0 0
    %1476 = vmatprep.subr.bf16.mxu0 0
    %1477 = vmatpush1.bf16.msra.mxu0 0
    %1478 = vmatprep.subr.bf16.mxu0 0
    %1479 = vmatpush1.bf16.msra.mxu0 %v1459
    %1480 = vmatprep.subr.bf16.mxu0 0
    %1481 = vmatpush2.bf16.msra.mxu0 0
    %1482 = vmatprep.subr.bf16.mxu0 0
    %1483 = vmatpush2.bf16.msra.mxu0 0
    %1484 = vmatprep.subr.bf16.mxu0 0
    %1485 = vmatpush2.bf16.msra.mxu0 0
    %1486 = vmatprep.subr.bf16.mxu0 0
    %1487 = vmatpush2.bf16.msra.mxu0 0
    %1488 = vmatprep.subr.bf16.mxu0 0
    %1489 = vmatpush2.bf16.msra.mxu0 0
    %1490 = vmatprep.subr.bf16.mxu0 0
    %1491 = vmatpush2.bf16.msra.mxu0 0
    %1492 = vmatprep.subr.bf16.mxu0 0
    %1493 = vmatpush2.bf16.msra.mxu0 0
    %1494 = vmatprep.subr.bf16.mxu0 0
    %1495 = vmatpush2.bf16.msra.mxu0 0
    %1496 = vmatprep.mubr.bf16.mxu0 0
    %1497 = vmatmul.mubr.bf16.gmra.mxu0 %v1462
    %v1498 = vpop.f32.mrf.mxu0
    %v1499 = vadd.f32 0.0, %v1498
    %v1500 = vpop.f32.mrf.mxu0
    %v1501 = vpop.f32.mrf.mxu0
    %v1502 = vadd.f32 0.0, %v1501
    %v1503 = vpop.f32.mrf.mxu0
    %1504 = vdwg.mxu0
    %s1505 = scalar_lea.vmem %s17, 24
    %v1506 = vld [vmem:[%s1505] sm:$0xf]
    %v1507 = vld [vmem:[%s1505 + $0x4] sm:$0xf]
    %v1508 = vpack.c.bf16 %v1502, %v1499
    %v1511 = vunpack.c.l.b16 %v1506
    %v1512 = vunpack.c.l.b16 %v1507
    %v1513 = vpack.c.b16 %v1512, %v1511
    %v1516 = vsel %vm587, %v1508, 0
    %1518 = vmatprep.subr.bf16.mxu0 0
    %1519 = vmatpush1.bf16.msra.mxu0 0
    %1520 = vmatprep.subr.bf16.mxu0 0
    %1521 = vmatpush1.bf16.msra.mxu0 0
    %1522 = vmatprep.subr.bf16.mxu0 0
    %1523 = vmatpush1.bf16.msra.mxu0 0
    %1524 = vmatprep.subr.bf16.mxu0 0
    %1525 = vmatpush1.bf16.msra.mxu0 0
    %1526 = vmatprep.subr.bf16.mxu0 0
    %1527 = vmatpush1.bf16.msra.mxu0 0
    %1528 = vmatprep.subr.bf16.mxu0 0
    %1529 = vmatpush1.bf16.msra.mxu0 0
    %1530 = vmatprep.subr.bf16.mxu0 0
    %1531 = vmatpush1.bf16.msra.mxu0 0
    %1532 = vmatprep.subr.bf16.mxu0 0
    %1533 = vmatpush1.bf16.msra.mxu0 %v1513
    %1534 = vmatprep.subr.bf16.mxu0 0
    %1535 = vmatpush2.bf16.msra.mxu0 0
    %1536 = vmatprep.subr.bf16.mxu0 0
    %1537 = vmatpush2.bf16.msra.mxu0 0
    %1538 = vmatprep.subr.bf16.mxu0 0
    %1539 = vmatpush2.bf16.msra.mxu0 0
    %1540 = vmatprep.subr.bf16.mxu0 0
    %1541 = vmatpush2.bf16.msra.mxu0 0
    %1542 = vmatprep.subr.bf16.mxu0 0
    %1543 = vmatpush2.bf16.msra.mxu0 0
    %1544 = vmatprep.subr.bf16.mxu0 0
    %1545 = vmatpush2.bf16.msra.mxu0 0
    %1546 = vmatprep.subr.bf16.mxu0 0
    %1547 = vmatpush2.bf16.msra.mxu0 0
    %1548 = vmatprep.subr.bf16.mxu0 0
    %1549 = vmatpush2.bf16.msra.mxu0 0
    %1550 = vmatprep.mubr.bf16.mxu0 0
    %1551 = vmatmul.mubr.bf16.gmra.mxu0 %v1516
    %v1552 = vpop.f32.mrf.mxu0
    %v1553 = vadd.f32 0.0, %v1552
    %v1554 = vpop.f32.mrf.mxu0
    %v1555 = vpop.f32.mrf.mxu0
    %v1556 = vadd.f32 0.0, %v1555
    %v1557 = vpop.f32.mrf.mxu0
    %1558 = vdwg.mxu0
    %v1561 = vunpack.c.l.b16 %v1377
    %v1562 = vunpack.c.l.b16 %v1378
    %v1563 = vpack.c.b16 %v1562, %v1561
    %v1566 = vsel %vm587, %v1379, 0
    %1568 = vmatprep.subr.bf16.mxu0 0
    %1569 = vmatpush1.bf16.msra.mxu0 0
    %1570 = vmatprep.subr.bf16.mxu0 0
    %1571 = vmatpush1.bf16.msra.mxu0 0
    %1572 = vmatprep.subr.bf16.mxu0 0
    %1573 = vmatpush1.bf16.msra.mxu0 0
    %1574 = vmatprep.subr.bf16.mxu0 0
    %1575 = vmatpush1.bf16.msra.mxu0 0
    %1576 = vmatprep.subr.bf16.mxu0 0
    %1577 = vmatpush1.bf16.msra.mxu0 0
    %1578 = vmatprep.subr.bf16.mxu0 0
    %1579 = vmatpush1.bf16.msra.mxu0 0
    %1580 = vmatprep.subr.bf16.mxu0 0
    %1581 = vmatpush1.bf16.msra.mxu0 0
    %1582 = vmatprep.subr.bf16.mxu0 0
    %1583 = vmatpush1.bf16.msra.mxu0 %v1563
    %1584 = vmatprep.subr.bf16.mxu0 0
    %1585 = vmatpush2.bf16.msra.mxu0 0
    %1586 = vmatprep.subr.bf16.mxu0 0
    %1587 = vmatpush2.bf16.msra.mxu0 0
    %1588 = vmatprep.subr.bf16.mxu0 0
    %1589 = vmatpush2.bf16.msra.mxu0 0
    %1590 = vmatprep.subr.bf16.mxu0 0
    %1591 = vmatpush2.bf16.msra.mxu0 0
    %1592 = vmatprep.subr.bf16.mxu0 0
    %1593 = vmatpush2.bf16.msra.mxu0 0
    %1594 = vmatprep.subr.bf16.mxu0 0
    %1595 = vmatpush2.bf16.msra.mxu0 0
    %1596 = vmatprep.subr.bf16.mxu0 0
    %1597 = vmatpush2.bf16.msra.mxu0 0
    %1598 = vmatprep.subr.bf16.mxu0 0
    %1599 = vmatpush2.bf16.msra.mxu0 0
    %1600 = vmatprep.mubr.bf16.mxu0 0
    %1601 = vmatmul.mubr.bf16.gmra.mxu0 %v1566
    %v1602 = vpop.f32.mrf.mxu0
    %v1603 = vadd.f32 %v1553, %v1602
    %v1604 = vpop.f32.mrf.mxu0
    %v1605 = vpop.f32.mrf.mxu0
    %v1606 = vadd.f32 %v1556, %v1605
    %v1607 = vpop.f32.mrf.mxu0
    %1608 = vdwg.mxu0
    %s1609 = scalar_lea.vmem %s19, 1
    %v1610 = vld [vmem:[%s1609] sm:$0x1]
    %v1612 = vlaneseq
    %v1613 = vshrl.u32 %v1612, 7
    %v1614 = vsub.s32 0, %v1613
    %v1615 = vrot.slane %v1610, %v1614
    %v1617 = vadd.f32 %v1603, %v1615
    %v1618 = vadd.f32 %v1606, %v1615
    %v1619 = vadd.f32 %v1179, %v1617
    %v1620 = vadd.f32 %v1180, %v1618
    %s1621 = scalar_lea.vmem [#allocation9], 1
    %v1622 = vld [vmem:[%s1621] sm:$0x1]
    %s1623 = scalar_lea.vmem [#allocation11], 1
    %v1624 = vld [vmem:[%s1623] sm:$0x1]
    %v1625 = vsel %vm538, %v1619, 0.0
    %1626 = vadd.xlane.f32.xlu0 %v1625
    %v1627 = vpop.xlane.xlu0 %1626
    %v1628 = vsel %vm538, %v1620, 0.0
    %1629 = vadd.xlane.f32.xlu0 %v1628
    %v1630 = vpop.xlane.xlu0 %1629
    %v1631 = vmul.f32 %v1627, %v960
    %v1632 = vmul.f32 %v1630, %v960
    %v1633 = vsub.f32 %v1619, %v1631
    %v1634 = vsub.f32 %v1620, %v1632
    %v1635 = vmul.f32 %v1633, %v1633
    %v1636 = vmul.f32 %v1634, %v1634
    %v1637 = vsel %vm538, %v1635, 0.0
    %1638 = vadd.xlane.f32.xlu0 %v1637
    %v1639 = vpop.xlane.xlu0 %1638
    %v1640 = vsel %vm538, %v1636, 0.0
    %1641 = vadd.xlane.f32.xlu0 %v1640
    %v1642 = vpop.xlane.xlu0 %1641
    %v1643 = vmul.f32 %v1639, %v960
    %v1644 = vmul.f32 %v1642, %v960
    %v1645 = vadd.f32 %v1643, 1e-05
    %v1646 = vadd.f32 %v1644, 1e-05
    %v1647 = vrsqrt.pop %v1645
    %v1648 = vrsqrt.pop %v1646
    %v1649 = vmul.f32 %v1633, %v1647
    %v1650 = vmul.f32 %v1634, %v1648
    %v1652 = vlaneseq
    %v1653 = vshrl.u32 %v1652, 7
    %v1654 = vsub.s32 0, %v1653
    %v1655 = vrot.slane %v1622, %v1654
    %v1657 = vmul.f32 %v1649, %v1655
    %v1658 = vmul.f32 %v1650, %v1655
    %v1660 = vlaneseq
    %v1661 = vshrl.u32 %v1660, 7
    %v1662 = vsub.s32 0, %v1661
    %v1663 = vrot.slane %v1624, %v1662
    %v1665 = vadd.f32 %v1657, %v1663
    %v1666 = vadd.f32 %v1658, %v1663
    %s1667 = scalar_lea.vmem %s25, 16
    %v1668 = vld [vmem:[%s1667] sm:$0xf]
    %v1669 = vld [vmem:[%s1667 + $0x4] sm:$0xf]
    %v1670 = vld [vmem:[%s1667 + $0x8] sm:$0xf]
    %v1671 = vld [vmem:[%s1667 + $0xc] sm:$0xf]
    %v1672 = vpack.c.bf16 %v1666, %v1665
    %s1673 = scalar_lea.vmem [#allocation12], 1
    %v1674 = vld [vmem:[%s1673] sm:$0x1]
    %v1676 = vlaneseq
    %v1677 = vshrl.u32 %v1676, 7
    %v1678 = vsub.s32 0, %v1677
    %v1679 = vrot.slane %v1674, %v1678
    %v1685 = vunpack.c.l.b16 %v1668
    %v1686 = vunpack.c.l.b16 %v1669
    %v1687 = vunpack.c.l.b16 %v1670
    %v1688 = vunpack.c.l.b16 %v1671
    %v1689 = vpack.c.b16 %v1686, %v1685
    %v1690 = vpack.c.b16 %v1688, %v1687
    %v1694 = vsel %vm538, %v1672, 0
    %1696 = vmatprep.subr.bf16.mxu0 0
    %1697 = vmatpush1.bf16.msra.mxu0 0
    %1698 = vmatprep.subr.bf16.mxu0 0
    %1699 = vmatpush1.bf16.msra.mxu0 0
    %1700 = vmatprep.subr.bf16.mxu0 0
    %1701 = vmatpush1.bf16.msra.mxu0 0
    %1702 = vmatprep.subr.bf16.mxu0 0
    %1703 = vmatpush1.bf16.msra.mxu0 0
    %1704 = vmatprep.subr.bf16.mxu0 0
    %1705 = vmatpush1.bf16.msra.mxu0 0
    %1706 = vmatprep.subr.bf16.mxu0 0
    %1707 = vmatpush1.bf16.msra.mxu0 0
    %1708 = vmatprep.subr.bf16.mxu0 0
    %1709 = vmatpush1.bf16.msra.mxu0 %v1690
    %1710 = vmatprep.subr.bf16.mxu0 0
    %1711 = vmatpush1.bf16.msra.mxu0 %v1689
    %1712 = vmatprep.subr.bf16.mxu0 0
    %1713 = vmatpush2.bf16.msra.mxu0 0
    %1714 = vmatprep.subr.bf16.mxu0 0
    %1715 = vmatpush2.bf16.msra.mxu0 0
    %1716 = vmatprep.subr.bf16.mxu0 0
    %1717 = vmatpush2.bf16.msra.mxu0 0
    %1718 = vmatprep.subr.bf16.mxu0 0
    %1719 = vmatpush2.bf16.msra.mxu0 0
    %1720 = vmatprep.subr.bf16.mxu0 0
    %1721 = vmatpush2.bf16.msra.mxu0 0
    %1722 = vmatprep.subr.bf16.mxu0 0
    %1723 = vmatpush2.bf16.msra.mxu0 0
    %1724 = vmatprep.subr.bf16.mxu0 0
    %1725 = vmatpush2.bf16.msra.mxu0 0
    %1726 = vmatprep.subr.bf16.mxu0 0
    %1727 = vmatpush2.bf16.msra.mxu0 0
    %1728 = vmatprep.mubr.bf16.mxu0 0
    %1729 = vmatmul.mubr.bf16.gmra.mxu0 %v1694
    %v1730 = vpop.f32.mrf.mxu0
    %v1731 = vadd.f32 %v1679, %v1730
    %v1732 = vpop.f32.mrf.mxu0
    %v1733 = vpop.f32.mrf.mxu0
    %v1734 = vadd.f32 %v1679, %v1733
    %v1735 = vpop.f32.mrf.mxu0
    %1736 = vdwg.mxu0
    %v1737 = vmax.f32 %v1731, 0.0
    %v1738 = vmax.f32 %v1734, 0.0
    %s1739 = scalar_lea.vmem %s29, 16
    %v1740 = vld [vmem:[%s1739] sm:$0xf]
    %v1741 = vld [vmem:[%s1739 + $0x4] sm:$0xf]
    %v1742 = vld [vmem:[%s1739 + $0x8] sm:$0xf]
    %v1743 = vld [vmem:[%s1739 + $0xc] sm:$0xf]
    %v1744 = vpack.c.bf16 %v1738, %v1737
    %s1745 = scalar_lea.vmem [#allocation14], 1
    %v1746 = vld [vmem:[%s1745] sm:$0x1]
    %v1748 = vlaneseq
    %v1749 = vshrl.u32 %v1748, 7
    %v1750 = vsub.s32 0, %v1749
    %v1751 = vrot.slane %v1746, %v1750
    %v1757 = vunpack.c.l.b16 %v1740
    %v1758 = vunpack.c.l.b16 %v1741
    %v1759 = vunpack.c.l.b16 %v1742
    %v1760 = vunpack.c.l.b16 %v1743
    %v1761 = vpack.c.b16 %v1758, %v1757
    %v1762 = vpack.c.b16 %v1760, %v1759
    %v1766 = vsel %vm538, %v1744, 0
    %1768 = vmatprep.subr.bf16.mxu0 0
    %1769 = vmatpush1.bf16.msra.mxu0 0
    %1770 = vmatprep.subr.bf16.mxu0 0
    %1771 = vmatpush1.bf16.msra.mxu0 0
    %1772 = vmatprep.subr.bf16.mxu0 0
    %1773 = vmatpush1.bf16.msra.mxu0 0
    %1774 = vmatprep.subr.bf16.mxu0 0
    %1775 = vmatpush1.bf16.msra.mxu0 0
    %1776 = vmatprep.subr.bf16.mxu0 0
    %1777 = vmatpush1.bf16.msra.mxu0 0
    %1778 = vmatprep.subr.bf16.mxu0 0
    %1779 = vmatpush1.bf16.msra.mxu0 0
    %1780 = vmatprep.subr.bf16.mxu0 0
    %1781 = vmatpush1.bf16.msra.mxu0 %v1762
    %1782 = vmatprep.subr.bf16.mxu0 0
    %1783 = vmatpush1.bf16.msra.mxu0 %v1761
    %1784 = vmatprep.subr.bf16.mxu0 0
    %1785 = vmatpush2.bf16.msra.mxu0 0
    %1786 = vmatprep.subr.bf16.mxu0 0
    %1787 = vmatpush2.bf16.msra.mxu0 0
    %1788 = vmatprep.subr.bf16.mxu0 0
    %1789 = vmatpush2.bf16.msra.mxu0 0
    %1790 = vmatprep.subr.bf16.mxu0 0
    %1791 = vmatpush2.bf16.msra.mxu0 0
    %1792 = vmatprep.subr.bf16.mxu0 0
    %1793 = vmatpush2.bf16.msra.mxu0 0
    %1794 = vmatprep.subr.bf16.mxu0 0
    %1795 = vmatpush2.bf16.msra.mxu0 0
    %1796 = vmatprep.subr.bf16.mxu0 0
    %1797 = vmatpush2.bf16.msra.mxu0 0
    %1798 = vmatprep.subr.bf16.mxu0 0
    %1799 = vmatpush2.bf16.msra.mxu0 0
    %1800 = vmatprep.mubr.bf16.mxu0 0
    %1801 = vmatmul.mubr.bf16.gmra.mxu0 %v1766
    %v1802 = vpop.f32.mrf.mxu0
    %v1803 = vadd.f32 %v1751, %v1802
    %v1804 = vpop.f32.mrf.mxu0
    %v1805 = vpop.f32.mrf.mxu0
    %v1806 = vpop.f32.mrf.mxu0
    %1807 = vdwg.mxu0
    %v1808 = vadd.f32 %v1665, %v1803
    %s1809 = scalar_lea.vmem [#allocation15], 1
    %v1810 = vld [vmem:[%s1809] sm:$0x1]
    %s1811 = scalar_lea.vmem [#allocation17], 1
    %v1812 = vld [vmem:[%s1811] sm:$0x1]
    %v1813 = vsel %vm538, %v1808, 0.0
    %1814 = vadd.xlane.f32.xlu0 %v1813
    %v1815 = vpop.xlane.xlu0 %1814
    %v1816 = vmul.f32 %v1815, %v960
    %v1817 = vsub.f32 %v1808, %v1816
    %v1818 = vmul.f32 %v1817, %v1817
    %v1819 = vsel %vm538, %v1818, 0.0
    %1820 = vadd.xlane.f32.xlu0 %v1819
    %v1821 = vpop.xlane.xlu0 %1820
    %v1822 = vmul.f32 %v1821, %v960
    %v1823 = vadd.f32 %v1822, 1e-05
    %v1824 = vrsqrt.pop %v1823
    %v1825 = vmul.f32 %v1817, %v1824
    %v1827 = vlaneseq
    %v1828 = vshrl.u32 %v1827, 7
    %v1829 = vsub.s32 0, %v1828
    %v1830 = vrot.slane %v1810, %v1829
    %v1832 = vmul.f32 %v1825, %v1830
    %v1834 = vlaneseq
    %v1835 = vshrl.u32 %v1834, 7
    %v1836 = vsub.s32 0, %v1835
    %v1837 = vrot.slane %v1812, %v1836
    %v1839 = vadd.f32 %v1832, %v1837
    %v1840 = vld [vmem:[%s37] sm:$0xf]
    %v1841 = vld [vmem:[%s37 + $0x4] sm:$0xf]
    %v1842 = vld [vmem:[%s37 + $0x8] sm:$0xf]
    %v1843 = vld [vmem:[%s37 + $0xc] sm:$0xf]
    %v1844 = vpack.c.bf16 %v1839, %v1839
    %v1845 = vld [vmem:[%s39] sm:$0x1]
    %v1847 = vlaneseq
    %v1848 = vshrl.u32 %v1847, 7
    %v1849 = vsub.s32 0, %v1848
    %v1850 = vrot.slane %v1845, %v1849
    %v1856 = vunpack.c.l.b16 %v1840
    %v1857 = vunpack.c.l.b16 %v1841
    %v1858 = vunpack.c.l.b16 %v1842
    %v1859 = vunpack.c.l.b16 %v1843
    %v1860 = vpack.c.b16 %v1857, %v1856
    %v1861 = vpack.c.b16 %v1859, %v1858
    %v1865 = vsel %vm538, %v1844, 0
    %1867 = vmatprep.subr.bf16.mxu0 0
    %1868 = vmatpush1.bf16.msra.mxu0 0
    %1869 = vmatprep.subr.bf16.mxu0 0
    %1870 = vmatpush1.bf16.msra.mxu0 0
    %1871 = vmatprep.subr.bf16.mxu0 0
    %1872 = vmatpush1.bf16.msra.mxu0 0
    %1873 = vmatprep.subr.bf16.mxu0 0
    %1874 = vmatpush1.bf16.msra.mxu0 0
    %1875 = vmatprep.subr.bf16.mxu0 0
    %1876 = vmatpush1.bf16.msra.mxu0 0
    %1877 = vmatprep.subr.bf16.mxu0 0
    %1878 = vmatpush1.bf16.msra.mxu0 0
    %1879 = vmatprep.subr.bf16.mxu0 0
    %1880 = vmatpush1.bf16.msra.mxu0 %v1861
    %1881 = vmatprep.subr.bf16.mxu0 0
    %1882 = vmatpush1.bf16.msra.mxu0 %v1860
    %1883 = vmatprep.subr.bf16.mxu0 0
    %1884 = vmatpush2.bf16.msra.mxu0 0
    %1885 = vmatprep.subr.bf16.mxu0 0
    %1886 = vmatpush2.bf16.msra.mxu0 0
    %1887 = vmatprep.subr.bf16.mxu0 0
    %1888 = vmatpush2.bf16.msra.mxu0 0
    %1889 = vmatprep.subr.bf16.mxu0 0
    %1890 = vmatpush2.bf16.msra.mxu0 0
    %1891 = vmatprep.subr.bf16.mxu0 0
    %1892 = vmatpush2.bf16.msra.mxu0 0
    %1893 = vmatprep.subr.bf16.mxu0 0
    %1894 = vmatpush2.bf16.msra.mxu0 0
    %1895 = vmatprep.subr.bf16.mxu0 0
    %1896 = vmatpush2.bf16.msra.mxu0 0
    %1897 = vmatprep.subr.bf16.mxu0 0
    %1898 = vmatpush2.bf16.msra.mxu0 0
    %1899 = vmatprep.mubr.bf16.mxu0 0
    %1900 = vmatmul.mubr.bf16.gmra.mxu0 %v1865
    %v1901 = vpop.f32.mrf.mxu0
    %v1902 = vadd.f32 %v1850, %v1901
    %v1903 = vpop.f32.mrf.mxu0
    %v1904 = vpop.f32.mrf.mxu0
    %v1905 = vpop.f32.mrf.mxu0
    %1906 = vdwg.mxu0
    %v1907 = vmax.f32 %v1902, 0.0
    %v1908 = vld [vmem:[%s41] sm:$0xf]
    %v1909 = vld [vmem:[%s41 + $0x4] sm:$0xf]
    %v1910 = vld [vmem:[%s41 + $0x8] sm:$0xf]
    %v1911 = vld [vmem:[%s41 + $0xc] sm:$0xf]
    %v1912 = vld [vmem:[%s41 + $0x10] sm:$0xf]
    %v1913 = vld [vmem:[%s41 + $0x14] sm:$0xf]
    %v1914 = vld [vmem:[%s41 + $0x18] sm:$0xf]
    %v1915 = vld [vmem:[%s41 + $0x1c] sm:$0xf]
    %v1916 = vpack.c.bf16 %v1907, %v1907
    %v1917 = vld [vmem:[#allocation18] sm:$0x1]
    %v1919 = vlaneseq
    %v1920 = vshrl.u32 %v1919, 7
    %v1921 = vsub.s32 0, %v1920
    %v1922 = vrot.slane %v1917, %v1921
    %v1932 = vunpack.c.l.b16 %v1908
    %v1933 = vunpack.c.l.b16 %v1909
    %v1934 = vunpack.c.l.b16 %v1910
    %v1935 = vunpack.c.l.b16 %v1911
    %v1936 = vunpack.c.l.b16 %v1912
    %v1937 = vunpack.c.l.b16 %v1913
    %v1938 = vunpack.c.l.b16 %v1914
    %v1939 = vunpack.c.l.b16 %v1915
    %v1940 = vpack.c.b16 %v1933, %v1932
    %v1941 = vpack.c.b16 %v1935, %v1934
    %v1942 = vpack.c.b16 %v1937, %v1936
    %v1943 = vpack.c.b16 %v1939, %v1938
    %v1949 = vsel %vm440, %v1916, 0
    %1951 = vmatprep.subr.bf16.mxu0 0
    %1952 = vmatpush1.bf16.msra.mxu0 0
    %1953 = vmatprep.subr.bf16.mxu0 0
    %1954 = vmatpush1.bf16.msra.mxu0 0
    %1955 = vmatprep.subr.bf16.mxu0 0
    %1956 = vmatpush1.bf16.msra.mxu0 0
    %1957 = vmatprep.subr.bf16.mxu0 0
    %1958 = vmatpush1.bf16.msra.mxu0 0
    %1959 = vmatprep.subr.bf16.mxu0 0
    %1960 = vmatpush1.bf16.msra.mxu0 %v1943
    %1961 = vmatprep.subr.bf16.mxu0 0
    %1962 = vmatpush1.bf16.msra.mxu0 %v1942
    %1963 = vmatprep.subr.bf16.mxu0 0
    %1964 = vmatpush1.bf16.msra.mxu0 %v1941
    %1965 = vmatprep.subr.bf16.mxu0 0
    %1966 = vmatpush1.bf16.msra.mxu0 %v1940
    %1967 = vmatprep.subr.bf16.mxu0 0
    %1968 = vmatpush2.bf16.msra.mxu0 0
    %1969 = vmatprep.subr.bf16.mxu0 0
    %1970 = vmatpush2.bf16.msra.mxu0 0
    %1971 = vmatprep.subr.bf16.mxu0 0
    %1972 = vmatpush2.bf16.msra.mxu0 0
    %1973 = vmatprep.subr.bf16.mxu0 0
    %1974 = vmatpush2.bf16.msra.mxu0 0
    %1975 = vmatprep.subr.bf16.mxu0 0
    %1976 = vmatpush2.bf16.msra.mxu0 0
    %1977 = vmatprep.subr.bf16.mxu0 0
    %1978 = vmatpush2.bf16.msra.mxu0 0
    %1979 = vmatprep.subr.bf16.mxu0 0
    %1980 = vmatpush2.bf16.msra.mxu0 0
    %1981 = vmatprep.subr.bf16.mxu0 0
    %1982 = vmatpush2.bf16.msra.mxu0 0
    %1983 = vmatprep.mubr.bf16.mxu0 0
    %1984 = vmatmul.mubr.bf16.gmra.mxu0 %v1949
    %v1985 = vpop.f32.mrf.mxu0
    %v1986 = vadd.f32 %v1922, %v1985
    %v1987 = vpop.f32.mrf.mxu0
    %v1988 = vpop.f32.mrf.mxu0
    %v1989 = vpop.f32.mrf.mxu0
    %1990 = vdwg.mxu0
    %v1991 = vmax.f32 %v1986, 0.0
    %v1992 = vld [vmem:[#allocation20] sm:$0xf]
    %v1993 = vld [vmem:[#allocation20 + $0x4] sm:$0xf]
    %v1994 = vpack.c.bf16 %v1991, %v1991
    %v1995 = vld [vmem:[#allocation21] sm:$0x1]
    %v1997 = vlaneseq
    %v1998 = vshrl.u32 %v1997, 7
    %v1999 = vsub.s32 0, %v1998
    %v2000 = vrot.slane %v1995, %v1999
    %v2004 = vunpack.c.l.b16 %v1992
    %v2005 = vunpack.c.l.b16 %v1993
    %v2006 = vpack.c.b16 %v2005, %v2004
    %v2009 = vsel %vm587, %v1994, 0
    %2011 = vmatprep.subr.bf16.mxu0 0
    %2012 = vmatpush1.bf16.msra.mxu0 0
    %2013 = vmatprep.subr.bf16.mxu0 0
    %2014 = vmatpush1.bf16.msra.mxu0 0
    %2015 = vmatprep.subr.bf16.mxu0 0
    %2016 = vmatpush1.bf16.msra.mxu0 0
    %2017 = vmatprep.subr.bf16.mxu0 0
    %2018 = vmatpush1.bf16.msra.mxu0 0
    %2019 = vmatprep.subr.bf16.mxu0 0
    %2020 = vmatpush1.bf16.msra.mxu0 0
    %2021 = vmatprep.subr.bf16.mxu0 0
    %2022 = vmatpush1.bf16.msra.mxu0 0
    %2023 = vmatprep.subr.bf16.mxu0 0
    %2024 = vmatpush1.bf16.msra.mxu0 0
    %2025 = vmatprep.subr.bf16.mxu0 0
    %2026 = vmatpush1.bf16.msra.mxu0 %v2006
    %2027 = vmatprep.subr.bf16.mxu0 0
    %2028 = vmatpush2.bf16.msra.mxu0 0
    %2029 = vmatprep.subr.bf16.mxu0 0
    %2030 = vmatpush2.bf16.msra.mxu0 0
    %2031 = vmatprep.subr.bf16.mxu0 0
    %2032 = vmatpush2.bf16.msra.mxu0 0
    %2033 = vmatprep.subr.bf16.mxu0 0
    %2034 = vmatpush2.bf16.msra.mxu0 0
    %2035 = vmatprep.subr.bf16.mxu0 0
    %2036 = vmatpush2.bf16.msra.mxu0 0
    %2037 = vmatprep.subr.bf16.mxu0 0
    %2038 = vmatpush2.bf16.msra.mxu0 0
    %2039 = vmatprep.subr.bf16.mxu0 0
    %2040 = vmatpush2.bf16.msra.mxu0 0
    %2041 = vmatprep.subr.bf16.mxu0 0
    %2042 = vmatpush2.bf16.msra.mxu0 0
    %2043 = vmatprep.mubr.bf16.mxu0 0
    %2044 = vmatmul.mubr.bf16.gmra.mxu0 %v2009
    %v2045 = vpop.f32.mrf.mxu0
    %v2046 = vadd.f32 %v2000, %v2045
    %v2047 = vpop.f32.mrf.mxu0
    %v2048 = vpop.f32.mrf.mxu0
    %v2049 = vpop.f32.mrf.mxu0
    %2050 = vdwg.mxu0
    %2051 = vst [vmem:[#allocation33] sm:$0xf] %v2046
    %v2052 = vld [vmem:[%s5] sm:$0xf]
    %v2053 = vld [vmem:[%s5 + $0x4] sm:$0x3]
    %v2054 = vld [vmem:[%s49] sm:$0xf]
    %v2055 = vld [vmem:[%s49 + $0x4] sm:$0xf]
    %v2056 = vld [vmem:[%s49 + $0x8] sm:$0xf]
    %v2057 = vld [vmem:[%s49 + $0xc] sm:$0xf]
    %v2058 = vld [vmem:[%s49 + $0x10] sm:$0xf]
    %v2059 = vld [vmem:[%s49 + $0x14] sm:$0xf]
    %v2060 = vld [vmem:[%s49 + $0x18] sm:$0xf]
    %v2061 = vld [vmem:[%s49 + $0x1c] sm:$0xf]
    %v2062 = vld [vmem:[#allocation23] sm:$0x1]
    %v2064 = vlaneseq
    %v2065 = vshrl.u32 %v2064, 7
    %v2066 = vsub.s32 0, %v2065
    %v2067 = vrot.slane %v2062, %v2066
    %v2071 = vunpack.c.l.b16 %v2052
    %v2072 = vunpack.c.l.b16 %v2053
    %v2073 = vpack.c.b16 %v2072, %v2071
    %v2082 = vunpack.c.l.b16 %v2054
    %v2083 = vunpack.c.l.b16 %v2055
    %v2084 = vunpack.c.l.b16 %v2056
    %v2085 = vunpack.c.l.b16 %v2057
    %v2086 = vunpack.c.l.b16 %v2058
    %v2087 = vunpack.c.l.b16 %v2059
    %v2088 = vunpack.c.l.b16 %v2060
    %v2089 = vunpack.c.l.b16 %v2061
    %v2090 = vpack.c.b16 %v2083, %v2082
    %v2091 = vpack.c.b16 %v2085, %v2084
    %v2092 = vpack.c.b16 %v2087, %v2086
    %v2093 = vpack.c.b16 %v2089, %v2088
    %v2099 = vsel %vm440, %v2073, 0
    %2101 = vmatprep.subr.bf16.mxu0 0
    %2102 = vmatpush1.bf16.msra.mxu0 0
    %2103 = vmatprep.subr.bf16.mxu0 0
    %2104 = vmatpush1.bf16.msra.mxu0 0
    %2105 = vmatprep.subr.bf16.mxu0 0
    %2106 = vmatpush1.bf16.msra.mxu0 0
    %2107 = vmatprep.subr.bf16.mxu0 0
    %2108 = vmatpush1.bf16.msra.mxu0 0
    %2109 = vmatprep.subr.bf16.mxu0 0
    %2110 = vmatpush1.bf16.msra.mxu0 %v2093
    %2111 = vmatprep.subr.bf16.mxu0 0
    %2112 = vmatpush1.bf16.msra.mxu0 %v2092
    %2113 = vmatprep.subr.bf16.mxu0 0
    %2114 = vmatpush1.bf16.msra.mxu0 %v2091
    %2115 = vmatprep.subr.bf16.mxu0 0
    %2116 = vmatpush1.bf16.msra.mxu0 %v2090
    %2117 = vmatprep.subr.bf16.mxu0 0
    %2118 = vmatpush2.bf16.msra.mxu0 0
    %2119 = vmatprep.subr.bf16.mxu0 0
    %2120 = vmatpush2.bf16.msra.mxu0 0
    %2121 = vmatprep.subr.bf16.mxu0 0
    %2122 = vmatpush2.bf16.msra.mxu0 0
    %2123 = vmatprep.subr.bf16.mxu0 0
    %2124 = vmatpush2.bf16.msra.mxu0 0
    %2125 = vmatprep.subr.bf16.mxu0 0
    %2126 = vmatpush2.bf16.msra.mxu0 0
    %2127 = vmatprep.subr.bf16.mxu0 0
    %2128 = vmatpush2.bf16.msra.mxu0 0
    %2129 = vmatprep.subr.bf16.mxu0 0
    %2130 = vmatpush2.bf16.msra.mxu0 0
    %2131 = vmatprep.subr.bf16.mxu0 0
    %2132 = vmatpush2.bf16.msra.mxu0 0
    %2133 = vmatprep.mubr.bf16.mxu0 0
    %2134 = vmatmul.mubr.bf16.gmra.mxu0 %v2099
    %v2135 = vpop.f32.mrf.mxu0
    %v2136 = vadd.f32 %v2067, %v2135
    %v2137 = vpop.f32.mrf.mxu0
    %v2138 = vpop.f32.mrf.mxu0
    %v2139 = vadd.f32 %v2067, %v2138
    %v2140 = vpop.f32.mrf.mxu0
    %2141 = vdwg.mxu0
    %v2142 = vmax.f32 %v2136, 0.0
    %v2143 = vmax.f32 %v2139, 0.0
    %v2144 = vld [vmem:[#allocation24] sm:$0xf]
    %v2145 = vld [vmem:[#allocation24 + $0x4] sm:$0xf]
    %v2146 = vld [vmem:[#allocation24 + $0x8] sm:$0xf]
    %v2147 = vld [vmem:[#allocation24 + $0xc] sm:$0xf]
    %v2148 = vpack.c.bf16 %v2143, %v2142
    %v2149 = vld [vmem:[#allocation26] sm:$0x1]
    %v2151 = vlaneseq
    %v2152 = vshrl.u32 %v2151, 7
    %v2153 = vsub.s32 0, %v2152
    %v2154 = vrot.slane %v2149, %v2153
    %v2160 = vunpack.c.l.b16 %v2144
    %v2161 = vunpack.c.l.b16 %v2145
    %v2162 = vunpack.c.l.b16 %v2146
    %v2163 = vunpack.c.l.b16 %v2147
    %v2164 = vpack.c.b16 %v2161, %v2160
    %v2165 = vpack.c.b16 %v2163, %v2162
    %v2169 = vsel %vm538, %v2148, 0
    %2171 = vmatprep.subr.bf16.mxu0 0
    %2172 = vmatpush1.bf16.msra.mxu0 0
    %2173 = vmatprep.subr.bf16.mxu0 0
    %2174 = vmatpush1.bf16.msra.mxu0 0
    %2175 = vmatprep.subr.bf16.mxu0 0
    %2176 = vmatpush1.bf16.msra.mxu0 0
    %2177 = vmatprep.subr.bf16.mxu0 0
    %2178 = vmatpush1.bf16.msra.mxu0 0
    %2179 = vmatprep.subr.bf16.mxu0 0
    %2180 = vmatpush1.bf16.msra.mxu0 0
    %2181 = vmatprep.subr.bf16.mxu0 0
    %2182 = vmatpush1.bf16.msra.mxu0 0
    %2183 = vmatprep.subr.bf16.mxu0 0
    %2184 = vmatpush1.bf16.msra.mxu0 %v2165
    %2185 = vmatprep.subr.bf16.mxu0 0
    %2186 = vmatpush1.bf16.msra.mxu0 %v2164
    %2187 = vmatprep.subr.bf16.mxu0 0
    %2188 = vmatpush2.bf16.msra.mxu0 0
    %2189 = vmatprep.subr.bf16.mxu0 0
    %2190 = vmatpush2.bf16.msra.mxu0 0
    %2191 = vmatprep.subr.bf16.mxu0 0
    %2192 = vmatpush2.bf16.msra.mxu0 0
    %2193 = vmatprep.subr.bf16.mxu0 0
    %2194 = vmatpush2.bf16.msra.mxu0 0
    %2195 = vmatprep.subr.bf16.mxu0 0
    %2196 = vmatpush2.bf16.msra.mxu0 0
    %2197 = vmatprep.subr.bf16.mxu0 0
    %2198 = vmatpush2.bf16.msra.mxu0 0
    %2199 = vmatprep.subr.bf16.mxu0 0
    %2200 = vmatpush2.bf16.msra.mxu0 0
    %2201 = vmatprep.subr.bf16.mxu0 0
    %2202 = vmatpush2.bf16.msra.mxu0 0
    %2203 = vmatprep.mubr.bf16.mxu0 0
    %2204 = vmatmul.mubr.bf16.gmra.mxu0 %v2169
    %v2205 = vpop.f32.mrf.mxu0
    %v2206 = vadd.f32 %v2154, %v2205
    %v2207 = vpop.f32.mrf.mxu0
    %v2208 = vpop.f32.mrf.mxu0
    %v2209 = vadd.f32 %v2154, %v2208
    %v2210 = vpop.f32.mrf.mxu0
    %2211 = vdwg.mxu0
    %v2212 = vld [vmem:[#allocation27] sm:$0xf]
    %v2213 = vld [vmem:[#allocation27 + $0x4] sm:$0xf]
    %v2214 = vld [vmem:[#allocation27 + $0x8] sm:$0xf]
    %v2215 = vld [vmem:[#allocation27 + $0xc] sm:$0xf]
    %v2216 = vpack.c.bf16 %v2209, %v2206
    %v2217 = vld [vmem:[%s59] sm:$0x1]
    %v2219 = vlaneseq
    %v2220 = vshrl.u32 %v2219, 7
    %v2221 = vsub.s32 0, %v2220
    %v2222 = vrot.slane %v2217, %v2221
    %v2228 = vunpack.c.l.b16 %v2212
    %v2229 = vunpack.c.l.b16 %v2213
    %v2230 = vunpack.c.l.b16 %v2214
    %v2231 = vunpack.c.l.b16 %v2215
    %v2232 = vpack.c.b16 %v2229, %v2228
    %v2233 = vpack.c.b16 %v2231, %v2230
    %v2237 = vsel %vm538, %v2216, 0
    %2239 = vmatprep.subr.bf16.mxu0 0
    %2240 = vmatpush1.bf16.msra.mxu0 0
    %2241 = vmatprep.subr.bf16.mxu0 0
    %2242 = vmatpush1.bf16.msra.mxu0 0
    %2243 = vmatprep.subr.bf16.mxu0 0
    %2244 = vmatpush1.bf16.msra.mxu0 0
    %2245 = vmatprep.subr.bf16.mxu0 0
    %2246 = vmatpush1.bf16.msra.mxu0 0
    %2247 = vmatprep.subr.bf16.mxu0 0
    %2248 = vmatpush1.bf16.msra.mxu0 0
    %2249 = vmatprep.subr.bf16.mxu0 0
    %2250 = vmatpush1.bf16.msra.mxu0 0
    %2251 = vmatprep.subr.bf16.mxu0 0
    %2252 = vmatpush1.bf16.msra.mxu0 %v2233
    %2253 = vmatprep.subr.bf16.mxu0 0
    %2254 = vmatpush1.bf16.msra.mxu0 %v2232
    %2255 = vmatprep.subr.bf16.mxu0 0
    %2256 = vmatpush2.bf16.msra.mxu0 0
    %2257 = vmatprep.subr.bf16.mxu0 0
    %2258 = vmatpush2.bf16.msra.mxu0 0
    %2259 = vmatprep.subr.bf16.mxu0 0
    %2260 = vmatpush2.bf16.msra.mxu0 0
    %2261 = vmatprep.subr.bf16.mxu0 0
    %2262 = vmatpush2.bf16.msra.mxu0 0
    %2263 = vmatprep.subr.bf16.mxu0 0
    %2264 = vmatpush2.bf16.msra.mxu0 0
    %2265 = vmatprep.subr.bf16.mxu0 0
    %2266 = vmatpush2.bf16.msra.mxu0 0
    %2267 = vmatprep.subr.bf16.mxu0 0
    %2268 = vmatpush2.bf16.msra.mxu0 0
    %2269 = vmatprep.subr.bf16.mxu0 0
    %2270 = vmatpush2.bf16.msra.mxu0 0
    %2271 = vmatprep.mubr.bf16.mxu0 0
    %2272 = vmatmul.mubr.bf16.gmra.mxu0 %v2237
    %v2273 = vpop.f32.mrf.mxu0
    %v2274 = vadd.f32 %v2222, %v2273
    %v2275 = vpop.f32.mrf.mxu0
    %v2276 = vpop.f32.mrf.mxu0
    %v2277 = vadd.f32 %v2222, %v2276
    %v2278 = vpop.f32.mrf.mxu0
    %2279 = vdwg.mxu0
    %v2280 = vld [vmem:[#allocation29] sm:$0xf]
    %v2281 = vld [vmem:[#allocation29 + $0x4] sm:$0xf]
    %v2282 = vld [vmem:[#allocation29 + $0x8] sm:$0xf]
    %v2283 = vld [vmem:[#allocation29 + $0xc] sm:$0xf]
    %v2284 = vld [vmem:[%s63] sm:$0x1]
    %v2286 = vlaneseq
    %v2287 = vshrl.u32 %v2286, 7
    %v2288 = vsub.s32 0, %v2287
    %v2289 = vrot.slane %v2284, %v2288
    %v2295 = vunpack.c.l.b16 %v2280
    %v2296 = vunpack.c.l.b16 %v2281
    %v2297 = vunpack.c.l.b16 %v2282
    %v2298 = vunpack.c.l.b16 %v2283
    %v2299 = vpack.c.b16 %v2296, %v2295
    %v2300 = vpack.c.b16 %v2298, %v2297
    %2303 = vmatprep.subr.bf16.mxu0 0
    %2304 = vmatpush1.bf16.msra.mxu0 0
    %2305 = vmatprep.subr.bf16.mxu0 0
    %2306 = vmatpush1.bf16.msra.mxu0 0
    %2307 = vmatprep.subr.bf16.mxu0 0
    %2308 = vmatpush1.bf16.msra.mxu0 0
    %2309 = vmatprep.subr.bf16.mxu0 0
    %2310 = vmatpush1.bf16.msra.mxu0 0
    %2311 = vmatprep.subr.bf16.mxu0 0
    %2312 = vmatpush1.bf16.msra.mxu0 0
    %2313 = vmatprep.subr.bf16.mxu0 0
    %2314 = vmatpush1.bf16.msra.mxu0 0
    %2315 = vmatprep.subr.bf16.mxu0 0
    %2316 = vmatpush1.bf16.msra.mxu0 %v2300
    %2317 = vmatprep.subr.bf16.mxu0 0
    %2318 = vmatpush1.bf16.msra.mxu0 %v2299
    %2319 = vmatprep.subr.bf16.mxu0 0
    %2320 = vmatpush2.bf16.msra.mxu0 0
    %2321 = vmatprep.subr.bf16.mxu0 0
    %2322 = vmatpush2.bf16.msra.mxu0 0
    %2323 = vmatprep.subr.bf16.mxu0 0
    %2324 = vmatpush2.bf16.msra.mxu0 0
    %2325 = vmatprep.subr.bf16.mxu0 0
    %2326 = vmatpush2.bf16.msra.mxu0 0
    %2327 = vmatprep.subr.bf16.mxu0 0
    %2328 = vmatpush2.bf16.msra.mxu0 0
    %2329 = vmatprep.subr.bf16.mxu0 0
    %2330 = vmatpush2.bf16.msra.mxu0 0
    %2331 = vmatprep.subr.bf16.mxu0 0
    %2332 = vmatpush2.bf16.msra.mxu0 0
    %2333 = vmatprep.subr.bf16.mxu0 0
    %2334 = vmatpush2.bf16.msra.mxu0 0
    %2335 = vmatprep.mubr.bf16.mxu0 0
    %2336 = vmatmul.mubr.bf16.gmra.mxu0 %v1865
    %v2337 = vpop.f32.mrf.mxu0
    %v2338 = vadd.f32 %v2289, %v2337
    %v2339 = vpop.f32.mrf.mxu0
    %v2340 = vpop.f32.mrf.mxu0
    %v2341 = vpop.f32.mrf.mxu0
    %2342 = vdwg.mxu0
    %v2343 = vadd.f32 %v2274, %v2338
    %v2344 = vxor.u32 %v2343, 2147483648
    %v2345 = vmul.f32 %v2344, 1.442695
    %v2346 = vpow.pop %v2345
    %v2347 = vadd.f32 %v2346, 1.0
    %v2348 = vrcp.pop %v2347
    %v2349 = vmul.f32 1.0, %v2348
    %2351 = vrot.lane.b32.xlu0 %v2338, 64
    %v2352 = vpop.permute.xlu0 %2351
    %v2354 = vmul.f32 %v2349, %v2352
    %2356 = vrot.lane.b32.xlu0 %v2354, 64
    %v2357 = vpop.permute.xlu0 %2356
    %v2359 = vadd.f32 %v2274, %v2357
    %v2360 = vtanh.pop %v2359
    %v2361 = vsub.f32 1.0, %v2349
    %2363 = vrot.lane.b32.xlu0 %v2360, 96
    %v2364 = vpop.permute.xlu0 %2363
    %v2366 = vmul.f32 %v2361, %v2364
    %2368 = vrot.lane.b32.xlu0 %v1839, 32
    %v2369 = vpop.permute.xlu0 %2368
    %v2371 = vmul.f32 %v2349, %v2369
    %v2372 = vadd.f32 %v2366, %v2371
    %2374 = vrot.lane.b32.xlu0 %v2372, 96
    %v2375 = vpop.permute.xlu0 %2374
    %vm2377 = vcmask 257024
    %2378 = vst.msk [vmem:[#allocation2] sm:$0xf] %vm2377, %v2375
    %v2379 = vld [vmem:[#allocation29] sm:$0xf]
    %v2380 = vld [vmem:[#allocation29 + $0x4] sm:$0xf]
    %v2381 = vld [vmem:[#allocation29 + $0x8] sm:$0xf]
    %v2382 = vld [vmem:[#allocation29 + $0xc] sm:$0xf]
    %v2383 = vpack.c.bf16 %v2372, %v2372
    %v2384 = vld [vmem:[%s63] sm:$0x1]
    %v2386 = vlaneseq
    %v2387 = vshrl.u32 %v2386, 7
    %v2388 = vsub.s32 0, %v2387
    %v2389 = vrot.slane %v2384, %v2388
    %2392 = vrot.lane.b32.xlu0 %v2383, 96
    %v2393 = vpop.permute.xlu0 %2392
    %v2398 = vunpack.c.l.b16 %v2379
    %v2399 = vunpack.c.l.b16 %v2380
    %v2400 = vunpack.c.l.b16 %v2381
    %v2401 = vunpack.c.l.b16 %v2382
    %v2402 = vpack.c.b16 %v2399, %v2398
    %v2403 = vpack.c.b16 %v2401, %v2400
    %v2407 = vsel %vm538, %v2393, 0
    %2409 = vmatprep.subr.bf16.mxu0 0
    %2410 = vmatpush1.bf16.msra.mxu0 0
    %2411 = vmatprep.subr.bf16.mxu0 0
    %2412 = vmatpush1.bf16.msra.mxu0 0
    %2413 = vmatprep.subr.bf16.mxu0 0
    %2414 = vmatpush1.bf16.msra.mxu0 0
    %2415 = vmatprep.subr.bf16.mxu0 0
    %2416 = vmatpush1.bf16.msra.mxu0 0
    %2417 = vmatprep.subr.bf16.mxu0 0
    %2418 = vmatpush1.bf16.msra.mxu0 0
    %2419 = vmatprep.subr.bf16.mxu0 0
    %2420 = vmatpush1.bf16.msra.mxu0 0
    %2421 = vmatprep.subr.bf16.mxu0 0
    %2422 = vmatpush1.bf16.msra.mxu0 %v2403
    %2423 = vmatprep.subr.bf16.mxu0 0
    %2424 = vmatpush1.bf16.msra.mxu0 %v2402
    %2425 = vmatprep.subr.bf16.mxu0 0
    %2426 = vmatpush2.bf16.msra.mxu0 0
    %2427 = vmatprep.subr.bf16.mxu0 0
    %2428 = vmatpush2.bf16.msra.mxu0 0
    %2429 = vmatprep.subr.bf16.mxu0 0
    %2430 = vmatpush2.bf16.msra.mxu0 0
    %2431 = vmatprep.subr.bf16.mxu0 0
    %2432 = vmatpush2.bf16.msra.mxu0 0
    %2433 = vmatprep.subr.bf16.mxu0 0
    %2434 = vmatpush2.bf16.msra.mxu0 0
    %2435 = vmatprep.subr.bf16.mxu0 0
    %2436 = vmatpush2.bf16.msra.mxu0 0
    %2437 = vmatprep.subr.bf16.mxu0 0
    %2438 = vmatpush2.bf16.msra.mxu0 0
    %2439 = vmatprep.subr.bf16.mxu0 0
    %2440 = vmatpush2.bf16.msra.mxu0 0
    %2441 = vmatprep.mubr.bf16.mxu0 0
    %2442 = vmatmul.mubr.bf16.gmra.mxu0 %v2407
    %v2443 = vpop.f32.mrf.mxu0
    %v2444 = vadd.f32 %v2389, %v2443
    %v2445 = vpop.f32.mrf.mxu0
    %v2446 = vpop.f32.mrf.mxu0
    %v2447 = vpop.f32.mrf.mxu0
    %2448 = vdwg.mxu0
    %v2450 = vrot.slane %v2444, 4
    %v2452 = vadd.f32 %v2274, %v2450
    %v2453 = vxor.u32 %v2452, 2147483648
    %v2454 = vmul.f32 %v2453, 1.442695
    %v2455 = vpow.pop %v2454
    %v2456 = vadd.f32 %v2455, 1.0
    %v2457 = vrcp.pop %v2456
    %v2458 = vmul.f32 1.0, %v2457
    %2459 = vrot.lane.b32.xlu0 %v2450, 64
    %v2460 = vpop.permute.xlu0 %2459
    %v2462 = vmul.f32 %v2458, %v2460
    %2464 = vrot.lane.b32.xlu0 %v2462, 64
    %v2465 = vpop.permute.xlu0 %2464
    %v2467 = vadd.f32 %v2274, %v2465
    %v2468 = vtanh.pop %v2467
    %v2469 = vsub.f32 1.0, %v2458
    %2471 = vrot.lane.b32.xlu0 %v2468, 96
    %v2472 = vpop.permute.xlu0 %2471
    %v2474 = vmul.f32 %v2469, %v2472
    %v2475 = vrot.slane %v2372, 4
    %v2477 = vmul.f32 %v2458, %v2475
    %v2478 = vadd.f32 %v2474, %v2477
    %2480 = vrot.lane.b32.xlu0 %v2478, 96
    %v2481 = vpop.permute.xlu0 %2480
    %vm2483 = vcmask 261124
    %2484 = vst.msk [vmem:[#allocation2] sm:$0xf0] %vm2483, %v2481
    %v2485 = vld [vmem:[#allocation29] sm:$0xf]
    %v2486 = vld [vmem:[#allocation29 + $0x4] sm:$0xf]
    %v2487 = vld [vmem:[#allocation29 + $0x8] sm:$0xf]
    %v2488 = vld [vmem:[#allocation29 + $0xc] sm:$0xf]
    %v2489 = vpack.c.bf16 %v2478, %v2478
    %v2490 = vld [vmem:[%s63] sm:$0x1]
    %v2492 = vlaneseq
    %v2493 = vshrl.u32 %v2492, 7
    %v2494 = vsub.s32 0, %v2493
    %v2495 = vrot.slane %v2490, %v2494
    %v2498 = vrot.slane %v2489, 2
    %2499 = vrot.lane.b32.xlu0 %v2498, 96
    %v2500 = vpop.permute.xlu0 %2499
    %v2505 = vunpack.c.l.b16 %v2485
    %v2506 = vunpack.c.l.b16 %v2486
    %v2507 = vunpack.c.l.b16 %v2487
    %v2508 = vunpack.c.l.b16 %v2488
    %v2509 = vpack.c.b16 %v2506, %v2505
    %v2510 = vpack.c.b16 %v2508, %v2507
    %v2514 = vsel %vm538, %v2500, 0
    %2516 = vmatprep.subr.bf16.mxu0 0
    %2517 = vmatpush1.bf16.msra.mxu0 0
    %2518 = vmatprep.subr.bf16.mxu0 0
    %2519 = vmatpush1.bf16.msra.mxu0 0
    %2520 = vmatprep.subr.bf16.mxu0 0
    %2521 = vmatpush1.bf16.msra.mxu0 0
    %2522 = vmatprep.subr.bf16.mxu0 0
    %2523 = vmatpush1.bf16.msra.mxu0 0
    %2524 = vmatprep.subr.bf16.mxu0 0
    %2525 = vmatpush1.bf16.msra.mxu0 0
    %2526 = vmatprep.subr.bf16.mxu0 0
    %2527 = vmatpush1.bf16.msra.mxu0 0
    %2528 = vmatprep.subr.bf16.mxu0 0
    %2529 = vmatpush1.bf16.msra.mxu0 %v2510
    %2530 = vmatprep.subr.bf16.mxu0 0
    %2531 = vmatpush1.bf16.msra.mxu0 %v2509
    %2532 = vmatprep.subr.bf16.mxu0 0
    %2533 = vmatpush2.bf16.msra.mxu0 0
    %2534 = vmatprep.subr.bf16.mxu0 0
    %2535 = vmatpush2.bf16.msra.mxu0 0
    %2536 = vmatprep.subr.bf16.mxu0 0
    %2537 = vmatpush2.bf16.msra.mxu0 0
    %2538 = vmatprep.subr.bf16.mxu0 0
    %2539 = vmatpush2.bf16.msra.mxu0 0
    %2540 = vmatprep.subr.bf16.mxu0 0
    %2541 = vmatpush2.bf16.msra.mxu0 0
    %2542 = vmatprep.subr.bf16.mxu0 0
    %2543 = vmatpush2.bf16.msra.mxu0 0
    %2544 = vmatprep.subr.bf16.mxu0 0
    %2545 = vmatpush2.bf16.msra.mxu0 0
    %2546 = vmatprep.subr.bf16.mxu0 0
    %2547 = vmatpush2.bf16.msra.mxu0 0
    %2548 = vmatprep.mubr.bf16.mxu0 0
    %2549 = vmatmul.mubr.bf16.gmra.mxu0 %v2514
    %v2550 = vpop.f32.mrf.mxu0
    %v2551 = vadd.f32 %v2495, %v2550
    %v2552 = vpop.f32.mrf.mxu0
    %v2553 = vpop.f32.mrf.mxu0
    %v2554 = vpop.f32.mrf.mxu0
    %2555 = vdwg.mxu0
    %v2556 = vadd.f32 %v2277, %v2551
    %v2557 = vxor.u32 %v2556, 2147483648
    %v2558 = vmul.f32 %v2557, 1.442695
    %v2559 = vpow.pop %v2558
    %v2560 = vadd.f32 %v2559, 1.0
    %v2561 = vrcp.pop %v2560
    %v2562 = vmul.f32 1.0, %v2561
    %2564 = vrot.lane.b32.xlu0 %v2551, 64
    %v2565 = vpop.permute.xlu0 %2564
    %v2567 = vmul.f32 %v2562, %v2565
    %2569 = vrot.lane.b32.xlu0 %v2567, 64
    %v2570 = vpop.permute.xlu0 %2569
    %v2572 = vadd.f32 %v2277, %v2570
    %v2573 = vtanh.pop %v2572
    %v2574 = vsub.f32 1.0, %v2562
    %2576 = vrot.lane.b32.xlu0 %v2573, 96
    %v2577 = vpop.permute.xlu0 %2576
    %v2579 = vmul.f32 %v2574, %v2577
    %v2580 = vrot.slane %v2478, 4
    %v2582 = vmul.f32 %v2562, %v2580
    %v2583 = vadd.f32 %v2579, %v2582
    %2585 = vrot.lane.b32.xlu0 %v2583, 96
    %v2586 = vpop.permute.xlu0 %2585
    %2588 = vst.msk [vmem:[#allocation2 + $0x8] sm:$0xf] %vm2377, %v2586
    %v2589 = vld [vmem:[#allocation2] sm:$0xff]
    %v2590 = vld [vmem:[#allocation2 + $0x8] sm:$0xf]
    %v2591 = vld [vmem:[%s7] sm:$0xff]
    %v2592 = vld [vmem:[%s7 + $0x8] sm:$0xf]
    %2594 = vset.pattern.permute.xlu0 0
    %2595 = vperm.xlu0 %2594, %v2591
    %v2596 = vpop.permute.xlu0 %2595
    %2599 = vset.pattern.permute.xlu0 0
    %2600 = vperm.xlu0 %2599, %v2592
    %v2601 = vpop.permute.xlu0 %2600
    %v2603 = vmul.f32 %v2589, %v2596
    %v2604 = vmul.f32 %v2590, %v2601
    %v2605 = vld [vmem:[#allocation30] sm:$0xf]
    %v2606 = vld [vmem:[#allocation30 + $0x4] sm:$0xf]
    %v2607 = vld [vmem:[#allocation30 + $0x8] sm:$0xf]
    %v2608 = vld [vmem:[#allocation30 + $0xc] sm:$0xf]
    %v2609 = vpack.c.bf16 %v2604, %v2603
    %v2610 = vld [vmem:[#allocation32] sm:$0x1]
    %v2612 = vlaneseq
    %v2613 = vshrl.u32 %v2612, 7
    %v2614 = vsub.s32 0, %v2613
    %v2615 = vrot.slane %v2610, %v2614
    %v2621 = vunpack.c.l.b16 %v2605
    %v2622 = vunpack.c.l.b16 %v2606
    %v2623 = vunpack.c.l.b16 %v2607
    %v2624 = vunpack.c.l.b16 %v2608
    %v2625 = vpack.c.b16 %v2622, %v2621
    %v2626 = vpack.c.b16 %v2624, %v2623
    %v2630 = vsel %vm538, %v2609, 0
    %2632 = vmatprep.subr.bf16.mxu0 0
    %2633 = vmatpush1.bf16.msra.mxu0 0
    %2634 = vmatprep.subr.bf16.mxu0 0
    %2635 = vmatpush1.bf16.msra.mxu0 0
    %2636 = vmatprep.subr.bf16.mxu0 0
    %2637 = vmatpush1.bf16.msra.mxu0 0
    %2638 = vmatprep.subr.bf16.mxu0 0
    %2639 = vmatpush1.bf16.msra.mxu0 0
    %2640 = vmatprep.subr.bf16.mxu0 0
    %2641 = vmatpush1.bf16.msra.mxu0 0
    %2642 = vmatprep.subr.bf16.mxu0 0
    %2643 = vmatpush1.bf16.msra.mxu0 0
    %2644 = vmatprep.subr.bf16.mxu0 0
    %2645 = vmatpush1.bf16.msra.mxu0 %v2626
    %2646 = vmatprep.subr.bf16.mxu0 0
    %2647 = vmatpush1.bf16.msra.mxu0 %v2625
    %2648 = vmatprep.subr.bf16.mxu0 0
    %2649 = vmatpush2.bf16.msra.mxu0 0
    %2650 = vmatprep.subr.bf16.mxu0 0
    %2651 = vmatpush2.bf16.msra.mxu0 0
    %2652 = vmatprep.subr.bf16.mxu0 0
    %2653 = vmatpush2.bf16.msra.mxu0 0
    %2654 = vmatprep.subr.bf16.mxu0 0
    %2655 = vmatpush2.bf16.msra.mxu0 0
    %2656 = vmatprep.subr.bf16.mxu0 0
    %2657 = vmatpush2.bf16.msra.mxu0 0
    %2658 = vmatprep.subr.bf16.mxu0 0
    %2659 = vmatpush2.bf16.msra.mxu0 0
    %2660 = vmatprep.subr.bf16.mxu0 0
    %2661 = vmatpush2.bf16.msra.mxu0 0
    %2662 = vmatprep.subr.bf16.mxu0 0
    %2663 = vmatpush2.bf16.msra.mxu0 0
    %2664 = vmatprep.mubr.bf16.mxu0 0
    %2665 = vmatmul.mubr.bf16.gmra.mxu0 %v2630
    %v2666 = vpop.f32.mrf.mxu0
    %v2667 = vadd.f32 %v2615, %v2666
    %v2668 = vpop.f32.mrf.mxu0
    %v2669 = vpop.f32.mrf.mxu0
    %v2670 = vadd.f32 %v2615, %v2669
    %v2671 = vpop.f32.mrf.mxu0
    %2672 = vdwg.mxu0
    %2673 = vst [vmem:[%s71] sm:$0xff] %v2667
    %2674 = vst [vmem:[%s71 + $0x8] sm:$0xf] %v2670
    // Predicated region
    $region214: #{device_forward.1} parent=1 // pred_check
      _
    $region215: #{device_forward.1} parent=1 // pred_check_branch
      %2676 = sbr.rel (0) target = $region217
    $region216: #{device_forward.1} parent=1 // pred_region
      %s2678 = ssub.s32 64, 64
      %2679 = vsyncadd [#allocation5], %s2678
      %s2681 = sshll.u32 [#allocation33], 4
      %s2682 = int_to_ptr.vmem [resolvable:$true] %s2681
      %2684 = dma.vmem_to_hbm [thread:$0]  %s2682, 64, %s69, [#allocation5]
    $region217: #{device_forward.1} parent=1 // pred_fallthru
      _
    // Predicated region
    $region218: #{device_forward.1} parent=1 // pred_check
      _
    $region219: #{device_forward.1} parent=1 // pred_check_branch
      %2686 = sbr.rel (0) target = $region221
    $region220: #{device_forward.1} parent=1 // pred_region
      _
    $region221: #{device_forward.1} parent=1 // pred_fallthru
      _
    // Predicated region
    $region222: #{device_forward.1} parent=1 // pred_check
      _
    $region223: #{device_forward.1} parent=1 // pred_check_branch
      %2688 = sbr.rel (0) target = $region225
    $region224: #{device_forward.1} parent=1 // pred_region
      %2689 = dma.done [#allocation5], 64
    $region225: #{device_forward.1} parent=1 // pred_fallthru
      _
    // Predicated region
    $region226: #{device_forward.1} parent=1 // pred_check
      _
    $region227: #{device_forward.1} parent=1 // pred_check_branch
      %2691 = sbr.rel (0) target = $region229
    $region228: #{device_forward.1} parent=1 // pred_region
      _
    $region229: #{device_forward.1} parent=1 // pred_fallthru
      _
    %2692 = vsyncpa [#allocation4], 1
    %2693 = vsyncpa [#allocation7], 1
    %2694 = vsyncpa [#allocation10], 1
    %2695 = vsyncpa [#allocation13], 1
    %2696 = vsyncpa [#allocation16], 1
    %2697 = vsyncpa [#allocation19], 1
    %2698 = vsyncpa [#allocation22], 1
    %2699 = vsyncpa [#allocation25], 1
    %2700 = vsyncpa [#allocation28], 1
    %2701 = vsyncpa [#allocation31], 1
    %2702 = vsyncpa [#allocation5], 1

</llo_original>
